<compile_context>
chip_gen: v5e
topology: v5e:2x2
jax: 0.10.0
libtpu: 0.0.40
codegen_flags: <defaults>
</compile_context>

<pallas_src>
import functools

import jax
import jax.numpy as jnp
from jax import lax
from jax.experimental import pallas as pl
from jax.experimental.pallas import tpu as pltpu

KSIZE = 7
PAD = (KSIZE - 1) // 2  # 3


def _spatial_gate_kernel(x_ref, w_ref, bias_ref, o_ref, pad_ref, scale_ref,
                         *, H, W, C, C_CHUNK):
    """One batch element per grid step, lane-dense (flattened H*W) layout.

    x_ref    : VMEM (1, C, H*W)      input block (H*W on the lane axis)
    w_ref    : SMEM (2*7*7,)         BN-folded conv weights, flattened [c, kh, kw]
    bias_ref : SMEM (1,)             BN-folded bias
    o_ref    : VMEM (1, C, H*W)      output block
    pad_ref  : VMEM (2, H+6, W+6)    zero-padded pooled maps (f32 scratch)
    scale_ref: VMEM (1, 1, H*W)      lane-dense sigmoid gate, in x's dtype
    """
    HW = H * W
    Wp = W + 2 * PAD
    in_dtype = x_ref.dtype
    num_chunks = C // C_CHUNK

    # --- Phase 1: streaming ChannelPool (bounded live range) ------------------
    # Running max in the native dtype (exact); running sum in f32.
    def chan_body(i, carry):
        m, s = carry
        c0 = pl.multiple_of(i * C_CHUNK, C_CHUNK)
        xc = x_ref[0, pl.ds(c0, C_CHUNK), :]                  # (C_CHUNK, HW)
        m = jnp.maximum(m, jnp.max(xc, axis=0, keepdims=True))
        s = s + jnp.sum(xc.astype(jnp.float32), axis=0, keepdims=True)
        return m, s

    m0 = jnp.full((1, HW), -jnp.inf, dtype=in_dtype)
    s0 = jnp.zeros((1, HW), dtype=jnp.float32)
    xmax, xsum = lax.fori_loop(0, num_chunks, chan_body, (m0, s0))
    # (2, HW) f32: row 0 = channel max, row 1 = channel mean (tiny values only).
    pooled = jnp.concatenate([xmax.astype(jnp.float32), xsum * (1.0 / C)], axis=0)

    # --- Phase 2: padded 2-D conv input -------------------------------------
    # Zero only the 3-wide halo; the interior is fully overwritten below.
    for ci in range(2):
        pad_ref[ci, 0:PAD, :] = jnp.zeros((PAD, Wp), jnp.float32)
        pad_ref[ci, PAD + H:, :] = jnp.zeros((PAD, Wp), jnp.float32)
        pad_ref[ci, PAD:PAD + H, 0:PAD] = jnp.zeros((H, PAD), jnp.float32)
        pad_ref[ci, PAD:PAD + H, PAD + W:] = jnp.zeros((H, PAD), jnp.float32)

    # Scatter pooled rows into the 2-D padded scratch (static-offset copies of
    # the tiny maps; VMEM-local, off the HBM critical path).
    for h in range(H):
        row = slice(h * W, (h + 1) * W)
        pad_ref[0, PAD + h:PAD + h + 1, PAD:PAD + W] = pooled[0:1, row]
        pad_ref[1, PAD + h:PAD + h + 1, PAD:PAD + W] = pooled[1:2, row]

    # --- Phase 3: 7x7 conv (2 -> 1 channel), BN folded, then sigmoid ---------
    # Lane shifts hoisted: one (c, kw) column slice per lane offset (14 total),
    # reused across the 7 kh taps (cheap sublane slices) -> 98 VALU FMAs.
    acc = jnp.full((H, W), bias_ref[0], dtype=jnp.float32)
    for ci in range(2):
        plane = pad_ref[ci]                                   # (H+6, W+6)
        base = ci * KSIZE * KSIZE
        for kw in range(KSIZE):
            col = plane[:, kw:kw + W]                         # (H+6, W)
            for kh in range(KSIZE):
                acc = acc + w_ref[base + kh * KSIZE + kw] * col[kh:kh + H, :]
    # Sigmoid + cast on the compact (H, W) form (full sublane occupancy).
    gate2d = jax.nn.sigmoid(acc).astype(in_dtype)             # (H, W), x.dtype

    # --- Phase 4: flatten the gate, then the single heavy gated store --------
    for h in range(H):
        scale_ref[0, 0:1, h * W:(h + 1) * W] = gate2d[h:h + 1, :]
    # Re-read x_ref here (review #1): no large value spans the conv section.
    o_ref[...] = (x_ref[...] * scale_ref[...]).astype(o_ref.dtype)


def _vmem_limit_bytes(block_bytes, scratch_bytes):
    """Generation-aware scoped-VMEM limit (~85% of physical capacity)."""
    cap = 64 << 20  # conservative fallback (fits every generation)
    try:
        cap = int(getattr(pltpu.get_tpu_info(), "vmem_capacity_bytes", cap))
    except Exception:
        pass
    budget = int(0.85 * cap)
    # Double-buffered input + output blocks, scratch, plus headroom for Mosaic.
    need = 2 * 2 * block_bytes + scratch_bytes + (4 << 20)
    return max(32 << 20, min(budget, need))


def spatial_gate(x, conv_w, gamma, beta, running_mean, running_var, eps=1e-5):
    """x: (N, C, H, W); conv_w: (1, 2, 7, 7) OIHW; BN params: shape (1,)."""
    N, C, H, W = x.shape
    HW = H * W
    Hp, Wp = H + 2 * PAD, W + 2 * PAD

    # Fold inference-mode BatchNorm into the conv weights / bias (glue).
    bn_scale = gamma / jnp.sqrt(running_var + eps)                       # (1,)
    w_flat = (conv_w[0] * bn_scale[0]).astype(jnp.float32).reshape(-1)   # (98,)
    bias = (beta - running_mean * bn_scale).astype(jnp.float32)          # (1,)

    # Lane-dense view of x (free reshape at the XLA level).
    x_flat = x.reshape(N, C, HW)

    # Sublane-sized C chunk for the streaming reduction (must divide C).
    c_chunk = next(c for c in (32, 16, 8, 4, 2, 1) if C % c == 0)

    block_bytes = C * HW * x.dtype.itemsize
    scratch_bytes = 4 * 2 * Hp * Wp + HW * x.dtype.itemsize
    vmem_limit = _vmem_limit_bytes(block_bytes, scratch_bytes)

    kernel = functools.partial(_spatial_gate_kernel, H=H, W=W, C=C,
                               C_CHUNK=c_chunk)

    out_flat = pl.pallas_call(
        kernel,
        out_shape=jax.ShapeDtypeStruct((N, C, HW), x.dtype),
        grid=(N,),
        in_specs=[
            pl.BlockSpec((1, C, HW), lambda n: (n, 0, 0)),
            pl.BlockSpec(memory_space=pltpu.MemorySpace.SMEM),
            pl.BlockSpec(memory_space=pltpu.MemorySpace.SMEM),
        ],
        out_specs=pl.BlockSpec((1, C, HW), lambda n: (n, 0, 0)),
        scratch_shapes=[
            pltpu.VMEM((2, Hp, Wp), jnp.float32),
            pltpu.VMEM((1, 1, HW), x.dtype),
        ],
        compiler_params=pltpu.CompilerParams(
            dimension_semantics=("parallel",),
            vmem_limit_bytes=vmem_limit,
        ),
    )(x_flat, w_flat, bias)

    return out_flat.reshape(N, C, H, W)


def spatial_gate_ref(x, conv_w, gamma, beta, running_mean, running_var, eps=1e-5):
    """Pure-JAX reference mirroring the PyTorch forward (eval-mode BN)."""
    xmax = jnp.max(x, axis=1, keepdims=True)
    xmean = jnp.mean(x, axis=1, keepdims=True)
    pooled = jnp.concatenate([xmax, xmean], axis=1)  # (N, 2, H, W)
    conv = jax.lax.conv_general_dilated(
        pooled, conv_w, window_strides=(1, 1),
        padding=[(PAD, PAD), (PAD, PAD)],
        dimension_numbers=("NCHW", "OIHW", "NCHW"))
    bn = ((conv - running_mean[None, :, None, None])
          / jnp.sqrt(running_var[None, :, None, None] + eps)
          * gamma[None, :, None, None] + beta[None, :, None, None])
    return x * jax.nn.sigmoid(bn)


if __name__ == "__main__":
    key = jax.random.PRNGKey(0)
    kx, kw = jax.random.split(key)

    N, C, H, W = 2, 4, 16, 16
    x = jax.random.normal(kx, (N, C, H, W), dtype=jnp.float32)

    # Deterministic parameter init (synthetic, not a checkpoint).
    conv_w = 0.1 * jax.random.normal(kw, (1, 2, KSIZE, KSIZE), dtype=jnp.float32)
    gamma = jnp.array([1.2], dtype=jnp.float32)          # BN weight
    beta = jnp.array([0.1], dtype=jnp.float32)           # BN bias
    running_mean = jnp.zeros((1,), dtype=jnp.float32)    # BN running stats
    running_var = jnp.ones((1,), dtype=jnp.float32)

    # f32 path vs reference.
    out = spatial_gate(x, conv_w, gamma, beta, running_mean, running_var)
    out = jax.block_until_ready(out)
    ref = spatial_gate_ref(x, conv_w, gamma, beta, running_mean, running_var)
    assert out.shape == (N, C, H, W)
    assert jnp.allclose(out, ref, atol=1e-5, rtol=1e-5), "f32 mismatch vs reference"

    # bf16 dtype-preserving fast path (review correctness concern): gate and
    # multiply stay bf16 in the kernel; compare against an f32 reference on the
    # bf16-rounded input with a bf16-appropriate tolerance.
    xb = x.astype(jnp.bfloat16)
    out_b = spatial_gate(xb, conv_w, gamma, beta, running_mean, running_var)
    out_b = jax.block_until_ready(out_b)
    ref_b = spatial_gate_ref(xb.astype(jnp.float32), conv_w, gamma, beta,
                             running_mean, running_var)
    assert out_b.dtype == jnp.bfloat16
    assert jnp.allclose(out_b.astype(jnp.float32), ref_b, atol=3e-2, rtol=3e-2), \
        "bf16 mismatch vs reference"

    print("KERNEL_OK")
</pallas_src>

<mosaic_0001>
module attributes {stable_mosaic.version = 11 : i64} {
  func.func @_spatial_gate_kernel(%arg0: i32, %arg1: memref<1x4x256xf32, #tpu.memory_space<vmem>>, %arg2: memref<98xf32, #tpu.memory_space<smem>>, %arg3: memref<1xf32, #tpu.memory_space<smem>>, %arg4: memref<1x4x256xf32, #tpu.memory_space<vmem>>, %arg5: memref<2x22x22xf32, #tpu.memory_space<vmem>>, %arg6: memref<1x1x256xf32, #tpu.memory_space<vmem>>) attributes {dimension_semantics = [#tpu.dimension_semantics<parallel>], iteration_bounds = array<i64: 2>, scalar_prefetch = 0 : i64, scratch_operands = 2 : i64, tpu.core_type = #tpu.core_type<tc>, window_params = [{transform_indices = @transform_0, window_bounds = array<i64: 1, 4, 256>}, {transform_indices = @transform_1, window_bounds = array<i64: 98>}, {transform_indices = @transform_2, window_bounds = array<i64: 1>}, {transform_indices = @transform_3, window_bounds = array<i64: 1, 4, 256>}]} {
    %cst = arith.constant 0xFF800000 : f32
    %0 = vector.broadcast %cst : f32 to vector<1x256xf32>
    %cst_0 = arith.constant 0.000000e+00 : f32
    %1 = vector.broadcast %cst_0 : f32 to vector<1x256xf32>
    %c0_i32 = arith.constant 0 : i32
    %c4_i32 = arith.constant 4 : i32
    %2 = arith.muli %c0_i32, %c4_i32 : i32
    %3 = tpu.assume_multiple %2, 4 : i32
    %c0 = arith.constant 0 : index
    %4 = arith.index_cast %3 : i32 to index
    %c0_1 = arith.constant 0 : index
    %5 = vector.load %arg1[%c0, %4, %c0_1] : memref<1x4x256xf32, #tpu.memory_space<vmem>>, vector<1x4x256xf32>
    %6 = vector.shape_cast %5 : vector<1x4x256xf32> to vector<4x256xf32>
    %cst_2 = arith.constant dense<0xFF800000> : vector<256xf32>
    %7 = vector.multi_reduction <maximumf>, %6, %cst_2 [0] : vector<4x256xf32> to vector<256xf32>
    %8 = vector.shape_cast %7 : vector<256xf32> to vector<1x256xf32>
    %9 = arith.maximumf %0, %8 : vector<1x256xf32>
    %cst_3 = arith.constant dense<0.000000e+00> : vector<256xf32>
    %10 = vector.multi_reduction <add>, %6, %cst_3 [0] : vector<4x256xf32> to vector<256xf32>
    %11 = vector.shape_cast %10 : vector<256xf32> to vector<1x256xf32>
    %12 = arith.addf %1, %11 : vector<1x256xf32>
    %c1_i32 = arith.constant 1 : i32
    %cst_4 = arith.constant 2.500000e-01 : f32
    %13 = vector.broadcast %cst_4 : f32 to vector<1x256xf32>
    %14 = arith.mulf %12, %13 : vector<1x256xf32>
    %15 = tpu.concatenate %9, %14 in 0 : vector<1x256xf32>, vector<1x256xf32> -> vector<2x256xf32>
    %cst_5 = arith.constant 0.000000e+00 : f32
    %16 = vector.broadcast %cst_5 : f32 to vector<3x22xf32>
    %c0_6 = arith.constant 0 : index
    %c0_7 = arith.constant 0 : index
    %c0_8 = arith.constant 0 : index
    %17 = vector.load %arg5[%c0_6, %c0_7, %c0_8] : memref<2x22x22xf32, #tpu.memory_space<vmem>>, vector<1x3x22xf32>
    %18 = vector.shape_cast %17 : vector<1x3x22xf32> to vector<3x22xf32>
    %19 = vector.shape_cast %16 : vector<3x22xf32> to vector<1x3x22xf32>
    tpu.vector_store %arg5[%c0_6, %c0_7, %c0_8], %19 {strides = array<i32>} : memref<2x22x22xf32, #tpu.memory_space<vmem>>, vector<1x3x22xf32>,
    %cst_9 = arith.constant 0.000000e+00 : f32
    %20 = vector.broadcast %cst_9 : f32 to vector<3x22xf32>
    %c0_10 = arith.constant 0 : index
    %c19 = arith.constant 19 : index
    %c0_11 = arith.constant 0 : index
    %21 = vector.load %arg5[%c0_10, %c19, %c0_11] : memref<2x22x22xf32, #tpu.memory_space<vmem>>, vector<1x3x22xf32>
    %22 = vector.shape_cast %21 : vector<1x3x22xf32> to vector<3x22xf32>
    %23 = vector.shape_cast %20 : vector<3x22xf32> to vector<1x3x22xf32>
    tpu.vector_store %arg5[%c0_10, %c19, %c0_11], %23 {strides = array<i32>} : memref<2x22x22xf32, #tpu.memory_space<vmem>>, vector<1x3x22xf32>,
    %cst_12 = arith.constant 0.000000e+00 : f32
    %24 = vector.broadcast %cst_12 : f32 to vector<16x3xf32>
    %c0_13 = arith.constant 0 : index
    %c3 = arith.constant 3 : index
    %c0_14 = arith.constant 0 : index
    %25 = vector.load %arg5[%c0_13, %c3, %c0_14] : memref<2x22x22xf32, #tpu.memory_space<vmem>>, vector<1x16x3xf32>
    %26 = vector.shape_cast %25 : vector<1x16x3xf32> to vector<16x3xf32>
    %27 = vector.shape_cast %24 : vector<16x3xf32> to vector<1x16x3xf32>
    tpu.vector_store %arg5[%c0_13, %c3, %c0_14], %27 {strides = array<i32>} : memref<2x22x22xf32, #tpu.memory_space<vmem>>, vector<1x16x3xf32>,
    %cst_15 = arith.constant 0.000000e+00 : f32
    %28 = vector.broadcast %cst_15 : f32 to vector<16x3xf32>
    %c0_16 = arith.constant 0 : index
    %c3_17 = arith.constant 3 : index
    %c19_18 = arith.constant 19 : index
    %29 = vector.load %arg5[%c0_16, %c3_17, %c19_18] : memref<2x22x22xf32, #tpu.memory_space<vmem>>, vector<1x16x3xf32>
    %30 = vector.shape_cast %29 : vector<1x16x3xf32> to vector<16x3xf32>
    %31 = vector.shape_cast %28 : vector<16x3xf32> to vector<1x16x3xf32>
    tpu.vector_store %arg5[%c0_16, %c3_17, %c19_18], %31 {strides = array<i32>} : memref<2x22x22xf32, #tpu.memory_space<vmem>>, vector<1x16x3xf32>,
    %cst_19 = arith.constant 0.000000e+00 : f32
    %32 = vector.broadcast %cst_19 : f32 to vector<3x22xf32>
    %c1 = arith.constant 1 : index
    %c0_20 = arith.constant 0 : index
    %c0_21 = arith.constant 0 : index
    %33 = vector.load %arg5[%c1, %c0_20, %c0_21] : memref<2x22x22xf32, #tpu.memory_space<vmem>>, vector<1x3x22xf32>
    %34 = vector.shape_cast %33 : vector<1x3x22xf32> to vector<3x22xf32>
    %35 = vector.shape_cast %32 : vector<3x22xf32> to vector<1x3x22xf32>
    tpu.vector_store %arg5[%c1, %c0_20, %c0_21], %35 {strides = array<i32>} : memref<2x22x22xf32, #tpu.memory_space<vmem>>, vector<1x3x22xf32>,
    %cst_22 = arith.constant 0.000000e+00 : f32
    %36 = vector.broadcast %cst_22 : f32 to vector<3x22xf32>
    %c1_23 = arith.constant 1 : index
    %c19_24 = arith.constant 19 : index
    %c0_25 = arith.constant 0 : index
    %37 = vector.load %arg5[%c1_23, %c19_24, %c0_25] : memref<2x22x22xf32, #tpu.memory_space<vmem>>, vector<1x3x22xf32>
    %38 = vector.shape_cast %37 : vector<1x3x22xf32> to vector<3x22xf32>
    %39 = vector.shape_cast %36 : vector<3x22xf32> to vector<1x3x22xf32>
    tpu.vector_store %arg5[%c1_23, %c19_24, %c0_25], %39 {strides = array<i32>} : memref<2x22x22xf32, #tpu.memory_space<vmem>>, vector<1x3x22xf32>,
    %cst_26 = arith.constant 0.000000e+00 : f32
    %40 = vector.broadcast %cst_26 : f32 to vector<16x3xf32>
    %c1_27 = arith.constant 1 : index
    %c3_28 = arith.constant 3 : index
    %c0_29 = arith.constant 0 : index
    %41 = vector.load %arg5[%c1_27, %c3_28, %c0_29] : memref<2x22x22xf32, #tpu.memory_space<vmem>>, vector<1x16x3xf32>
    %42 = vector.shape_cast %41 : vector<1x16x3xf32> to vector<16x3xf32>
    %43 = vector.shape_cast %40 : vector<16x3xf32> to vector<1x16x3xf32>
    tpu.vector_store %arg5[%c1_27, %c3_28, %c0_29], %43 {strides = array<i32>} : memref<2x22x22xf32, #tpu.memory_space<vmem>>, vector<1x16x3xf32>,
    %cst_30 = arith.constant 0.000000e+00 : f32
    %44 = vector.broadcast %cst_30 : f32 to vector<16x3xf32>
    %c1_31 = arith.constant 1 : index
    %c3_32 = arith.constant 3 : index
    %c19_33 = arith.constant 19 : index
    %45 = vector.load %arg5[%c1_31, %c3_32, %c19_33] : memref<2x22x22xf32, #tpu.memory_space<vmem>>, vector<1x16x3xf32>
    %46 = vector.shape_cast %45 : vector<1x16x3xf32> to vector<16x3xf32>
    %47 = vector.shape_cast %44 : vector<16x3xf32> to vector<1x16x3xf32>
    tpu.vector_store %arg5[%c1_31, %c3_32, %c19_33], %47 {strides = array<i32>} : memref<2x22x22xf32, #tpu.memory_space<vmem>>, vector<1x16x3xf32>,
    %48 = vector.extract_strided_slice %15 {offsets = [0, 0], sizes = [1, 16], strides = [1, 1]} : vector<2x256xf32> to vector<1x16xf32>
    %c0_34 = arith.constant 0 : index
    %c3_35 = arith.constant 3 : index
    %c3_36 = arith.constant 3 : index
    %49 = vector.load %arg5[%c0_34, %c3_35, %c3_36] : memref<2x22x22xf32, #tpu.memory_space<vmem>>, vector<1x1x16xf32>
    %50 = vector.shape_cast %49 : vector<1x1x16xf32> to vector<1x16xf32>
    %51 = vector.shape_cast %48 : vector<1x16xf32> to vector<1x1x16xf32>
    tpu.vector_store %arg5[%c0_34, %c3_35, %c3_36], %51 {strides = array<i32>} : memref<2x22x22xf32, #tpu.memory_space<vmem>>, vector<1x1x16xf32>,
    %52 = vector.extract_strided_slice %15 {offsets = [1, 0], sizes = [1, 16], strides = [1, 1]} : vector<2x256xf32> to vector<1x16xf32>
    %c1_37 = arith.constant 1 : index
    %c3_38 = arith.constant 3 : index
    %c3_39 = arith.constant 3 : index
    %53 = vector.load %arg5[%c1_37, %c3_38, %c3_39] : memref<2x22x22xf32, #tpu.memory_space<vmem>>, vector<1x1x16xf32>
    %54 = vector.shape_cast %53 : vector<1x1x16xf32> to vector<1x16xf32>
    %55 = vector.shape_cast %52 : vector<1x16xf32> to vector<1x1x16xf32>
    tpu.vector_store %arg5[%c1_37, %c3_38, %c3_39], %55 {strides = array<i32>} : memref<2x22x22xf32, #tpu.memory_space<vmem>>, vector<1x1x16xf32>,
    %56 = vector.extract_strided_slice %15 {offsets = [0, 16], sizes = [1, 16], strides = [1, 1]} : vector<2x256xf32> to vector<1x16xf32>
    %c0_40 = arith.constant 0 : index
    %c4 = arith.constant 4 : index
    %c3_41 = arith.constant 3 : index
    %57 = vector.load %arg5[%c0_40, %c4, %c3_41] : memref<2x22x22xf32, #tpu.memory_space<vmem>>, vector<1x1x16xf32>
    %58 = vector.shape_cast %57 : vector<1x1x16xf32> to vector<1x16xf32>
    %59 = vector.shape_cast %56 : vector<1x16xf32> to vector<1x1x16xf32>
    tpu.vector_store %arg5[%c0_40, %c4, %c3_41], %59 {strides = array<i32>} : memref<2x22x22xf32, #tpu.memory_space<vmem>>, vector<1x1x16xf32>,
    %60 = vector.extract_strided_slice %15 {offsets = [1, 16], sizes = [1, 16], strides = [1, 1]} : vector<2x256xf32> to vector<1x16xf32>
    %c1_42 = arith.constant 1 : index
    %c4_43 = arith.constant 4 : index
    %c3_44 = arith.constant 3 : index
    %61 = vector.load %arg5[%c1_42, %c4_43, %c3_44] : memref<2x22x22xf32, #tpu.memory_space<vmem>>, vector<1x1x16xf32>
    %62 = vector.shape_cast %61 : vector<1x1x16xf32> to vector<1x16xf32>
    %63 = vector.shape_cast %60 : vector<1x16xf32> to vector<1x1x16xf32>
    tpu.vector_store %arg5[%c1_42, %c4_43, %c3_44], %63 {strides = array<i32>} : memref<2x22x22xf32, #tpu.memory_space<vmem>>, vector<1x1x16xf32>,
    %64 = vector.extract_strided_slice %15 {offsets = [0, 32], sizes = [1, 16], strides = [1, 1]} : vector<2x256xf32> to vector<1x16xf32>
    %c0_45 = arith.constant 0 : index
    %c5 = arith.constant 5 : index
    %c3_46 = arith.constant 3 : index
    %65 = vector.load %arg5[%c0_45, %c5, %c3_46] : memref<2x22x22xf32, #tpu.memory_space<vmem>>, vector<1x1x16xf32>
    %66 = vector.shape_cast %65 : vector<1x1x16xf32> to vector<1x16xf32>
    %67 = vector.shape_cast %64 : vector<1x16xf32> to vector<1x1x16xf32>
    tpu.vector_store %arg5[%c0_45, %c5, %c3_46], %67 {strides = array<i32>} : memref<2x22x22xf32, #tpu.memory_space<vmem>>, vector<1x1x16xf32>,
    %68 = vector.extract_strided_slice %15 {offsets = [1, 32], sizes = [1, 16], strides = [1, 1]} : vector<2x256xf32> to vector<1x16xf32>
    %c1_47 = arith.constant 1 : index
    %c5_48 = arith.constant 5 : index
    %c3_49 = arith.constant 3 : index
    %69 = vector.load %arg5[%c1_47, %c5_48, %c3_49] : memref<2x22x22xf32, #tpu.memory_space<vmem>>, vector<1x1x16xf32>
    %70 = vector.shape_cast %69 : vector<1x1x16xf32> to vector<1x16xf32>
    %71 = vector.shape_cast %68 : vector<1x16xf32> to vector<1x1x16xf32>
    tpu.vector_store %arg5[%c1_47, %c5_48, %c3_49], %71 {strides = array<i32>} : memref<2x22x22xf32, #tpu.memory_space<vmem>>, vector<1x1x16xf32>,
    %72 = vector.extract_strided_slice %15 {offsets = [0, 48], sizes = [1, 16], strides = [1, 1]} : vector<2x256xf32> to vector<1x16xf32>
    %c0_50 = arith.constant 0 : index
    %c6 = arith.constant 6 : index
    %c3_51 = arith.constant 3 : index
    %73 = vector.load %arg5[%c0_50, %c6, %c3_51] : memref<2x22x22xf32, #tpu.memory_space<vmem>>, vector<1x1x16xf32>
    %74 = vector.shape_cast %73 : vector<1x1x16xf32> to vector<1x16xf32>
    %75 = vector.shape_cast %72 : vector<1x16xf32> to vector<1x1x16xf32>
    tpu.vector_store %arg5[%c0_50, %c6, %c3_51], %75 {strides = array<i32>} : memref<2x22x22xf32, #tpu.memory_space<vmem>>, vector<1x1x16xf32>,
    %76 = vector.extract_strided_slice %15 {offsets = [1, 48], sizes = [1, 16], strides = [1, 1]} : vector<2x256xf32> to vector<1x16xf32>
    %c1_52 = arith.constant 1 : index
    %c6_53 = arith.constant 6 : index
    %c3_54 = arith.constant 3 : index
    %77 = vector.load %arg5[%c1_52, %c6_53, %c3_54] : memref<2x22x22xf32, #tpu.memory_space<vmem>>, vector<1x1x16xf32>
    %78 = vector.shape_cast %77 : vector<1x1x16xf32> to vector<1x16xf32>
    %79 = vector.shape_cast %76 : vector<1x16xf32> to vector<1x1x16xf32>
    tpu.vector_store %arg5[%c1_52, %c6_53, %c3_54], %79 {strides = array<i32>} : memref<2x22x22xf32, #tpu.memory_space<vmem>>, vector<1x1x16xf32>,
    %80 = vector.extract_strided_slice %15 {offsets = [0, 64], sizes = [1, 16], strides = [1, 1]} : vector<2x256xf32> to vector<1x16xf32>
    %c0_55 = arith.constant 0 : index
    %c7 = arith.constant 7 : index
    %c3_56 = arith.constant 3 : index
    %81 = vector.load %arg5[%c0_55, %c7, %c3_56] : memref<2x22x22xf32, #tpu.memory_space<vmem>>, vector<1x1x16xf32>
    %82 = vector.shape_cast %81 : vector<1x1x16xf32> to vector<1x16xf32>
    %83 = vector.shape_cast %80 : vector<1x16xf32> to vector<1x1x16xf32>
    tpu.vector_store %arg5[%c0_55, %c7, %c3_56], %83 {strides = array<i32>} : memref<2x22x22xf32, #tpu.memory_space<vmem>>, vector<1x1x16xf32>,
    %84 = vector.extract_strided_slice %15 {offsets = [1, 64], sizes = [1, 16], strides = [1, 1]} : vector<2x256xf32> to vector<1x16xf32>
    %c1_57 = arith.constant 1 : index
    %c7_58 = arith.constant 7 : index
    %c3_59 = arith.constant 3 : index
    %85 = vector.load %arg5[%c1_57, %c7_58, %c3_59] : memref<2x22x22xf32, #tpu.memory_space<vmem>>, vector<1x1x16xf32>
    %86 = vector.shape_cast %85 : vector<1x1x16xf32> to vector<1x16xf32>
    %87 = vector.shape_cast %84 : vector<1x16xf32> to vector<1x1x16xf32>
    tpu.vector_store %arg5[%c1_57, %c7_58, %c3_59], %87 {strides = array<i32>} : memref<2x22x22xf32, #tpu.memory_space<vmem>>, vector<1x1x16xf32>,
    %88 = vector.extract_strided_slice %15 {offsets = [0, 80], sizes = [1, 16], strides = [1, 1]} : vector<2x256xf32> to vector<1x16xf32>
    %c0_60 = arith.constant 0 : index
    %c8 = arith.constant 8 : index
    %c3_61 = arith.constant 3 : index
    %89 = vector.load %arg5[%c0_60, %c8, %c3_61] : memref<2x22x22xf32, #tpu.memory_space<vmem>>, vector<1x1x16xf32>
    %90 = vector.shape_cast %89 : vector<1x1x16xf32> to vector<1x16xf32>
    %91 = vector.shape_cast %88 : vector<1x16xf32> to vector<1x1x16xf32>
    tpu.vector_store %arg5[%c0_60, %c8, %c3_61], %91 {strides = array<i32>} : memref<2x22x22xf32, #tpu.memory_space<vmem>>, vector<1x1x16xf32>,
    %92 = vector.extract_strided_slice %15 {offsets = [1, 80], sizes = [1, 16], strides = [1, 1]} : vector<2x256xf32> to vector<1x16xf32>
    %c1_62 = arith.constant 1 : index
    %c8_63 = arith.constant 8 : index
    %c3_64 = arith.constant 3 : index
    %93 = vector.load %arg5[%c1_62, %c8_63, %c3_64] : memref<2x22x22xf32, #tpu.memory_space<vmem>>, vector<1x1x16xf32>
    %94 = vector.shape_cast %93 : vector<1x1x16xf32> to vector<1x16xf32>
    %95 = vector.shape_cast %92 : vector<1x16xf32> to vector<1x1x16xf32>
    tpu.vector_store %arg5[%c1_62, %c8_63, %c3_64], %95 {strides = array<i32>} : memref<2x22x22xf32, #tpu.memory_space<vmem>>, vector<1x1x16xf32>,
    %96 = vector.extract_strided_slice %15 {offsets = [0, 96], sizes = [1, 16], strides = [1, 1]} : vector<2x256xf32> to vector<1x16xf32>
    %c0_65 = arith.constant 0 : index
    %c9 = arith.constant 9 : index
    %c3_66 = arith.constant 3 : index
    %97 = vector.load %arg5[%c0_65, %c9, %c3_66] : memref<2x22x22xf32, #tpu.memory_space<vmem>>, vector<1x1x16xf32>
    %98 = vector.shape_cast %97 : vector<1x1x16xf32> to vector<1x16xf32>
    %99 = vector.shape_cast %96 : vector<1x16xf32> to vector<1x1x16xf32>
    tpu.vector_store %arg5[%c0_65, %c9, %c3_66], %99 {strides = array<i32>} : memref<2x22x22xf32, #tpu.memory_space<vmem>>, vector<1x1x16xf32>,
    %100 = vector.extract_strided_slice %15 {offsets = [1, 96], sizes = [1, 16], strides = [1, 1]} : vector<2x256xf32> to vector<1x16xf32>
    %c1_67 = arith.constant 1 : index
    %c9_68 = arith.constant 9 : index
    %c3_69 = arith.constant 3 : index
    %101 = vector.load %arg5[%c1_67, %c9_68, %c3_69] : memref<2x22x22xf32, #tpu.memory_space<vmem>>, vector<1x1x16xf32>
    %102 = vector.shape_cast %101 : vector<1x1x16xf32> to vector<1x16xf32>
    %103 = vector.shape_cast %100 : vector<1x16xf32> to vector<1x1x16xf32>
    tpu.vector_store %arg5[%c1_67, %c9_68, %c3_69], %103 {strides = array<i32>} : memref<2x22x22xf32, #tpu.memory_space<vmem>>, vector<1x1x16xf32>,
    %104 = vector.extract_strided_slice %15 {offsets = [0, 112], sizes = [1, 16], strides = [1, 1]} : vector<2x256xf32> to vector<1x16xf32>
    %c0_70 = arith.constant 0 : index
    %c10 = arith.constant 10 : index
    %c3_71 = arith.constant 3 : index
    %105 = vector.load %arg5[%c0_70, %c10, %c3_71] : memref<2x22x22xf32, #tpu.memory_space<vmem>>, vector<1x1x16xf32>
    %106 = vector.shape_cast %105 : vector<1x1x16xf32> to vector<1x16xf32>
    %107 = vector.shape_cast %104 : vector<1x16xf32> to vector<1x1x16xf32>
    tpu.vector_store %arg5[%c0_70, %c10, %c3_71], %107 {strides = array<i32>} : memref<2x22x22xf32, #tpu.memory_space<vmem>>, vector<1x1x16xf32>,
    %108 = vector.extract_strided_slice %15 {offsets = [1, 112], sizes = [1, 16], strides = [1, 1]} : vector<2x256xf32> to vector<1x16xf32>
    %c1_72 = arith.constant 1 : index
    %c10_73 = arith.constant 10 : index
    %c3_74 = arith.constant 3 : index
    %109 = vector.load %arg5[%c1_72, %c10_73, %c3_74] : memref<2x22x22xf32, #tpu.memory_space<vmem>>, vector<1x1x16xf32>
    %110 = vector.shape_cast %109 : vector<1x1x16xf32> to vector<1x16xf32>
    %111 = vector.shape_cast %108 : vector<1x16xf32> to vector<1x1x16xf32>
    tpu.vector_store %arg5[%c1_72, %c10_73, %c3_74], %111 {strides = array<i32>} : memref<2x22x22xf32, #tpu.memory_space<vmem>>, vector<1x1x16xf32>,
    %112 = vector.extract_strided_slice %15 {offsets = [0, 128], sizes = [1, 16], strides = [1, 1]} : vector<2x256xf32> to vector<1x16xf32>
    %c0_75 = arith.constant 0 : index
    %c11 = arith.constant 11 : index
    %c3_76 = arith.constant 3 : index
    %113 = vector.load %arg5[%c0_75, %c11, %c3_76] : memref<2x22x22xf32, #tpu.memory_space<vmem>>, vector<1x1x16xf32>
    %114 = vector.shape_cast %113 : vector<1x1x16xf32> to vector<1x16xf32>
    %115 = vector.shape_cast %112 : vector<1x16xf32> to vector<1x1x16xf32>
    tpu.vector_store %arg5[%c0_75, %c11, %c3_76], %115 {strides = array<i32>} : memref<2x22x22xf32, #tpu.memory_space<vmem>>, vector<1x1x16xf32>,
    %116 = vector.extract_strided_slice %15 {offsets = [1, 128], sizes = [1, 16], strides = [1, 1]} : vector<2x256xf32> to vector<1x16xf32>
    %c1_77 = arith.constant 1 : index
    %c11_78 = arith.constant 11 : index
    %c3_79 = arith.constant 3 : index
    %117 = vector.load %arg5[%c1_77, %c11_78, %c3_79] : memref<2x22x22xf32, #tpu.memory_space<vmem>>, vector<1x1x16xf32>
    %118 = vector.shape_cast %117 : vector<1x1x16xf32> to vector<1x16xf32>
    %119 = vector.shape_cast %116 : vector<1x16xf32> to vector<1x1x16xf32>
    tpu.vector_store %arg5[%c1_77, %c11_78, %c3_79], %119 {strides = array<i32>} : memref<2x22x22xf32, #tpu.memory_space<vmem>>, vector<1x1x16xf32>,
    %120 = vector.extract_strided_slice %15 {offsets = [0, 144], sizes = [1, 16], strides = [1, 1]} : vector<2x256xf32> to vector<1x16xf32>
    %c0_80 = arith.constant 0 : index
    %c12 = arith.constant 12 : index
    %c3_81 = arith.constant 3 : index
    %121 = vector.load %arg5[%c0_80, %c12, %c3_81] : memref<2x22x22xf32, #tpu.memory_space<vmem>>, vector<1x1x16xf32>
    %122 = vector.shape_cast %121 : vector<1x1x16xf32> to vector<1x16xf32>
    %123 = vector.shape_cast %120 : vector<1x16xf32> to vector<1x1x16xf32>
    tpu.vector_store %arg5[%c0_80, %c12, %c3_81], %123 {strides = array<i32>} : memref<2x22x22xf32, #tpu.memory_space<vmem>>, vector<1x1x16xf32>,
    %124 = vector.extract_strided_slice %15 {offsets = [1, 144], sizes = [1, 16], strides = [1, 1]} : vector<2x256xf32> to vector<1x16xf32>
    %c1_82 = arith.constant 1 : index
    %c12_83 = arith.constant 12 : index
    %c3_84 = arith.constant 3 : index
    %125 = vector.load %arg5[%c1_82, %c12_83, %c3_84] : memref<2x22x22xf32, #tpu.memory_space<vmem>>, vector<1x1x16xf32>
    %126 = vector.shape_cast %125 : vector<1x1x16xf32> to vector<1x16xf32>
    %127 = vector.shape_cast %124 : vector<1x16xf32> to vector<1x1x16xf32>
    tpu.vector_store %arg5[%c1_82, %c12_83, %c3_84], %127 {strides = array<i32>} : memref<2x22x22xf32, #tpu.memory_space<vmem>>, vector<1x1x16xf32>,
    %128 = vector.extract_strided_slice %15 {offsets = [0, 160], sizes = [1, 16], strides = [1, 1]} : vector<2x256xf32> to vector<1x16xf32>
    %c0_85 = arith.constant 0 : index
    %c13 = arith.constant 13 : index
    %c3_86 = arith.constant 3 : index
    %129 = vector.load %arg5[%c0_85, %c13, %c3_86] : memref<2x22x22xf32, #tpu.memory_space<vmem>>, vector<1x1x16xf32>
    %130 = vector.shape_cast %129 : vector<1x1x16xf32> to vector<1x16xf32>
    %131 = vector.shape_cast %128 : vector<1x16xf32> to vector<1x1x16xf32>
    tpu.vector_store %arg5[%c0_85, %c13, %c3_86], %131 {strides = array<i32>} : memref<2x22x22xf32, #tpu.memory_space<vmem>>, vector<1x1x16xf32>,
    %132 = vector.extract_strided_slice %15 {offsets = [1, 160], sizes = [1, 16], strides = [1, 1]} : vector<2x256xf32> to vector<1x16xf32>
    %c1_87 = arith.constant 1 : index
    %c13_88 = arith.constant 13 : index
    %c3_89 = arith.constant 3 : index
    %133 = vector.load %arg5[%c1_87, %c13_88, %c3_89] : memref<2x22x22xf32, #tpu.memory_space<vmem>>, vector<1x1x16xf32>
    %134 = vector.shape_cast %133 : vector<1x1x16xf32> to vector<1x16xf32>
    %135 = vector.shape_cast %132 : vector<1x16xf32> to vector<1x1x16xf32>
    tpu.vector_store %arg5[%c1_87, %c13_88, %c3_89], %135 {strides = array<i32>} : memref<2x22x22xf32, #tpu.memory_space<vmem>>, vector<1x1x16xf32>,
    %136 = vector.extract_strided_slice %15 {offsets = [0, 176], sizes = [1, 16], strides = [1, 1]} : vector<2x256xf32> to vector<1x16xf32>
    %c0_90 = arith.constant 0 : index
    %c14 = arith.constant 14 : index
    %c3_91 = arith.constant 3 : index
    %137 = vector.load %arg5[%c0_90, %c14, %c3_91] : memref<2x22x22xf32, #tpu.memory_space<vmem>>, vector<1x1x16xf32>
    %138 = vector.shape_cast %137 : vector<1x1x16xf32> to vector<1x16xf32>
    %139 = vector.shape_cast %136 : vector<1x16xf32> to vector<1x1x16xf32>
    tpu.vector_store %arg5[%c0_90, %c14, %c3_91], %139 {strides = array<i32>} : memref<2x22x22xf32, #tpu.memory_space<vmem>>, vector<1x1x16xf32>,
    %140 = vector.extract_strided_slice %15 {offsets = [1, 176], sizes = [1, 16], strides = [1, 1]} : vector<2x256xf32> to vector<1x16xf32>
    %c1_92 = arith.constant 1 : index
    %c14_93 = arith.constant 14 : index
    %c3_94 = arith.constant 3 : index
    %141 = vector.load %arg5[%c1_92, %c14_93, %c3_94] : memref<2x22x22xf32, #tpu.memory_space<vmem>>, vector<1x1x16xf32>
    %142 = vector.shape_cast %141 : vector<1x1x16xf32> to vector<1x16xf32>
    %143 = vector.shape_cast %140 : vector<1x16xf32> to vector<1x1x16xf32>
    tpu.vector_store %arg5[%c1_92, %c14_93, %c3_94], %143 {strides = array<i32>} : memref<2x22x22xf32, #tpu.memory_space<vmem>>, vector<1x1x16xf32>,
    %144 = vector.extract_strided_slice %15 {offsets = [0, 192], sizes = [1, 16], strides = [1, 1]} : vector<2x256xf32> to vector<1x16xf32>
    %c0_95 = arith.constant 0 : index
    %c15 = arith.constant 15 : index
    %c3_96 = arith.constant 3 : index
    %145 = vector.load %arg5[%c0_95, %c15, %c3_96] : memref<2x22x22xf32, #tpu.memory_space<vmem>>, vector<1x1x16xf32>
    %146 = vector.shape_cast %145 : vector<1x1x16xf32> to vector<1x16xf32>
    %147 = vector.shape_cast %144 : vector<1x16xf32> to vector<1x1x16xf32>
    tpu.vector_store %arg5[%c0_95, %c15, %c3_96], %147 {strides = array<i32>} : memref<2x22x22xf32, #tpu.memory_space<vmem>>, vector<1x1x16xf32>,
    %148 = vector.extract_strided_slice %15 {offsets = [1, 192], sizes = [1, 16], strides = [1, 1]} : vector<2x256xf32> to vector<1x16xf32>
    %c1_97 = arith.constant 1 : index
    %c15_98 = arith.constant 15 : index
    %c3_99 = arith.constant 3 : index
    %149 = vector.load %arg5[%c1_97, %c15_98, %c3_99] : memref<2x22x22xf32, #tpu.memory_space<vmem>>, vector<1x1x16xf32>
    %150 = vector.shape_cast %149 : vector<1x1x16xf32> to vector<1x16xf32>
    %151 = vector.shape_cast %148 : vector<1x16xf32> to vector<1x1x16xf32>
    tpu.vector_store %arg5[%c1_97, %c15_98, %c3_99], %151 {strides = array<i32>} : memref<2x22x22xf32, #tpu.memory_space<vmem>>, vector<1x1x16xf32>,
    %152 = vector.extract_strided_slice %15 {offsets = [0, 208], sizes = [1, 16], strides = [1, 1]} : vector<2x256xf32> to vector<1x16xf32>
    %c0_100 = arith.constant 0 : index
    %c16 = arith.constant 16 : index
    %c3_101 = arith.constant 3 : index
    %153 = vector.load %arg5[%c0_100, %c16, %c3_101] : memref<2x22x22xf32, #tpu.memory_space<vmem>>, vector<1x1x16xf32>
    %154 = vector.shape_cast %153 : vector<1x1x16xf32> to vector<1x16xf32>
    %155 = vector.shape_cast %152 : vector<1x16xf32> to vector<1x1x16xf32>
    tpu.vector_store %arg5[%c0_100, %c16, %c3_101], %155 {strides = array<i32>} : memref<2x22x22xf32, #tpu.memory_space<vmem>>, vector<1x1x16xf32>,
    %156 = vector.extract_strided_slice %15 {offsets = [1, 208], sizes = [1, 16], strides = [1, 1]} : vector<2x256xf32> to vector<1x16xf32>
    %c1_102 = arith.constant 1 : index
    %c16_103 = arith.constant 16 : index
    %c3_104 = arith.constant 3 : index
    %157 = vector.load %arg5[%c1_102, %c16_103, %c3_104] : memref<2x22x22xf32, #tpu.memory_space<vmem>>, vector<1x1x16xf32>
    %158 = vector.shape_cast %157 : vector<1x1x16xf32> to vector<1x16xf32>
    %159 = vector.shape_cast %156 : vector<1x16xf32> to vector<1x1x16xf32>
    tpu.vector_store %arg5[%c1_102, %c16_103, %c3_104], %159 {strides = array<i32>} : memref<2x22x22xf32, #tpu.memory_space<vmem>>, vector<1x1x16xf32>,
    %160 = vector.extract_strided_slice %15 {offsets = [0, 224], sizes = [1, 16], strides = [1, 1]} : vector<2x256xf32> to vector<1x16xf32>
    %c0_105 = arith.constant 0 : index
    %c17 = arith.constant 17 : index
    %c3_106 = arith.constant 3 : index
    %161 = vector.load %arg5[%c0_105, %c17, %c3_106] : memref<2x22x22xf32, #tpu.memory_space<vmem>>, vector<1x1x16xf32>
    %162 = vector.shape_cast %161 : vector<1x1x16xf32> to vector<1x16xf32>
    %163 = vector.shape_cast %160 : vector<1x16xf32> to vector<1x1x16xf32>
    tpu.vector_store %arg5[%c0_105, %c17, %c3_106], %163 {strides = array<i32>} : memref<2x22x22xf32, #tpu.memory_space<vmem>>, vector<1x1x16xf32>,
    %164 = vector.extract_strided_slice %15 {offsets = [1, 224], sizes = [1, 16], strides = [1, 1]} : vector<2x256xf32> to vector<1x16xf32>
    %c1_107 = arith.constant 1 : index
    %c17_108 = arith.constant 17 : index
    %c3_109 = arith.constant 3 : index
    %165 = vector.load %arg5[%c1_107, %c17_108, %c3_109] : memref<2x22x22xf32, #tpu.memory_space<vmem>>, vector<1x1x16xf32>
    %166 = vector.shape_cast %165 : vector<1x1x16xf32> to vector<1x16xf32>
    %167 = vector.shape_cast %164 : vector<1x16xf32> to vector<1x1x16xf32>
    tpu.vector_store %arg5[%c1_107, %c17_108, %c3_109], %167 {strides = array<i32>} : memref<2x22x22xf32, #tpu.memory_space<vmem>>, vector<1x1x16xf32>,
    %168 = vector.extract_strided_slice %15 {offsets = [0, 240], sizes = [1, 16], strides = [1, 1]} : vector<2x256xf32> to vector<1x16xf32>
    %c0_110 = arith.constant 0 : index
    %c18 = arith.constant 18 : index
    %c3_111 = arith.constant 3 : index
    %169 = vector.load %arg5[%c0_110, %c18, %c3_111] : memref<2x22x22xf32, #tpu.memory_space<vmem>>, vector<1x1x16xf32>
    %170 = vector.shape_cast %169 : vector<1x1x16xf32> to vector<1x16xf32>
    %171 = vector.shape_cast %168 : vector<1x16xf32> to vector<1x1x16xf32>
    tpu.vector_store %arg5[%c0_110, %c18, %c3_111], %171 {strides = array<i32>} : memref<2x22x22xf32, #tpu.memory_space<vmem>>, vector<1x1x16xf32>,
    %172 = vector.extract_strided_slice %15 {offsets = [1, 240], sizes = [1, 16], strides = [1, 1]} : vector<2x256xf32> to vector<1x16xf32>
    %c1_112 = arith.constant 1 : index
    %c18_113 = arith.constant 18 : index
    %c3_114 = arith.constant 3 : index
    %173 = vector.load %arg5[%c1_112, %c18_113, %c3_114] : memref<2x22x22xf32, #tpu.memory_space<vmem>>, vector<1x1x16xf32>
    %174 = vector.shape_cast %173 : vector<1x1x16xf32> to vector<1x16xf32>
    %175 = vector.shape_cast %172 : vector<1x16xf32> to vector<1x1x16xf32>
    tpu.vector_store %arg5[%c1_112, %c18_113, %c3_114], %175 {strides = array<i32>} : memref<2x22x22xf32, #tpu.memory_space<vmem>>, vector<1x1x16xf32>,
    %c0_115 = arith.constant 0 : index
    %176 = memref.load %arg3[%c0_115] : memref<1xf32, #tpu.memory_space<smem>>
    %177 = vector.broadcast %176 : f32 to vector<16x16xf32>
    %c0_116 = arith.constant 0 : index
    %c0_117 = arith.constant 0 : index
    %c0_118 = arith.constant 0 : index
    %178 = vector.load %arg5[%c0_116, %c0_117, %c0_118] : memref<2x22x22xf32, #tpu.memory_space<vmem>>, vector<1x22x22xf32>
    %179 = vector.shape_cast %178 : vector<1x22x22xf32> to vector<22x22xf32>
    %180 = vector.extract_strided_slice %179 {offsets = [0, 0], sizes = [22, 16], strides = [1, 1]} : vector<22x22xf32> to vector<22x16xf32>
    %c0_119 = arith.constant 0 : index
    %181 = memref.load %arg2[%c0_119] : memref<98xf32, #tpu.memory_space<smem>>
    %182 = vector.extract_strided_slice %180 {offsets = [0, 0], sizes = [16, 16], strides = [1, 1]} : vector<22x16xf32> to vector<16x16xf32>
    %183 = vector.broadcast %181 : f32 to vector<16x16xf32>
    %184 = arith.mulf %183, %182 : vector<16x16xf32>
    %185 = arith.addf %177, %184 : vector<16x16xf32>
    %c7_120 = arith.constant 7 : index
    %186 = memref.load %arg2[%c7_120] : memref<98xf32, #tpu.memory_space<smem>>
    %187 = vector.extract_strided_slice %180 {offsets = [1, 0], sizes = [16, 16], strides = [1, 1]} : vector<22x16xf32> to vector<16x16xf32>
    %188 = vector.broadcast %186 : f32 to vector<16x16xf32>
    %189 = arith.mulf %188, %187 : vector<16x16xf32>
    %190 = arith.addf %185, %189 : vector<16x16xf32>
    %c14_121 = arith.constant 14 : index
    %191 = memref.load %arg2[%c14_121] : memref<98xf32, #tpu.memory_space<smem>>
    %192 = vector.extract_strided_slice %180 {offsets = [2, 0], sizes = [16, 16], strides = [1, 1]} : vector<22x16xf32> to vector<16x16xf32>
    %193 = vector.broadcast %191 : f32 to vector<16x16xf32>
    %194 = arith.mulf %193, %192 : vector<16x16xf32>
    %195 = arith.addf %190, %194 : vector<16x16xf32>
    %c21 = arith.constant 21 : index
    %196 = memref.load %arg2[%c21] : memref<98xf32, #tpu.memory_space<smem>>
    %197 = vector.extract_strided_slice %180 {offsets = [3, 0], sizes = [16, 16], strides = [1, 1]} : vector<22x16xf32> to vector<16x16xf32>
    %198 = vector.broadcast %196 : f32 to vector<16x16xf32>
    %199 = arith.mulf %198, %197 : vector<16x16xf32>
    %200 = arith.addf %195, %199 : vector<16x16xf32>
    %c28 = arith.constant 28 : index
    %201 = memref.load %arg2[%c28] : memref<98xf32, #tpu.memory_space<smem>>
    %202 = vector.extract_strided_slice %180 {offsets = [4, 0], sizes = [16, 16], strides = [1, 1]} : vector<22x16xf32> to vector<16x16xf32>
    %203 = vector.broadcast %201 : f32 to vector<16x16xf32>
    %204 = arith.mulf %203, %202 : vector<16x16xf32>
    %205 = arith.addf %200, %204 : vector<16x16xf32>
    %c35 = arith.constant 35 : index
    %206 = memref.load %arg2[%c35] : memref<98xf32, #tpu.memory_space<smem>>
    %207 = vector.extract_strided_slice %180 {offsets = [5, 0], sizes = [16, 16], strides = [1, 1]} : vector<22x16xf32> to vector<16x16xf32>
    %208 = vector.broadcast %206 : f32 to vector<16x16xf32>
    %209 = arith.mulf %208, %207 : vector<16x16xf32>
    %210 = arith.addf %205, %209 : vector<16x16xf32>
    %c42 = arith.constant 42 : index
    %211 = memref.load %arg2[%c42] : memref<98xf32, #tpu.memory_space<smem>>
    %212 = vector.extract_strided_slice %180 {offsets = [6, 0], sizes = [16, 16], strides = [1, 1]} : vector<22x16xf32> to vector<16x16xf32>
    %213 = vector.broadcast %211 : f32 to vector<16x16xf32>
    %214 = arith.mulf %213, %212 : vector<16x16xf32>
    %215 = arith.addf %210, %214 : vector<16x16xf32>
    %216 = vector.extract_strided_slice %179 {offsets = [0, 1], sizes = [22, 16], strides = [1, 1]} : vector<22x22xf32> to vector<22x16xf32>
    %c1_122 = arith.constant 1 : index
    %217 = memref.load %arg2[%c1_122] : memref<98xf32, #tpu.memory_space<smem>>
    %218 = vector.extract_strided_slice %216 {offsets = [0, 0], sizes = [16, 16], strides = [1, 1]} : vector<22x16xf32> to vector<16x16xf32>
    %219 = vector.broadcast %217 : f32 to vector<16x16xf32>
    %220 = arith.mulf %219, %218 : vector<16x16xf32>
    %221 = arith.addf %215, %220 : vector<16x16xf32>
    %c8_123 = arith.constant 8 : index
    %222 = memref.load %arg2[%c8_123] : memref<98xf32, #tpu.memory_space<smem>>
    %223 = vector.extract_strided_slice %216 {offsets = [1, 0], sizes = [16, 16], strides = [1, 1]} : vector<22x16xf32> to vector<16x16xf32>
    %224 = vector.broadcast %222 : f32 to vector<16x16xf32>
    %225 = arith.mulf %224, %223 : vector<16x16xf32>
    %226 = arith.addf %221, %225 : vector<16x16xf32>
    %c15_124 = arith.constant 15 : index
    %227 = memref.load %arg2[%c15_124] : memref<98xf32, #tpu.memory_space<smem>>
    %228 = vector.extract_strided_slice %216 {offsets = [2, 0], sizes = [16, 16], strides = [1, 1]} : vector<22x16xf32> to vector<16x16xf32>
    %229 = vector.broadcast %227 : f32 to vector<16x16xf32>
    %230 = arith.mulf %229, %228 : vector<16x16xf32>
    %231 = arith.addf %226, %230 : vector<16x16xf32>
    %c22 = arith.constant 22 : index
    %232 = memref.load %arg2[%c22] : memref<98xf32, #tpu.memory_space<smem>>
    %233 = vector.extract_strided_slice %216 {offsets = [3, 0], sizes = [16, 16], strides = [1, 1]} : vector<22x16xf32> to vector<16x16xf32>
    %234 = vector.broadcast %232 : f32 to vector<16x16xf32>
    %235 = arith.mulf %234, %233 : vector<16x16xf32>
    %236 = arith.addf %231, %235 : vector<16x16xf32>
    %c29 = arith.constant 29 : index
    %237 = memref.load %arg2[%c29] : memref<98xf32, #tpu.memory_space<smem>>
    %238 = vector.extract_strided_slice %216 {offsets = [4, 0], sizes = [16, 16], strides = [1, 1]} : vector<22x16xf32> to vector<16x16xf32>
    %239 = vector.broadcast %237 : f32 to vector<16x16xf32>
    %240 = arith.mulf %239, %238 : vector<16x16xf32>
    %241 = arith.addf %236, %240 : vector<16x16xf32>
    %c36 = arith.constant 36 : index
    %242 = memref.load %arg2[%c36] : memref<98xf32, #tpu.memory_space<smem>>
    %243 = vector.extract_strided_slice %216 {offsets = [5, 0], sizes = [16, 16], strides = [1, 1]} : vector<22x16xf32> to vector<16x16xf32>
    %244 = vector.broadcast %242 : f32 to vector<16x16xf32>
    %245 = arith.mulf %244, %243 : vector<16x16xf32>
    %246 = arith.addf %241, %245 : vector<16x16xf32>
    %c43 = arith.constant 43 : index
    %247 = memref.load %arg2[%c43] : memref<98xf32, #tpu.memory_space<smem>>
    %248 = vector.extract_strided_slice %216 {offsets = [6, 0], sizes = [16, 16], strides = [1, 1]} : vector<22x16xf32> to vector<16x16xf32>
    %249 = vector.broadcast %247 : f32 to vector<16x16xf32>
    %250 = arith.mulf %249, %248 : vector<16x16xf32>
    %251 = arith.addf %246, %250 : vector<16x16xf32>
    %252 = vector.extract_strided_slice %179 {offsets = [0, 2], sizes = [22, 16], strides = [1, 1]} : vector<22x22xf32> to vector<22x16xf32>
    %c2 = arith.constant 2 : index
    %253 = memref.load %arg2[%c2] : memref<98xf32, #tpu.memory_space<smem>>
    %254 = vector.extract_strided_slice %252 {offsets = [0, 0], sizes = [16, 16], strides = [1, 1]} : vector<22x16xf32> to vector<16x16xf32>
    %255 = vector.broadcast %253 : f32 to vector<16x16xf32>
    %256 = arith.mulf %255, %254 : vector<16x16xf32>
    %257 = arith.addf %251, %256 : vector<16x16xf32>
    %c9_125 = arith.constant 9 : index
    %258 = memref.load %arg2[%c9_125] : memref<98xf32, #tpu.memory_space<smem>>
    %259 = vector.extract_strided_slice %252 {offsets = [1, 0], sizes = [16, 16], strides = [1, 1]} : vector<22x16xf32> to vector<16x16xf32>
    %260 = vector.broadcast %258 : f32 to vector<16x16xf32>
    %261 = arith.mulf %260, %259 : vector<16x16xf32>
    %262 = arith.addf %257, %261 : vector<16x16xf32>
    %c16_126 = arith.constant 16 : index
    %263 = memref.load %arg2[%c16_126] : memref<98xf32, #tpu.memory_space<smem>>
    %264 = vector.extract_strided_slice %252 {offsets = [2, 0], sizes = [16, 16], strides = [1, 1]} : vector<22x16xf32> to vector<16x16xf32>
    %265 = vector.broadcast %263 : f32 to vector<16x16xf32>
    %266 = arith.mulf %265, %264 : vector<16x16xf32>
    %267 = arith.addf %262, %266 : vector<16x16xf32>
    %c23 = arith.constant 23 : index
    %268 = memref.load %arg2[%c23] : memref<98xf32, #tpu.memory_space<smem>>
    %269 = vector.extract_strided_slice %252 {offsets = [3, 0], sizes = [16, 16], strides = [1, 1]} : vector<22x16xf32> to vector<16x16xf32>
    %270 = vector.broadcast %268 : f32 to vector<16x16xf32>
    %271 = arith.mulf %270, %269 : vector<16x16xf32>
    %272 = arith.addf %267, %271 : vector<16x16xf32>
    %c30 = arith.constant 30 : index
    %273 = memref.load %arg2[%c30] : memref<98xf32, #tpu.memory_space<smem>>
    %274 = vector.extract_strided_slice %252 {offsets = [4, 0], sizes = [16, 16], strides = [1, 1]} : vector<22x16xf32> to vector<16x16xf32>
    %275 = vector.broadcast %273 : f32 to vector<16x16xf32>
    %276 = arith.mulf %275, %274 : vector<16x16xf32>
    %277 = arith.addf %272, %276 : vector<16x16xf32>
    %c37 = arith.constant 37 : index
    %278 = memref.load %arg2[%c37] : memref<98xf32, #tpu.memory_space<smem>>
    %279 = vector.extract_strided_slice %252 {offsets = [5, 0], sizes = [16, 16], strides = [1, 1]} : vector<22x16xf32> to vector<16x16xf32>
    %280 = vector.broadcast %278 : f32 to vector<16x16xf32>
    %281 = arith.mulf %280, %279 : vector<16x16xf32>
    %282 = arith.addf %277, %281 : vector<16x16xf32>
    %c44 = arith.constant 44 : index
    %283 = memref.load %arg2[%c44] : memref<98xf32, #tpu.memory_space<smem>>
    %284 = vector.extract_strided_slice %252 {offsets = [6, 0], sizes = [16, 16], strides = [1, 1]} : vector<22x16xf32> to vector<16x16xf32>
    %285 = vector.broadcast %283 : f32 to vector<16x16xf32>
    %286 = arith.mulf %285, %284 : vector<16x16xf32>
    %287 = arith.addf %282, %286 : vector<16x16xf32>
    %288 = vector.extract_strided_slice %179 {offsets = [0, 3], sizes = [22, 16], strides = [1, 1]} : vector<22x22xf32> to vector<22x16xf32>
    %c3_127 = arith.constant 3 : index
    %289 = memref.load %arg2[%c3_127] : memref<98xf32, #tpu.memory_space<smem>>
    %290 = vector.extract_strided_slice %288 {offsets = [0, 0], sizes = [16, 16], strides = [1, 1]} : vector<22x16xf32> to vector<16x16xf32>
    %291 = vector.broadcast %289 : f32 to vector<16x16xf32>
    %292 = arith.mulf %291, %290 : vector<16x16xf32>
    %293 = arith.addf %287, %292 : vector<16x16xf32>
    %c10_128 = arith.constant 10 : index
    %294 = memref.load %arg2[%c10_128] : memref<98xf32, #tpu.memory_space<smem>>
    %295 = vector.extract_strided_slice %288 {offsets = [1, 0], sizes = [16, 16], strides = [1, 1]} : vector<22x16xf32> to vector<16x16xf32>
    %296 = vector.broadcast %294 : f32 to vector<16x16xf32>
    %297 = arith.mulf %296, %295 : vector<16x16xf32>
    %298 = arith.addf %293, %297 : vector<16x16xf32>
    %c17_129 = arith.constant 17 : index
    %299 = memref.load %arg2[%c17_129] : memref<98xf32, #tpu.memory_space<smem>>
    %300 = vector.extract_strided_slice %288 {offsets = [2, 0], sizes = [16, 16], strides = [1, 1]} : vector<22x16xf32> to vector<16x16xf32>
    %301 = vector.broadcast %299 : f32 to vector<16x16xf32>
    %302 = arith.mulf %301, %300 : vector<16x16xf32>
    %303 = arith.addf %298, %302 : vector<16x16xf32>
    %c24 = arith.constant 24 : index
    %304 = memref.load %arg2[%c24] : memref<98xf32, #tpu.memory_space<smem>>
    %305 = vector.extract_strided_slice %288 {offsets = [3, 0], sizes = [16, 16], strides = [1, 1]} : vector<22x16xf32> to vector<16x16xf32>
    %306 = vector.broadcast %304 : f32 to vector<16x16xf32>
    %307 = arith.mulf %306, %305 : vector<16x16xf32>
    %308 = arith.addf %303, %307 : vector<16x16xf32>
    %c31 = arith.constant 31 : index
    %309 = memref.load %arg2[%c31] : memref<98xf32, #tpu.memory_space<smem>>
    %310 = vector.extract_strided_slice %288 {offsets = [4, 0], sizes = [16, 16], strides = [1, 1]} : vector<22x16xf32> to vector<16x16xf32>
    %311 = vector.broadcast %309 : f32 to vector<16x16xf32>
    %312 = arith.mulf %311, %310 : vector<16x16xf32>
    %313 = arith.addf %308, %312 : vector<16x16xf32>
    %c38 = arith.constant 38 : index
    %314 = memref.load %arg2[%c38] : memref<98xf32, #tpu.memory_space<smem>>
    %315 = vector.extract_strided_slice %288 {offsets = [5, 0], sizes = [16, 16], strides = [1, 1]} : vector<22x16xf32> to vector<16x16xf32>
    %316 = vector.broadcast %314 : f32 to vector<16x16xf32>
    %317 = arith.mulf %316, %315 : vector<16x16xf32>
    %318 = arith.addf %313, %317 : vector<16x16xf32>
    %c45 = arith.constant 45 : index
    %319 = memref.load %arg2[%c45] : memref<98xf32, #tpu.memory_space<smem>>
    %320 = vector.extract_strided_slice %288 {offsets = [6, 0], sizes = [16, 16], strides = [1, 1]} : vector<22x16xf32> to vector<16x16xf32>
    %321 = vector.broadcast %319 : f32 to vector<16x16xf32>
    %322 = arith.mulf %321, %320 : vector<16x16xf32>
    %323 = arith.addf %318, %322 : vector<16x16xf32>
    %324 = vector.extract_strided_slice %179 {offsets = [0, 4], sizes = [22, 16], strides = [1, 1]} : vector<22x22xf32> to vector<22x16xf32>
    %c4_130 = arith.constant 4 : index
    %325 = memref.load %arg2[%c4_130] : memref<98xf32, #tpu.memory_space<smem>>
    %326 = vector.extract_strided_slice %324 {offsets = [0, 0], sizes = [16, 16], strides = [1, 1]} : vector<22x16xf32> to vector<16x16xf32>
    %327 = vector.broadcast %325 : f32 to vector<16x16xf32>
    %328 = arith.mulf %327, %326 : vector<16x16xf32>
    %329 = arith.addf %323, %328 : vector<16x16xf32>
    %c11_131 = arith.constant 11 : index
    %330 = memref.load %arg2[%c11_131] : memref<98xf32, #tpu.memory_space<smem>>
    %331 = vector.extract_strided_slice %324 {offsets = [1, 0], sizes = [16, 16], strides = [1, 1]} : vector<22x16xf32> to vector<16x16xf32>
    %332 = vector.broadcast %330 : f32 to vector<16x16xf32>
    %333 = arith.mulf %332, %331 : vector<16x16xf32>
    %334 = arith.addf %329, %333 : vector<16x16xf32>
    %c18_132 = arith.constant 18 : index
    %335 = memref.load %arg2[%c18_132] : memref<98xf32, #tpu.memory_space<smem>>
    %336 = vector.extract_strided_slice %324 {offsets = [2, 0], sizes = [16, 16], strides = [1, 1]} : vector<22x16xf32> to vector<16x16xf32>
    %337 = vector.broadcast %335 : f32 to vector<16x16xf32>
    %338 = arith.mulf %337, %336 : vector<16x16xf32>
    %339 = arith.addf %334, %338 : vector<16x16xf32>
    %c25 = arith.constant 25 : index
    %340 = memref.load %arg2[%c25] : memref<98xf32, #tpu.memory_space<smem>>
    %341 = vector.extract_strided_slice %324 {offsets = [3, 0], sizes = [16, 16], strides = [1, 1]} : vector<22x16xf32> to vector<16x16xf32>
    %342 = vector.broadcast %340 : f32 to vector<16x16xf32>
    %343 = arith.mulf %342, %341 : vector<16x16xf32>
    %344 = arith.addf %339, %343 : vector<16x16xf32>
    %c32 = arith.constant 32 : index
    %345 = memref.load %arg2[%c32] : memref<98xf32, #tpu.memory_space<smem>>
    %346 = vector.extract_strided_slice %324 {offsets = [4, 0], sizes = [16, 16], strides = [1, 1]} : vector<22x16xf32> to vector<16x16xf32>
    %347 = vector.broadcast %345 : f32 to vector<16x16xf32>
    %348 = arith.mulf %347, %346 : vector<16x16xf32>
    %349 = arith.addf %344, %348 : vector<16x16xf32>
    %c39 = arith.constant 39 : index
    %350 = memref.load %arg2[%c39] : memref<98xf32, #tpu.memory_space<smem>>
    %351 = vector.extract_strided_slice %324 {offsets = [5, 0], sizes = [16, 16], strides = [1, 1]} : vector<22x16xf32> to vector<16x16xf32>
    %352 = vector.broadcast %350 : f32 to vector<16x16xf32>
    %353 = arith.mulf %352, %351 : vector<16x16xf32>
    %354 = arith.addf %349, %353 : vector<16x16xf32>
    %c46 = arith.constant 46 : index
    %355 = memref.load %arg2[%c46] : memref<98xf32, #tpu.memory_space<smem>>
    %356 = vector.extract_strided_slice %324 {offsets = [6, 0], sizes = [16, 16], strides = [1, 1]} : vector<22x16xf32> to vector<16x16xf32>
    %357 = vector.broadcast %355 : f32 to vector<16x16xf32>
    %358 = arith.mulf %357, %356 : vector<16x16xf32>
    %359 = arith.addf %354, %358 : vector<16x16xf32>
    %360 = vector.extract_strided_slice %179 {offsets = [0, 5], sizes = [22, 16], strides = [1, 1]} : vector<22x22xf32> to vector<22x16xf32>
    %c5_133 = arith.constant 5 : index
    %361 = memref.load %arg2[%c5_133] : memref<98xf32, #tpu.memory_space<smem>>
    %362 = vector.extract_strided_slice %360 {offsets = [0, 0], sizes = [16, 16], strides = [1, 1]} : vector<22x16xf32> to vector<16x16xf32>
    %363 = vector.broadcast %361 : f32 to vector<16x16xf32>
    %364 = arith.mulf %363, %362 : vector<16x16xf32>
    %365 = arith.addf %359, %364 : vector<16x16xf32>
    %c12_134 = arith.constant 12 : index
    %366 = memref.load %arg2[%c12_134] : memref<98xf32, #tpu.memory_space<smem>>
    %367 = vector.extract_strided_slice %360 {offsets = [1, 0], sizes = [16, 16], strides = [1, 1]} : vector<22x16xf32> to vector<16x16xf32>
    %368 = vector.broadcast %366 : f32 to vector<16x16xf32>
    %369 = arith.mulf %368, %367 : vector<16x16xf32>
    %370 = arith.addf %365, %369 : vector<16x16xf32>
    %c19_135 = arith.constant 19 : index
    %371 = memref.load %arg2[%c19_135] : memref<98xf32, #tpu.memory_space<smem>>
    %372 = vector.extract_strided_slice %360 {offsets = [2, 0], sizes = [16, 16], strides = [1, 1]} : vector<22x16xf32> to vector<16x16xf32>
    %373 = vector.broadcast %371 : f32 to vector<16x16xf32>
    %374 = arith.mulf %373, %372 : vector<16x16xf32>
    %375 = arith.addf %370, %374 : vector<16x16xf32>
    %c26 = arith.constant 26 : index
    %376 = memref.load %arg2[%c26] : memref<98xf32, #tpu.memory_space<smem>>
    %377 = vector.extract_strided_slice %360 {offsets = [3, 0], sizes = [16, 16], strides = [1, 1]} : vector<22x16xf32> to vector<16x16xf32>
    %378 = vector.broadcast %376 : f32 to vector<16x16xf32>
    %379 = arith.mulf %378, %377 : vector<16x16xf32>
    %380 = arith.addf %375, %379 : vector<16x16xf32>
    %c33 = arith.constant 33 : index
    %381 = memref.load %arg2[%c33] : memref<98xf32, #tpu.memory_space<smem>>
    %382 = vector.extract_strided_slice %360 {offsets = [4, 0], sizes = [16, 16], strides = [1, 1]} : vector<22x16xf32> to vector<16x16xf32>
    %383 = vector.broadcast %381 : f32 to vector<16x16xf32>
    %384 = arith.mulf %383, %382 : vector<16x16xf32>
    %385 = arith.addf %380, %384 : vector<16x16xf32>
    %c40 = arith.constant 40 : index
    %386 = memref.load %arg2[%c40] : memref<98xf32, #tpu.memory_space<smem>>
    %387 = vector.extract_strided_slice %360 {offsets = [5, 0], sizes = [16, 16], strides = [1, 1]} : vector<22x16xf32> to vector<16x16xf32>
    %388 = vector.broadcast %386 : f32 to vector<16x16xf32>
    %389 = arith.mulf %388, %387 : vector<16x16xf32>
    %390 = arith.addf %385, %389 : vector<16x16xf32>
    %c47 = arith.constant 47 : index
    %391 = memref.load %arg2[%c47] : memref<98xf32, #tpu.memory_space<smem>>
    %392 = vector.extract_strided_slice %360 {offsets = [6, 0], sizes = [16, 16], strides = [1, 1]} : vector<22x16xf32> to vector<16x16xf32>
    %393 = vector.broadcast %391 : f32 to vector<16x16xf32>
    %394 = arith.mulf %393, %392 : vector<16x16xf32>
    %395 = arith.addf %390, %394 : vector<16x16xf32>
    %396 = vector.extract_strided_slice %179 {offsets = [0, 6], sizes = [22, 16], strides = [1, 1]} : vector<22x22xf32> to vector<22x16xf32>
    %c6_136 = arith.constant 6 : index
    %397 = memref.load %arg2[%c6_136] : memref<98xf32, #tpu.memory_space<smem>>
    %398 = vector.extract_strided_slice %396 {offsets = [0, 0], sizes = [16, 16], strides = [1, 1]} : vector<22x16xf32> to vector<16x16xf32>
    %399 = vector.broadcast %397 : f32 to vector<16x16xf32>
    %400 = arith.mulf %399, %398 : vector<16x16xf32>
    %401 = arith.addf %395, %400 : vector<16x16xf32>
    %c13_137 = arith.constant 13 : index
    %402 = memref.load %arg2[%c13_137] : memref<98xf32, #tpu.memory_space<smem>>
    %403 = vector.extract_strided_slice %396 {offsets = [1, 0], sizes = [16, 16], strides = [1, 1]} : vector<22x16xf32> to vector<16x16xf32>
    %404 = vector.broadcast %402 : f32 to vector<16x16xf32>
    %405 = arith.mulf %404, %403 : vector<16x16xf32>
    %406 = arith.addf %401, %405 : vector<16x16xf32>
    %c20 = arith.constant 20 : index
    %407 = memref.load %arg2[%c20] : memref<98xf32, #tpu.memory_space<smem>>
    %408 = vector.extract_strided_slice %396 {offsets = [2, 0], sizes = [16, 16], strides = [1, 1]} : vector<22x16xf32> to vector<16x16xf32>
    %409 = vector.broadcast %407 : f32 to vector<16x16xf32>
    %410 = arith.mulf %409, %408 : vector<16x16xf32>
    %411 = arith.addf %406, %410 : vector<16x16xf32>
    %c27 = arith.constant 27 : index
    %412 = memref.load %arg2[%c27] : memref<98xf32, #tpu.memory_space<smem>>
    %413 = vector.extract_strided_slice %396 {offsets = [3, 0], sizes = [16, 16], strides = [1, 1]} : vector<22x16xf32> to vector<16x16xf32>
    %414 = vector.broadcast %412 : f32 to vector<16x16xf32>
    %415 = arith.mulf %414, %413 : vector<16x16xf32>
    %416 = arith.addf %411, %415 : vector<16x16xf32>
    %c34 = arith.constant 34 : index
    %417 = memref.load %arg2[%c34] : memref<98xf32, #tpu.memory_space<smem>>
    %418 = vector.extract_strided_slice %396 {offsets = [4, 0], sizes = [16, 16], strides = [1, 1]} : vector<22x16xf32> to vector<16x16xf32>
    %419 = vector.broadcast %417 : f32 to vector<16x16xf32>
    %420 = arith.mulf %419, %418 : vector<16x16xf32>
    %421 = arith.addf %416, %420 : vector<16x16xf32>
    %c41 = arith.constant 41 : index
    %422 = memref.load %arg2[%c41] : memref<98xf32, #tpu.memory_space<smem>>
    %423 = vector.extract_strided_slice %396 {offsets = [5, 0], sizes = [16, 16], strides = [1, 1]} : vector<22x16xf32> to vector<16x16xf32>
    %424 = vector.broadcast %422 : f32 to vector<16x16xf32>
    %425 = arith.mulf %424, %423 : vector<16x16xf32>
    %426 = arith.addf %421, %425 : vector<16x16xf32>
    %c48 = arith.constant 48 : index
    %427 = memref.load %arg2[%c48] : memref<98xf32, #tpu.memory_space<smem>>
    %428 = vector.extract_strided_slice %396 {offsets = [6, 0], sizes = [16, 16], strides = [1, 1]} : vector<22x16xf32> to vector<16x16xf32>
    %429 = vector.broadcast %427 : f32 to vector<16x16xf32>
    %430 = arith.mulf %429, %428 : vector<16x16xf32>
    %431 = arith.addf %426, %430 : vector<16x16xf32>
    %c1_138 = arith.constant 1 : index
    %c0_139 = arith.constant 0 : index
    %c0_140 = arith.constant 0 : index
    %432 = vector.load %arg5[%c1_138, %c0_139, %c0_140] : memref<2x22x22xf32, #tpu.memory_space<vmem>>, vector<1x22x22xf32>
    %433 = vector.shape_cast %432 : vector<1x22x22xf32> to vector<22x22xf32>
    %434 = vector.extract_strided_slice %433 {offsets = [0, 0], sizes = [22, 16], strides = [1, 1]} : vector<22x22xf32> to vector<22x16xf32>
    %c49 = arith.constant 49 : index
    %435 = memref.load %arg2[%c49] : memref<98xf32, #tpu.memory_space<smem>>
    %436 = vector.extract_strided_slice %434 {offsets = [0, 0], sizes = [16, 16], strides = [1, 1]} : vector<22x16xf32> to vector<16x16xf32>
    %437 = vector.broadcast %435 : f32 to vector<16x16xf32>
    %438 = arith.mulf %437, %436 : vector<16x16xf32>
    %439 = arith.addf %431, %438 : vector<16x16xf32>
    %c56 = arith.constant 56 : index
    %440 = memref.load %arg2[%c56] : memref<98xf32, #tpu.memory_space<smem>>
    %441 = vector.extract_strided_slice %434 {offsets = [1, 0], sizes = [16, 16], strides = [1, 1]} : vector<22x16xf32> to vector<16x16xf32>
    %442 = vector.broadcast %440 : f32 to vector<16x16xf32>
    %443 = arith.mulf %442, %441 : vector<16x16xf32>
    %444 = arith.addf %439, %443 : vector<16x16xf32>
    %c63 = arith.constant 63 : index
    %445 = memref.load %arg2[%c63] : memref<98xf32, #tpu.memory_space<smem>>
    %446 = vector.extract_strided_slice %434 {offsets = [2, 0], sizes = [16, 16], strides = [1, 1]} : vector<22x16xf32> to vector<16x16xf32>
    %447 = vector.broadcast %445 : f32 to vector<16x16xf32>
    %448 = arith.mulf %447, %446 : vector<16x16xf32>
    %449 = arith.addf %444, %448 : vector<16x16xf32>
    %c70 = arith.constant 70 : index
    %450 = memref.load %arg2[%c70] : memref<98xf32, #tpu.memory_space<smem>>
    %451 = vector.extract_strided_slice %434 {offsets = [3, 0], sizes = [16, 16], strides = [1, 1]} : vector<22x16xf32> to vector<16x16xf32>
    %452 = vector.broadcast %450 : f32 to vector<16x16xf32>
    %453 = arith.mulf %452, %451 : vector<16x16xf32>
    %454 = arith.addf %449, %453 : vector<16x16xf32>
    %c77 = arith.constant 77 : index
    %455 = memref.load %arg2[%c77] : memref<98xf32, #tpu.memory_space<smem>>
    %456 = vector.extract_strided_slice %434 {offsets = [4, 0], sizes = [16, 16], strides = [1, 1]} : vector<22x16xf32> to vector<16x16xf32>
    %457 = vector.broadcast %455 : f32 to vector<16x16xf32>
    %458 = arith.mulf %457, %456 : vector<16x16xf32>
    %459 = arith.addf %454, %458 : vector<16x16xf32>
    %c84 = arith.constant 84 : index
    %460 = memref.load %arg2[%c84] : memref<98xf32, #tpu.memory_space<smem>>
    %461 = vector.extract_strided_slice %434 {offsets = [5, 0], sizes = [16, 16], strides = [1, 1]} : vector<22x16xf32> to vector<16x16xf32>
    %462 = vector.broadcast %460 : f32 to vector<16x16xf32>
    %463 = arith.mulf %462, %461 : vector<16x16xf32>
    %464 = arith.addf %459, %463 : vector<16x16xf32>
    %c91 = arith.constant 91 : index
    %465 = memref.load %arg2[%c91] : memref<98xf32, #tpu.memory_space<smem>>
    %466 = vector.extract_strided_slice %434 {offsets = [6, 0], sizes = [16, 16], strides = [1, 1]} : vector<22x16xf32> to vector<16x16xf32>
    %467 = vector.broadcast %465 : f32 to vector<16x16xf32>
    %468 = arith.mulf %467, %466 : vector<16x16xf32>
    %469 = arith.addf %464, %468 : vector<16x16xf32>
    %470 = vector.extract_strided_slice %433 {offsets = [0, 1], sizes = [22, 16], strides = [1, 1]} : vector<22x22xf32> to vector<22x16xf32>
    %c50 = arith.constant 50 : index
    %471 = memref.load %arg2[%c50] : memref<98xf32, #tpu.memory_space<smem>>
    %472 = vector.extract_strided_slice %470 {offsets = [0, 0], sizes = [16, 16], strides = [1, 1]} : vector<22x16xf32> to vector<16x16xf32>
    %473 = vector.broadcast %471 : f32 to vector<16x16xf32>
    %474 = arith.mulf %473, %472 : vector<16x16xf32>
    %475 = arith.addf %469, %474 : vector<16x16xf32>
    %c57 = arith.constant 57 : index
    %476 = memref.load %arg2[%c57] : memref<98xf32, #tpu.memory_space<smem>>
    %477 = vector.extract_strided_slice %470 {offsets = [1, 0], sizes = [16, 16], strides = [1, 1]} : vector<22x16xf32> to vector<16x16xf32>
    %478 = vector.broadcast %476 : f32 to vector<16x16xf32>
    %479 = arith.mulf %478, %477 : vector<16x16xf32>
    %480 = arith.addf %475, %479 : vector<16x16xf32>
    %c64 = arith.constant 64 : index
    %481 = memref.load %arg2[%c64] : memref<98xf32, #tpu.memory_space<smem>>
    %482 = vector.extract_strided_slice %470 {offsets = [2, 0], sizes = [16, 16], strides = [1, 1]} : vector<22x16xf32> to vector<16x16xf32>
    %483 = vector.broadcast %481 : f32 to vector<16x16xf32>
    %484 = arith.mulf %483, %482 : vector<16x16xf32>
    %485 = arith.addf %480, %484 : vector<16x16xf32>
    %c71 = arith.constant 71 : index
    %486 = memref.load %arg2[%c71] : memref<98xf32, #tpu.memory_space<smem>>
    %487 = vector.extract_strided_slice %470 {offsets = [3, 0], sizes = [16, 16], strides = [1, 1]} : vector<22x16xf32> to vector<16x16xf32>
    %488 = vector.broadcast %486 : f32 to vector<16x16xf32>
    %489 = arith.mulf %488, %487 : vector<16x16xf32>
    %490 = arith.addf %485, %489 : vector<16x16xf32>
    %c78 = arith.constant 78 : index
    %491 = memref.load %arg2[%c78] : memref<98xf32, #tpu.memory_space<smem>>
    %492 = vector.extract_strided_slice %470 {offsets = [4, 0], sizes = [16, 16], strides = [1, 1]} : vector<22x16xf32> to vector<16x16xf32>
    %493 = vector.broadcast %491 : f32 to vector<16x16xf32>
    %494 = arith.mulf %493, %492 : vector<16x16xf32>
    %495 = arith.addf %490, %494 : vector<16x16xf32>
    %c85 = arith.constant 85 : index
    %496 = memref.load %arg2[%c85] : memref<98xf32, #tpu.memory_space<smem>>
    %497 = vector.extract_strided_slice %470 {offsets = [5, 0], sizes = [16, 16], strides = [1, 1]} : vector<22x16xf32> to vector<16x16xf32>
    %498 = vector.broadcast %496 : f32 to vector<16x16xf32>
    %499 = arith.mulf %498, %497 : vector<16x16xf32>
    %500 = arith.addf %495, %499 : vector<16x16xf32>
    %c92 = arith.constant 92 : index
    %501 = memref.load %arg2[%c92] : memref<98xf32, #tpu.memory_space<smem>>
    %502 = vector.extract_strided_slice %470 {offsets = [6, 0], sizes = [16, 16], strides = [1, 1]} : vector<22x16xf32> to vector<16x16xf32>
    %503 = vector.broadcast %501 : f32 to vector<16x16xf32>
    %504 = arith.mulf %503, %502 : vector<16x16xf32>
    %505 = arith.addf %500, %504 : vector<16x16xf32>
    %506 = vector.extract_strided_slice %433 {offsets = [0, 2], sizes = [22, 16], strides = [1, 1]} : vector<22x22xf32> to vector<22x16xf32>
    %c51 = arith.constant 51 : index
    %507 = memref.load %arg2[%c51] : memref<98xf32, #tpu.memory_space<smem>>
    %508 = vector.extract_strided_slice %506 {offsets = [0, 0], sizes = [16, 16], strides = [1, 1]} : vector<22x16xf32> to vector<16x16xf32>
    %509 = vector.broadcast %507 : f32 to vector<16x16xf32>
    %510 = arith.mulf %509, %508 : vector<16x16xf32>
    %511 = arith.addf %505, %510 : vector<16x16xf32>
    %c58 = arith.constant 58 : index
    %512 = memref.load %arg2[%c58] : memref<98xf32, #tpu.memory_space<smem>>
    %513 = vector.extract_strided_slice %506 {offsets = [1, 0], sizes = [16, 16], strides = [1, 1]} : vector<22x16xf32> to vector<16x16xf32>
    %514 = vector.broadcast %512 : f32 to vector<16x16xf32>
    %515 = arith.mulf %514, %513 : vector<16x16xf32>
    %516 = arith.addf %511, %515 : vector<16x16xf32>
    %c65 = arith.constant 65 : index
    %517 = memref.load %arg2[%c65] : memref<98xf32, #tpu.memory_space<smem>>
    %518 = vector.extract_strided_slice %506 {offsets = [2, 0], sizes = [16, 16], strides = [1, 1]} : vector<22x16xf32> to vector<16x16xf32>
    %519 = vector.broadcast %517 : f32 to vector<16x16xf32>
    %520 = arith.mulf %519, %518 : vector<16x16xf32>
    %521 = arith.addf %516, %520 : vector<16x16xf32>
    %c72 = arith.constant 72 : index
    %522 = memref.load %arg2[%c72] : memref<98xf32, #tpu.memory_space<smem>>
    %523 = vector.extract_strided_slice %506 {offsets = [3, 0], sizes = [16, 16], strides = [1, 1]} : vector<22x16xf32> to vector<16x16xf32>
    %524 = vector.broadcast %522 : f32 to vector<16x16xf32>
    %525 = arith.mulf %524, %523 : vector<16x16xf32>
    %526 = arith.addf %521, %525 : vector<16x16xf32>
    %c79 = arith.constant 79 : index
    %527 = memref.load %arg2[%c79] : memref<98xf32, #tpu.memory_space<smem>>
    %528 = vector.extract_strided_slice %506 {offsets = [4, 0], sizes = [16, 16], strides = [1, 1]} : vector<22x16xf32> to vector<16x16xf32>
    %529 = vector.broadcast %527 : f32 to vector<16x16xf32>
    %530 = arith.mulf %529, %528 : vector<16x16xf32>
    %531 = arith.addf %526, %530 : vector<16x16xf32>
    %c86 = arith.constant 86 : index
    %532 = memref.load %arg2[%c86] : memref<98xf32, #tpu.memory_space<smem>>
    %533 = vector.extract_strided_slice %506 {offsets = [5, 0], sizes = [16, 16], strides = [1, 1]} : vector<22x16xf32> to vector<16x16xf32>
    %534 = vector.broadcast %532 : f32 to vector<16x16xf32>
    %535 = arith.mulf %534, %533 : vector<16x16xf32>
    %536 = arith.addf %531, %535 : vector<16x16xf32>
    %c93 = arith.constant 93 : index
    %537 = memref.load %arg2[%c93] : memref<98xf32, #tpu.memory_space<smem>>
    %538 = vector.extract_strided_slice %506 {offsets = [6, 0], sizes = [16, 16], strides = [1, 1]} : vector<22x16xf32> to vector<16x16xf32>
    %539 = vector.broadcast %537 : f32 to vector<16x16xf32>
    %540 = arith.mulf %539, %538 : vector<16x16xf32>
    %541 = arith.addf %536, %540 : vector<16x16xf32>
    %542 = vector.extract_strided_slice %433 {offsets = [0, 3], sizes = [22, 16], strides = [1, 1]} : vector<22x22xf32> to vector<22x16xf32>
    %c52 = arith.constant 52 : index
    %543 = memref.load %arg2[%c52] : memref<98xf32, #tpu.memory_space<smem>>
    %544 = vector.extract_strided_slice %542 {offsets = [0, 0], sizes = [16, 16], strides = [1, 1]} : vector<22x16xf32> to vector<16x16xf32>
    %545 = vector.broadcast %543 : f32 to vector<16x16xf32>
    %546 = arith.mulf %545, %544 : vector<16x16xf32>
    %547 = arith.addf %541, %546 : vector<16x16xf32>
    %c59 = arith.constant 59 : index
    %548 = memref.load %arg2[%c59] : memref<98xf32, #tpu.memory_space<smem>>
    %549 = vector.extract_strided_slice %542 {offsets = [1, 0], sizes = [16, 16], strides = [1, 1]} : vector<22x16xf32> to vector<16x16xf32>
    %550 = vector.broadcast %548 : f32 to vector<16x16xf32>
    %551 = arith.mulf %550, %549 : vector<16x16xf32>
    %552 = arith.addf %547, %551 : vector<16x16xf32>
    %c66 = arith.constant 66 : index
    %553 = memref.load %arg2[%c66] : memref<98xf32, #tpu.memory_space<smem>>
    %554 = vector.extract_strided_slice %542 {offsets = [2, 0], sizes = [16, 16], strides = [1, 1]} : vector<22x16xf32> to vector<16x16xf32>
    %555 = vector.broadcast %553 : f32 to vector<16x16xf32>
    %556 = arith.mulf %555, %554 : vector<16x16xf32>
    %557 = arith.addf %552, %556 : vector<16x16xf32>
    %c73 = arith.constant 73 : index
    %558 = memref.load %arg2[%c73] : memref<98xf32, #tpu.memory_space<smem>>
    %559 = vector.extract_strided_slice %542 {offsets = [3, 0], sizes = [16, 16], strides = [1, 1]} : vector<22x16xf32> to vector<16x16xf32>
    %560 = vector.broadcast %558 : f32 to vector<16x16xf32>
    %561 = arith.mulf %560, %559 : vector<16x16xf32>
    %562 = arith.addf %557, %561 : vector<16x16xf32>
    %c80 = arith.constant 80 : index
    %563 = memref.load %arg2[%c80] : memref<98xf32, #tpu.memory_space<smem>>
    %564 = vector.extract_strided_slice %542 {offsets = [4, 0], sizes = [16, 16], strides = [1, 1]} : vector<22x16xf32> to vector<16x16xf32>
    %565 = vector.broadcast %563 : f32 to vector<16x16xf32>
    %566 = arith.mulf %565, %564 : vector<16x16xf32>
    %567 = arith.addf %562, %566 : vector<16x16xf32>
    %c87 = arith.constant 87 : index
    %568 = memref.load %arg2[%c87] : memref<98xf32, #tpu.memory_space<smem>>
    %569 = vector.extract_strided_slice %542 {offsets = [5, 0], sizes = [16, 16], strides = [1, 1]} : vector<22x16xf32> to vector<16x16xf32>
    %570 = vector.broadcast %568 : f32 to vector<16x16xf32>
    %571 = arith.mulf %570, %569 : vector<16x16xf32>
    %572 = arith.addf %567, %571 : vector<16x16xf32>
    %c94 = arith.constant 94 : index
    %573 = memref.load %arg2[%c94] : memref<98xf32, #tpu.memory_space<smem>>
    %574 = vector.extract_strided_slice %542 {offsets = [6, 0], sizes = [16, 16], strides = [1, 1]} : vector<22x16xf32> to vector<16x16xf32>
    %575 = vector.broadcast %573 : f32 to vector<16x16xf32>
    %576 = arith.mulf %575, %574 : vector<16x16xf32>
    %577 = arith.addf %572, %576 : vector<16x16xf32>
    %578 = vector.extract_strided_slice %433 {offsets = [0, 4], sizes = [22, 16], strides = [1, 1]} : vector<22x22xf32> to vector<22x16xf32>
    %c53 = arith.constant 53 : index
    %579 = memref.load %arg2[%c53] : memref<98xf32, #tpu.memory_space<smem>>
    %580 = vector.extract_strided_slice %578 {offsets = [0, 0], sizes = [16, 16], strides = [1, 1]} : vector<22x16xf32> to vector<16x16xf32>
    %581 = vector.broadcast %579 : f32 to vector<16x16xf32>
    %582 = arith.mulf %581, %580 : vector<16x16xf32>
    %583 = arith.addf %577, %582 : vector<16x16xf32>
    %c60 = arith.constant 60 : index
    %584 = memref.load %arg2[%c60] : memref<98xf32, #tpu.memory_space<smem>>
    %585 = vector.extract_strided_slice %578 {offsets = [1, 0], sizes = [16, 16], strides = [1, 1]} : vector<22x16xf32> to vector<16x16xf32>
    %586 = vector.broadcast %584 : f32 to vector<16x16xf32>
    %587 = arith.mulf %586, %585 : vector<16x16xf32>
    %588 = arith.addf %583, %587 : vector<16x16xf32>
    %c67 = arith.constant 67 : index
    %589 = memref.load %arg2[%c67] : memref<98xf32, #tpu.memory_space<smem>>
    %590 = vector.extract_strided_slice %578 {offsets = [2, 0], sizes = [16, 16], strides = [1, 1]} : vector<22x16xf32> to vector<16x16xf32>
    %591 = vector.broadcast %589 : f32 to vector<16x16xf32>
    %592 = arith.mulf %591, %590 : vector<16x16xf32>
    %593 = arith.addf %588, %592 : vector<16x16xf32>
    %c74 = arith.constant 74 : index
    %594 = memref.load %arg2[%c74] : memref<98xf32, #tpu.memory_space<smem>>
    %595 = vector.extract_strided_slice %578 {offsets = [3, 0], sizes = [16, 16], strides = [1, 1]} : vector<22x16xf32> to vector<16x16xf32>
    %596 = vector.broadcast %594 : f32 to vector<16x16xf32>
    %597 = arith.mulf %596, %595 : vector<16x16xf32>
    %598 = arith.addf %593, %597 : vector<16x16xf32>
    %c81 = arith.constant 81 : index
    %599 = memref.load %arg2[%c81] : memref<98xf32, #tpu.memory_space<smem>>
    %600 = vector.extract_strided_slice %578 {offsets = [4, 0], sizes = [16, 16], strides = [1, 1]} : vector<22x16xf32> to vector<16x16xf32>
    %601 = vector.broadcast %599 : f32 to vector<16x16xf32>
    %602 = arith.mulf %601, %600 : vector<16x16xf32>
    %603 = arith.addf %598, %602 : vector<16x16xf32>
    %c88 = arith.constant 88 : index
    %604 = memref.load %arg2[%c88] : memref<98xf32, #tpu.memory_space<smem>>
    %605 = vector.extract_strided_slice %578 {offsets = [5, 0], sizes = [16, 16], strides = [1, 1]} : vector<22x16xf32> to vector<16x16xf32>
    %606 = vector.broadcast %604 : f32 to vector<16x16xf32>
    %607 = arith.mulf %606, %605 : vector<16x16xf32>
    %608 = arith.addf %603, %607 : vector<16x16xf32>
    %c95 = arith.constant 95 : index
    %609 = memref.load %arg2[%c95] : memref<98xf32, #tpu.memory_space<smem>>
    %610 = vector.extract_strided_slice %578 {offsets = [6, 0], sizes = [16, 16], strides = [1, 1]} : vector<22x16xf32> to vector<16x16xf32>
    %611 = vector.broadcast %609 : f32 to vector<16x16xf32>
    %612 = arith.mulf %611, %610 : vector<16x16xf32>
    %613 = arith.addf %608, %612 : vector<16x16xf32>
    %614 = vector.extract_strided_slice %433 {offsets = [0, 5], sizes = [22, 16], strides = [1, 1]} : vector<22x22xf32> to vector<22x16xf32>
    %c54 = arith.constant 54 : index
    %615 = memref.load %arg2[%c54] : memref<98xf32, #tpu.memory_space<smem>>
    %616 = vector.extract_strided_slice %614 {offsets = [0, 0], sizes = [16, 16], strides = [1, 1]} : vector<22x16xf32> to vector<16x16xf32>
    %617 = vector.broadcast %615 : f32 to vector<16x16xf32>
    %618 = arith.mulf %617, %616 : vector<16x16xf32>
    %619 = arith.addf %613, %618 : vector<16x16xf32>
    %c61 = arith.constant 61 : index
    %620 = memref.load %arg2[%c61] : memref<98xf32, #tpu.memory_space<smem>>
    %621 = vector.extract_strided_slice %614 {offsets = [1, 0], sizes = [16, 16], strides = [1, 1]} : vector<22x16xf32> to vector<16x16xf32>
    %622 = vector.broadcast %620 : f32 to vector<16x16xf32>
    %623 = arith.mulf %622, %621 : vector<16x16xf32>
    %624 = arith.addf %619, %623 : vector<16x16xf32>
    %c68 = arith.constant 68 : index
    %625 = memref.load %arg2[%c68] : memref<98xf32, #tpu.memory_space<smem>>
    %626 = vector.extract_strided_slice %614 {offsets = [2, 0], sizes = [16, 16], strides = [1, 1]} : vector<22x16xf32> to vector<16x16xf32>
    %627 = vector.broadcast %625 : f32 to vector<16x16xf32>
    %628 = arith.mulf %627, %626 : vector<16x16xf32>
    %629 = arith.addf %624, %628 : vector<16x16xf32>
    %c75 = arith.constant 75 : index
    %630 = memref.load %arg2[%c75] : memref<98xf32, #tpu.memory_space<smem>>
    %631 = vector.extract_strided_slice %614 {offsets = [3, 0], sizes = [16, 16], strides = [1, 1]} : vector<22x16xf32> to vector<16x16xf32>
    %632 = vector.broadcast %630 : f32 to vector<16x16xf32>
    %633 = arith.mulf %632, %631 : vector<16x16xf32>
    %634 = arith.addf %629, %633 : vector<16x16xf32>
    %c82 = arith.constant 82 : index
    %635 = memref.load %arg2[%c82] : memref<98xf32, #tpu.memory_space<smem>>
    %636 = vector.extract_strided_slice %614 {offsets = [4, 0], sizes = [16, 16], strides = [1, 1]} : vector<22x16xf32> to vector<16x16xf32>
    %637 = vector.broadcast %635 : f32 to vector<16x16xf32>
    %638 = arith.mulf %637, %636 : vector<16x16xf32>
    %639 = arith.addf %634, %638 : vector<16x16xf32>
    %c89 = arith.constant 89 : index
    %640 = memref.load %arg2[%c89] : memref<98xf32, #tpu.memory_space<smem>>
    %641 = vector.extract_strided_slice %614 {offsets = [5, 0], sizes = [16, 16], strides = [1, 1]} : vector<22x16xf32> to vector<16x16xf32>
    %642 = vector.broadcast %640 : f32 to vector<16x16xf32>
    %643 = arith.mulf %642, %641 : vector<16x16xf32>
    %644 = arith.addf %639, %643 : vector<16x16xf32>
    %c96 = arith.constant 96 : index
    %645 = memref.load %arg2[%c96] : memref<98xf32, #tpu.memory_space<smem>>
    %646 = vector.extract_strided_slice %614 {offsets = [6, 0], sizes = [16, 16], strides = [1, 1]} : vector<22x16xf32> to vector<16x16xf32>
    %647 = vector.broadcast %645 : f32 to vector<16x16xf32>
    %648 = arith.mulf %647, %646 : vector<16x16xf32>
    %649 = arith.addf %644, %648 : vector<16x16xf32>
    %650 = vector.extract_strided_slice %433 {offsets = [0, 6], sizes = [22, 16], strides = [1, 1]} : vector<22x22xf32> to vector<22x16xf32>
    %c55 = arith.constant 55 : index
    %651 = memref.load %arg2[%c55] : memref<98xf32, #tpu.memory_space<smem>>
    %652 = vector.extract_strided_slice %650 {offsets = [0, 0], sizes = [16, 16], strides = [1, 1]} : vector<22x16xf32> to vector<16x16xf32>
    %653 = vector.broadcast %651 : f32 to vector<16x16xf32>
    %654 = arith.mulf %653, %652 : vector<16x16xf32>
    %655 = arith.addf %649, %654 : vector<16x16xf32>
    %c62 = arith.constant 62 : index
    %656 = memref.load %arg2[%c62] : memref<98xf32, #tpu.memory_space<smem>>
    %657 = vector.extract_strided_slice %650 {offsets = [1, 0], sizes = [16, 16], strides = [1, 1]} : vector<22x16xf32> to vector<16x16xf32>
    %658 = vector.broadcast %656 : f32 to vector<16x16xf32>
    %659 = arith.mulf %658, %657 : vector<16x16xf32>
    %660 = arith.addf %655, %659 : vector<16x16xf32>
    %c69 = arith.constant 69 : index
    %661 = memref.load %arg2[%c69] : memref<98xf32, #tpu.memory_space<smem>>
    %662 = vector.extract_strided_slice %650 {offsets = [2, 0], sizes = [16, 16], strides = [1, 1]} : vector<22x16xf32> to vector<16x16xf32>
    %663 = vector.broadcast %661 : f32 to vector<16x16xf32>
    %664 = arith.mulf %663, %662 : vector<16x16xf32>
    %665 = arith.addf %660, %664 : vector<16x16xf32>
    %c76 = arith.constant 76 : index
    %666 = memref.load %arg2[%c76] : memref<98xf32, #tpu.memory_space<smem>>
    %667 = vector.extract_strided_slice %650 {offsets = [3, 0], sizes = [16, 16], strides = [1, 1]} : vector<22x16xf32> to vector<16x16xf32>
    %668 = vector.broadcast %666 : f32 to vector<16x16xf32>
    %669 = arith.mulf %668, %667 : vector<16x16xf32>
    %670 = arith.addf %665, %669 : vector<16x16xf32>
    %c83 = arith.constant 83 : index
    %671 = memref.load %arg2[%c83] : memref<98xf32, #tpu.memory_space<smem>>
    %672 = vector.extract_strided_slice %650 {offsets = [4, 0], sizes = [16, 16], strides = [1, 1]} : vector<22x16xf32> to vector<16x16xf32>
    %673 = vector.broadcast %671 : f32 to vector<16x16xf32>
    %674 = arith.mulf %673, %672 : vector<16x16xf32>
    %675 = arith.addf %670, %674 : vector<16x16xf32>
    %c90 = arith.constant 90 : index
    %676 = memref.load %arg2[%c90] : memref<98xf32, #tpu.memory_space<smem>>
    %677 = vector.extract_strided_slice %650 {offsets = [5, 0], sizes = [16, 16], strides = [1, 1]} : vector<22x16xf32> to vector<16x16xf32>
    %678 = vector.broadcast %676 : f32 to vector<16x16xf32>
    %679 = arith.mulf %678, %677 : vector<16x16xf32>
    %680 = arith.addf %675, %679 : vector<16x16xf32>
    %c97 = arith.constant 97 : index
    %681 = memref.load %arg2[%c97] : memref<98xf32, #tpu.memory_space<smem>>
    %682 = vector.extract_strided_slice %650 {offsets = [6, 0], sizes = [16, 16], strides = [1, 1]} : vector<22x16xf32> to vector<16x16xf32>
    %683 = vector.broadcast %681 : f32 to vector<16x16xf32>
    %684 = arith.mulf %683, %682 : vector<16x16xf32>
    %685 = arith.addf %680, %684 : vector<16x16xf32>
    %686 = arith.negf %685 : vector<16x16xf32>
    %687 = math.exp %686 : vector<16x16xf32>
    %cst_141 = arith.constant 1.000000e+00 : f32
    %688 = vector.broadcast %cst_141 : f32 to vector<16x16xf32>
    %689 = arith.addf %688, %687 : vector<16x16xf32>
    %690 = arith.divf %688, %689 : vector<16x16xf32>
    %691 = vector.extract_strided_slice %690 {offsets = [0, 0], sizes = [1, 16], strides = [1, 1]} : vector<16x16xf32> to vector<1x16xf32>
    %c0_142 = arith.constant 0 : index
    %c0_143 = arith.constant 0 : index
    %c0_144 = arith.constant 0 : index
    %692 = vector.load %arg6[%c0_142, %c0_143, %c0_144] : memref<1x1x256xf32, #tpu.memory_space<vmem>>, vector<1x1x16xf32>
    %693 = vector.shape_cast %692 : vector<1x1x16xf32> to vector<1x16xf32>
    %694 = vector.shape_cast %691 : vector<1x16xf32> to vector<1x1x16xf32>
    tpu.vector_store %arg6[%c0_142, %c0_143, %c0_144], %694 {strides = array<i32>} : memref<1x1x256xf32, #tpu.memory_space<vmem>>, vector<1x1x16xf32>,
    %695 = vector.extract_strided_slice %690 {offsets = [1, 0], sizes = [1, 16], strides = [1, 1]} : vector<16x16xf32> to vector<1x16xf32>
    %c0_145 = arith.constant 0 : index
    %c0_146 = arith.constant 0 : index
    %c16_147 = arith.constant 16 : index
    %696 = vector.load %arg6[%c0_145, %c0_146, %c16_147] : memref<1x1x256xf32, #tpu.memory_space<vmem>>, vector<1x1x16xf32>
    %697 = vector.shape_cast %696 : vector<1x1x16xf32> to vector<1x16xf32>
    %698 = vector.shape_cast %695 : vector<1x16xf32> to vector<1x1x16xf32>
    tpu.vector_store %arg6[%c0_145, %c0_146, %c16_147], %698 {strides = array<i32>} : memref<1x1x256xf32, #tpu.memory_space<vmem>>, vector<1x1x16xf32>,
    %699 = vector.extract_strided_slice %690 {offsets = [2, 0], sizes = [1, 16], strides = [1, 1]} : vector<16x16xf32> to vector<1x16xf32>
    %c0_148 = arith.constant 0 : index
    %c0_149 = arith.constant 0 : index
    %c32_150 = arith.constant 32 : index
    %700 = vector.load %arg6[%c0_148, %c0_149, %c32_150] : memref<1x1x256xf32, #tpu.memory_space<vmem>>, vector<1x1x16xf32>
    %701 = vector.shape_cast %700 : vector<1x1x16xf32> to vector<1x16xf32>
    %702 = vector.shape_cast %699 : vector<1x16xf32> to vector<1x1x16xf32>
    tpu.vector_store %arg6[%c0_148, %c0_149, %c32_150], %702 {strides = array<i32>} : memref<1x1x256xf32, #tpu.memory_space<vmem>>, vector<1x1x16xf32>,
    %703 = vector.extract_strided_slice %690 {offsets = [3, 0], sizes = [1, 16], strides = [1, 1]} : vector<16x16xf32> to vector<1x16xf32>
    %c0_151 = arith.constant 0 : index
    %c0_152 = arith.constant 0 : index
    %c48_153 = arith.constant 48 : index
    %704 = vector.load %arg6[%c0_151, %c0_152, %c48_153] : memref<1x1x256xf32, #tpu.memory_space<vmem>>, vector<1x1x16xf32>
    %705 = vector.shape_cast %704 : vector<1x1x16xf32> to vector<1x16xf32>
    %706 = vector.shape_cast %703 : vector<1x16xf32> to vector<1x1x16xf32>
    tpu.vector_store %arg6[%c0_151, %c0_152, %c48_153], %706 {strides = array<i32>} : memref<1x1x256xf32, #tpu.memory_space<vmem>>, vector<1x1x16xf32>,
    %707 = vector.extract_strided_slice %690 {offsets = [4, 0], sizes = [1, 16], strides = [1, 1]} : vector<16x16xf32> to vector<1x16xf32>
    %c0_154 = arith.constant 0 : index
    %c0_155 = arith.constant 0 : index
    %c64_156 = arith.constant 64 : index
    %708 = vector.load %arg6[%c0_154, %c0_155, %c64_156] : memref<1x1x256xf32, #tpu.memory_space<vmem>>, vector<1x1x16xf32>
    %709 = vector.shape_cast %708 : vector<1x1x16xf32> to vector<1x16xf32>
    %710 = vector.shape_cast %707 : vector<1x16xf32> to vector<1x1x16xf32>
    tpu.vector_store %arg6[%c0_154, %c0_155, %c64_156], %710 {strides = array<i32>} : memref<1x1x256xf32, #tpu.memory_space<vmem>>, vector<1x1x16xf32>,
    %711 = vector.extract_strided_slice %690 {offsets = [5, 0], sizes = [1, 16], strides = [1, 1]} : vector<16x16xf32> to vector<1x16xf32>
    %c0_157 = arith.constant 0 : index
    %c0_158 = arith.constant 0 : index
    %c80_159 = arith.constant 80 : index
    %712 = vector.load %arg6[%c0_157, %c0_158, %c80_159] : memref<1x1x256xf32, #tpu.memory_space<vmem>>, vector<1x1x16xf32>
    %713 = vector.shape_cast %712 : vector<1x1x16xf32> to vector<1x16xf32>
    %714 = vector.shape_cast %711 : vector<1x16xf32> to vector<1x1x16xf32>
    tpu.vector_store %arg6[%c0_157, %c0_158, %c80_159], %714 {strides = array<i32>} : memref<1x1x256xf32, #tpu.memory_space<vmem>>, vector<1x1x16xf32>,
    %715 = vector.extract_strided_slice %690 {offsets = [6, 0], sizes = [1, 16], strides = [1, 1]} : vector<16x16xf32> to vector<1x16xf32>
    %c0_160 = arith.constant 0 : index
    %c0_161 = arith.constant 0 : index
    %c96_162 = arith.constant 96 : index
    %716 = vector.load %arg6[%c0_160, %c0_161, %c96_162] : memref<1x1x256xf32, #tpu.memory_space<vmem>>, vector<1x1x16xf32>
    %717 = vector.shape_cast %716 : vector<1x1x16xf32> to vector<1x16xf32>
    %718 = vector.shape_cast %715 : vector<1x16xf32> to vector<1x1x16xf32>
    tpu.vector_store %arg6[%c0_160, %c0_161, %c96_162], %718 {strides = array<i32>} : memref<1x1x256xf32, #tpu.memory_space<vmem>>, vector<1x1x16xf32>,
    %719 = vector.extract_strided_slice %690 {offsets = [7, 0], sizes = [1, 16], strides = [1, 1]} : vector<16x16xf32> to vector<1x16xf32>
    %c0_163 = arith.constant 0 : index
    %c0_164 = arith.constant 0 : index
    %c112 = arith.constant 112 : index
    %720 = vector.load %arg6[%c0_163, %c0_164, %c112] : memref<1x1x256xf32, #tpu.memory_space<vmem>>, vector<1x1x16xf32>
    %721 = vector.shape_cast %720 : vector<1x1x16xf32> to vector<1x16xf32>
    %722 = vector.shape_cast %719 : vector<1x16xf32> to vector<1x1x16xf32>
    tpu.vector_store %arg6[%c0_163, %c0_164, %c112], %722 {strides = array<i32>} : memref<1x1x256xf32, #tpu.memory_space<vmem>>, vector<1x1x16xf32>,
    %723 = vector.extract_strided_slice %690 {offsets = [8, 0], sizes = [1, 16], strides = [1, 1]} : vector<16x16xf32> to vector<1x16xf32>
    %c0_165 = arith.constant 0 : index
    %c0_166 = arith.constant 0 : index
    %c128 = arith.constant 128 : index
    %724 = vector.load %arg6[%c0_165, %c0_166, %c128] : memref<1x1x256xf32, #tpu.memory_space<vmem>>, vector<1x1x16xf32>
    %725 = vector.shape_cast %724 : vector<1x1x16xf32> to vector<1x16xf32>
    %726 = vector.shape_cast %723 : vector<1x16xf32> to vector<1x1x16xf32>
    tpu.vector_store %arg6[%c0_165, %c0_166, %c128], %726 {strides = array<i32>} : memref<1x1x256xf32, #tpu.memory_space<vmem>>, vector<1x1x16xf32>,
    %727 = vector.extract_strided_slice %690 {offsets = [9, 0], sizes = [1, 16], strides = [1, 1]} : vector<16x16xf32> to vector<1x16xf32>
    %c0_167 = arith.constant 0 : index
    %c0_168 = arith.constant 0 : index
    %c144 = arith.constant 144 : index
    %728 = vector.load %arg6[%c0_167, %c0_168, %c144] : memref<1x1x256xf32, #tpu.memory_space<vmem>>, vector<1x1x16xf32>
    %729 = vector.shape_cast %728 : vector<1x1x16xf32> to vector<1x16xf32>
    %730 = vector.shape_cast %727 : vector<1x16xf32> to vector<1x1x16xf32>
    tpu.vector_store %arg6[%c0_167, %c0_168, %c144], %730 {strides = array<i32>} : memref<1x1x256xf32, #tpu.memory_space<vmem>>, vector<1x1x16xf32>,
    %731 = vector.extract_strided_slice %690 {offsets = [10, 0], sizes = [1, 16], strides = [1, 1]} : vector<16x16xf32> to vector<1x16xf32>
    %c0_169 = arith.constant 0 : index
    %c0_170 = arith.constant 0 : index
    %c160 = arith.constant 160 : index
    %732 = vector.load %arg6[%c0_169, %c0_170, %c160] : memref<1x1x256xf32, #tpu.memory_space<vmem>>, vector<1x1x16xf32>
    %733 = vector.shape_cast %732 : vector<1x1x16xf32> to vector<1x16xf32>
    %734 = vector.shape_cast %731 : vector<1x16xf32> to vector<1x1x16xf32>
    tpu.vector_store %arg6[%c0_169, %c0_170, %c160], %734 {strides = array<i32>} : memref<1x1x256xf32, #tpu.memory_space<vmem>>, vector<1x1x16xf32>,
    %735 = vector.extract_strided_slice %690 {offsets = [11, 0], sizes = [1, 16], strides = [1, 1]} : vector<16x16xf32> to vector<1x16xf32>
    %c0_171 = arith.constant 0 : index
    %c0_172 = arith.constant 0 : index
    %c176 = arith.constant 176 : index
    %736 = vector.load %arg6[%c0_171, %c0_172, %c176] : memref<1x1x256xf32, #tpu.memory_space<vmem>>, vector<1x1x16xf32>
    %737 = vector.shape_cast %736 : vector<1x1x16xf32> to vector<1x16xf32>
    %738 = vector.shape_cast %735 : vector<1x16xf32> to vector<1x1x16xf32>
    tpu.vector_store %arg6[%c0_171, %c0_172, %c176], %738 {strides = array<i32>} : memref<1x1x256xf32, #tpu.memory_space<vmem>>, vector<1x1x16xf32>,
    %739 = vector.extract_strided_slice %690 {offsets = [12, 0], sizes = [1, 16], strides = [1, 1]} : vector<16x16xf32> to vector<1x16xf32>
    %c0_173 = arith.constant 0 : index
    %c0_174 = arith.constant 0 : index
    %c192 = arith.constant 192 : index
    %740 = vector.load %arg6[%c0_173, %c0_174, %c192] : memref<1x1x256xf32, #tpu.memory_space<vmem>>, vector<1x1x16xf32>
    %741 = vector.shape_cast %740 : vector<1x1x16xf32> to vector<1x16xf32>
    %742 = vector.shape_cast %739 : vector<1x16xf32> to vector<1x1x16xf32>
    tpu.vector_store %arg6[%c0_173, %c0_174, %c192], %742 {strides = array<i32>} : memref<1x1x256xf32, #tpu.memory_space<vmem>>, vector<1x1x16xf32>,
    %743 = vector.extract_strided_slice %690 {offsets = [13, 0], sizes = [1, 16], strides = [1, 1]} : vector<16x16xf32> to vector<1x16xf32>
    %c0_175 = arith.constant 0 : index
    %c0_176 = arith.constant 0 : index
    %c208 = arith.constant 208 : index
    %744 = vector.load %arg6[%c0_175, %c0_176, %c208] : memref<1x1x256xf32, #tpu.memory_space<vmem>>, vector<1x1x16xf32>
    %745 = vector.shape_cast %744 : vector<1x1x16xf32> to vector<1x16xf32>
    %746 = vector.shape_cast %743 : vector<1x16xf32> to vector<1x1x16xf32>
    tpu.vector_store %arg6[%c0_175, %c0_176, %c208], %746 {strides = array<i32>} : memref<1x1x256xf32, #tpu.memory_space<vmem>>, vector<1x1x16xf32>,
    %747 = vector.extract_strided_slice %690 {offsets = [14, 0], sizes = [1, 16], strides = [1, 1]} : vector<16x16xf32> to vector<1x16xf32>
    %c0_177 = arith.constant 0 : index
    %c0_178 = arith.constant 0 : index
    %c224 = arith.constant 224 : index
    %748 = vector.load %arg6[%c0_177, %c0_178, %c224] : memref<1x1x256xf32, #tpu.memory_space<vmem>>, vector<1x1x16xf32>
    %749 = vector.shape_cast %748 : vector<1x1x16xf32> to vector<1x16xf32>
    %750 = vector.shape_cast %747 : vector<1x16xf32> to vector<1x1x16xf32>
    tpu.vector_store %arg6[%c0_177, %c0_178, %c224], %750 {strides = array<i32>} : memref<1x1x256xf32, #tpu.memory_space<vmem>>, vector<1x1x16xf32>,
    %751 = vector.extract_strided_slice %690 {offsets = [15, 0], sizes = [1, 16], strides = [1, 1]} : vector<16x16xf32> to vector<1x16xf32>
    %c0_179 = arith.constant 0 : index
    %c0_180 = arith.constant 0 : index
    %c240 = arith.constant 240 : index
    %752 = vector.load %arg6[%c0_179, %c0_180, %c240] : memref<1x1x256xf32, #tpu.memory_space<vmem>>, vector<1x1x16xf32>
    %753 = vector.shape_cast %752 : vector<1x1x16xf32> to vector<1x16xf32>
    %754 = vector.shape_cast %751 : vector<1x16xf32> to vector<1x1x16xf32>
    tpu.vector_store %arg6[%c0_179, %c0_180, %c240], %754 {strides = array<i32>} : memref<1x1x256xf32, #tpu.memory_space<vmem>>, vector<1x1x16xf32>,
    %c0_181 = arith.constant 0 : index
    %c0_182 = arith.constant 0 : index
    %c0_183 = arith.constant 0 : index
    %755 = vector.load %arg1[%c0_181, %c0_182, %c0_183] : memref<1x4x256xf32, #tpu.memory_space<vmem>>, vector<1x4x256xf32>
    %c0_184 = arith.constant 0 : index
    %c0_185 = arith.constant 0 : index
    %c0_186 = arith.constant 0 : index
    %756 = vector.load %arg6[%c0_184, %c0_185, %c0_186] : memref<1x1x256xf32, #tpu.memory_space<vmem>>, vector<1x1x256xf32>
    %757 = vector.broadcast %756 : vector<1x1x256xf32> to vector<1x4x256xf32>
    %758 = arith.mulf %755, %757 : vector<1x4x256xf32>
    %c0_187 = arith.constant 0 : index
    %c0_188 = arith.constant 0 : index
    %c0_189 = arith.constant 0 : index
    %759 = vector.load %arg4[%c0_187, %c0_188, %c0_189] : memref<1x4x256xf32, #tpu.memory_space<vmem>>, vector<1x4x256xf32>
    tpu.vector_store %arg4[%c0_187, %c0_188, %c0_189], %758 {strides = array<i32>} : memref<1x4x256xf32, #tpu.memory_space<vmem>>, vector<1x4x256xf32>,
    return
  }
  func.func @transform_0(%arg0: i32) -> (i32, i32, i32) {
    %c0_i32 = arith.constant 0 : i32
    %c0_i32_0 = arith.constant 0 : i32
    %c0_i32_1 = arith.constant 0 : i32
    return %arg0, %c0_i32, %c0_i32_0 : i32, i32, i32
  }
  func.func @transform_1(%arg0: i32) -> i32 {
    %c0_i32 = arith.constant 0 : i32
    %c0_i32_0 = arith.constant 0 : i32
    return %c0_i32 : i32
  }
  func.func @transform_2(%arg0: i32) -> i32 {
    %c0_i32 = arith.constant 0 : i32
    %c0_i32_0 = arith.constant 0 : i32
    return %c0_i32 : i32
  }
  func.func @transform_3(%arg0: i32) -> (i32, i32, i32) {
    %c0_i32 = arith.constant 0 : i32
    %c0_i32_0 = arith.constant 0 : i32
    %c0_i32_1 = arith.constant 0 : i32
    return %arg0, %c0_i32, %c0_i32_0 : i32, i32, i32
  }
}

</mosaic_0001>

<llo_original>
// kernel: tpu_custom_call.1
$region0: #{tpu_custom_call.1}
  #allocation0 [shape = 'u32[]', space=smem, size = 0x4, offset = 0x4, fixed_abs, tag = 'smem constant byte address 0x4 - core index']
  #allocation1 [shape = 'u32[72,128]{1,0:T(1,128)}', space=vmem, size = 0x9000, scoped, tag = 'internal scratch']
  #allocation2 [shape = 'f32[2,22,22]{2,1,0:T(8,128)}', space=vmem, size = 0x6000, scoped, tag = 'scratch operand']
  #allocation3 [shape = 'f32[1,1,256]{2,1,0:T(1,128)}', space=vmem, size = 0x400, scoped, tag = 'scratch operand']
  #allocation4 [shape = 'f32[1]{0:T(128)S(6)}', space=smem, size = 0x200, scoped, tag = 'scoped memory for tpu_custom_call.1']
  %s0 = inlined_call_operand.hbm [shape: f32[2,4,256], index: 0, kind: input, shape index: {}]
  %s1 = inlined_call_operand.vmem [shape: f32[98], index: 1, kind: input, shape index: {}]
  %s2 = inlined_call_operand.<no memory space> [shape: f32[1], index: 2, kind: input, shape index: {}]
  %s3 = inlined_call_operand.hbm [shape: f32[2,4,256], index: 3, kind: output, shape index: {}]
  %s4 = sld [smem:[#allocation0]]
  $region53: #{tpu_custom_call.1} parent=0
    _
  %s6 = ssub.s32 1, %s4
  %s7 = scalar_select 0, %s6, %s4
  %8 = sst [smem:[#allocation4]] %s2
  $region1: #{tpu_custom_call.1} parent=0
    #allocation5 [shape = 'u8[8192]{0}', space=vmem, size = 0x2000, scoped, tag = 'input window, operand 0']
    #allocation6 [shape = 's32[2]{0}', space=sflag, size = 0x8, scoped, tag = 'scoped memory for tpu_custom_call.1']
    #allocation7 [shape = 's32[2]{0}', space=sflag, size = 0x8, scoped, tag = 'scoped memory for tpu_custom_call.1']
    #allocation8 [shape = 's32[2]{0}', space=sflag, size = 0x8, scoped, tag = 'scoped memory for tpu_custom_call.1']
    #allocation9 [shape = 'u8[512]{0}', space=smem, size = 0x200, scoped, tag = 'input window, operand 1, single buffered']
    #allocation10 [shape = 'u8[8192]{0}', space=vmem, size = 0x2000, scoped, tag = 'output window, operand 0']
    %9 = vsyncpa [#allocation6], 0
    %s10 = scalar_lea.sflag [#allocation6], 1
    %11 = vsyncpa %s10, 0
    %12 = vsyncpa [#allocation8], 0
    %13 = vsyncpa [#allocation7], 0
    %s14 = scalar_lea.sflag [#allocation7], 1
    %15 = vsyncpa %s14, 0
    loop: start=0, step=1, limit=4
    $region2: #{tpu_custom_call.1} parent=1 // loop_pre_header
      _
    $region3: #{tpu_custom_call.1} parent=1 // loop_header
      %s17 = sphi 0, %s21
      %p18 = scmp.ge.s32.totalorder %s17, 4
      %s27 = sphi 0, %s29
      %s30 = sphi 0, %s27
      %s31 = sphi 0, %s30
      %s47 = sphi 0, %s31
      %s51 = sphi 0, %s51
      %s53 = sphi 0, %s51
      %s54 = sphi 0, %s53
      %s68 = sphi 0, %s54
      %s72 = sphi 0, %s72
      %s74 = sphi 0, %s72
      %s75 = sphi 0, %s74
      %s89 = sphi 0, %s75
      %s95 = sphi 0, %s97
      %s98 = sphi 0, %s95
      %s99 = sphi 0, %s98
      %s115 = sphi 0, %s99
    $region4: #{tpu_custom_call.1} parent=1 // loop_header_branch
      %20 = sbr.rel (%p18) target = $region8
    $region5: #{tpu_custom_call.1} parent=1 // loop_body
      %s22 = ssub.s32 %s17, 1
      %s23 = ssub.s32 %s17, 2
      %s24 = sadd.s32 %s17, 1
      %s25 = ssub.s32 %s17, %s24
      %p26 = scmp.eq.s32.totalorder %s25, 0
      %s28 = sadd.s32 %s27, 1
      %s29 = scalar_select %p26, %s27, %s28
      %p32 = pneg %p26
      %p33 = scmp.eq.s32.totalorder %s17, 1
      %p34 = por %p32, %p33
      %p35 = scmp.ne.s32.totalorder %s27, %s30
      %p36 = scmp.eq.s32.totalorder %s17, 0
      %p37 = por %p35, %p36
      %p38 = scmp.ne.s32.totalorder %s27, %s30
      %p39 = scmp.eq.s32.totalorder %s22, 1
      %p40 = por %p38, %p39
      %p41 = scmp.ne.s32.totalorder %s30, %s31
      %p42 = scmp.eq.s32.totalorder %s22, 0
      %p43 = por %p41, %p42
      %p44 = scmp.ne.s32.totalorder %s30, %s31
      %p45 = scmp.eq.s32.totalorder %s23, 1
      %p46 = por %p44, %p45
      %p48 = scmp.ne.s32.totalorder %s31, %s47
      %p49 = scmp.eq.s32.totalorder %s23, 0
      %p50 = por %p48, %p49
      %s52 = sadd.s32 %s51, 1
      %p55 = scmp.eq.s32.totalorder %s17, 1
      %p56 = scmp.ne.s32.totalorder %s51, %s53
      %p57 = scmp.eq.s32.totalorder %s17, 0
      %p58 = por %p56, %p57
      %p59 = scmp.ne.s32.totalorder %s51, %s53
      %p60 = scmp.eq.s32.totalorder %s22, 1
      %p61 = por %p59, %p60
      %p62 = scmp.ne.s32.totalorder %s53, %s54
      %p63 = scmp.eq.s32.totalorder %s22, 0
      %p64 = por %p62, %p63
      %p65 = scmp.ne.s32.totalorder %s53, %s54
      %p66 = scmp.eq.s32.totalorder %s23, 1
      %p67 = por %p65, %p66
      %p69 = scmp.ne.s32.totalorder %s54, %s68
      %p70 = scmp.eq.s32.totalorder %s23, 0
      %p71 = por %p69, %p70
      %s73 = sadd.s32 %s72, 1
      %p76 = scmp.eq.s32.totalorder %s17, 1
      %p77 = scmp.ne.s32.totalorder %s72, %s74
      %p78 = scmp.eq.s32.totalorder %s17, 0
      %p79 = por %p77, %p78
      %p80 = scmp.ne.s32.totalorder %s72, %s74
      %p81 = scmp.eq.s32.totalorder %s22, 1
      %p82 = por %p80, %p81
      %p83 = scmp.ne.s32.totalorder %s74, %s75
      %p84 = scmp.eq.s32.totalorder %s22, 0
      %p85 = por %p83, %p84
      %p86 = scmp.ne.s32.totalorder %s74, %s75
      %p87 = scmp.eq.s32.totalorder %s23, 1
      %p88 = por %p86, %p87
      %p90 = scmp.ne.s32.totalorder %s75, %s89
      %p91 = scmp.eq.s32.totalorder %s23, 0
      %p92 = por %p90, %p91
      %s93 = ssub.s32 %s17, %s24
      %p94 = scmp.eq.s32.totalorder %s93, 0
      %s96 = sadd.s32 %s95, 1
      %s97 = scalar_select %p94, %s95, %s96
      %p100 = pneg %p94
      %p101 = scmp.eq.s32.totalorder %s17, 1
      %p102 = por %p100, %p101
      %p103 = scmp.ne.s32.totalorder %s95, %s98
      %p104 = scmp.eq.s32.totalorder %s17, 0
      %p105 = por %p103, %p104
      %p106 = scmp.ne.s32.totalorder %s95, %s98
      %p107 = scmp.eq.s32.totalorder %s22, 1
      %p108 = por %p106, %p107
      %p109 = scmp.ne.s32.totalorder %s98, %s99
      %p110 = scmp.eq.s32.totalorder %s22, 0
      %p111 = por %p109, %p110
      %p112 = scmp.ne.s32.totalorder %s98, %s99
      %p113 = scmp.eq.s32.totalorder %s23, 1
      %p114 = por %p112, %p113
      %p116 = scmp.ne.s32.totalorder %s99, %s115
      %p117 = scmp.eq.s32.totalorder %s23, 0
      %p118 = por %p116, %p117
      %p119 = scmp.le.s32.totalorder 1, %s17
      %p120 = scmp.lt.s32.totalorder %s17, 3
      %p121 = pnand %p119, %p120
      %p122 = pneg %p121
      // Predicated region
      $region9: #{tpu_custom_call.1} parent=5 // pred_check
        _
      $region10: #{tpu_custom_call.1} parent=5 // pred_check_branch
        %124 = sbr.rel (%p121) target = $region12
      $region11: #{tpu_custom_call.1} parent=5 // pred_region
        %s125 = ssub.s32 %s17, 1
        // Predicated region
        $region13: #{tpu_custom_call.1} parent=11 // pred_check
          %p126 = pneg %p64
        $region14: #{tpu_custom_call.1} parent=11 // pred_check_branch
          %128 = sbr.rel (%p126) target = $region16
        $region15: #{tpu_custom_call.1} parent=11 // pred_region
          %130 = vsyncadd [#allocation8], 0
          %s132 = sshll.u32 %s1, 4
          %s133 = int_to_ptr.vmem [resolvable:$true] %s132
          %135 = dma.vmem_to_smem %s133, 16, [#allocation9], [#allocation8]
        $region16: #{tpu_custom_call.1} parent=11 // pred_fallthru
          _
        // Predicated region
        $region17: #{tpu_custom_call.1} parent=11 // pred_check
          %p136 = pneg %p85
        $region18: #{tpu_custom_call.1} parent=11 // pred_check_branch
          %138 = sbr.rel (%p136) target = $region20
        $region19: #{tpu_custom_call.1} parent=11 // pred_region
          _
        $region20: #{tpu_custom_call.1} parent=11 // pred_fallthru
          _
      $region12: #{tpu_custom_call.1} parent=5 // pred_fallthru
        _
      %p139 = scmp.lt.s32.totalorder %s17, 2
      // Predicated region
      $region21: #{tpu_custom_call.1} parent=5 // pred_check
        %p140 = pneg %p139
      $region22: #{tpu_custom_call.1} parent=5 // pred_check_branch
        %142 = sbr.rel (%p140) target = $region24
      $region23: #{tpu_custom_call.1} parent=5 // pred_region
        // Predicated region
        $region25: #{tpu_custom_call.1} parent=23 // pred_check
          %p143 = pneg %p37
        $region26: #{tpu_custom_call.1} parent=23 // pred_check_branch
          %145 = sbr.rel (%p143) target = $region28
        $region27: #{tpu_custom_call.1} parent=23 // pred_region
          %s146 = sand.u32 %s27, 1
          %s147 = scalar_lea.sflag [#allocation6], %s146
          %s148 = sand.u32 %s27, 1
          %s149 = smul.addr %s148, 8
          %s150 = scalar_lea.vmem [#allocation5], %s149
          %152 = vsyncadd %s147, 0
          %s153 = smul.addr %s17, 2
          %s154 = smul.addr %s153, 4
          %s155 = scalar_lea.hbm %s0, %s154
          %s157 = sshll.u32 %s155, 4
          %s158 = int_to_ptr.hbm [resolvable:$true] %s157
          %s159 = sshll.u32 %s150, 4
          %s160 = int_to_ptr.vmem [resolvable:$true] %s159
          %162 = dma.hbm_to_vmem [thread:$0]  %s158, 128, %s160, %s147
        $region28: #{tpu_custom_call.1} parent=23 // pred_fallthru
          _
      $region24: #{tpu_custom_call.1} parent=5 // pred_fallthru
        _
      %p163 = scmp.le.s32.totalorder 1, %s17
      %p164 = scmp.lt.s32.totalorder %s17, 3
      %p165 = pnand %p163, %p164
      %p166 = pneg %p165
      // Predicated region
      $region29: #{tpu_custom_call.1} parent=5 // pred_check
        _
      $region30: #{tpu_custom_call.1} parent=5 // pred_check_branch
        %168 = sbr.rel (%p165) target = $region32
      $region31: #{tpu_custom_call.1} parent=5 // pred_region
        %s169 = ssub.s32 %s17, 1
        %s170 = sand.u32 %s30, 1
        %s171 = scalar_lea.sflag [#allocation6], %s170
        %s172 = sand.u32 %s30, 1
        %s173 = smul.addr %s172, 8
        %s174 = scalar_lea.vmem [#allocation5], %s173
        // Predicated region
        $region33: #{tpu_custom_call.1} parent=31 // pred_check
          %p175 = pneg %p43
        $region34: #{tpu_custom_call.1} parent=31 // pred_check_branch
          %177 = sbr.rel (%p175) target = $region36
        $region35: #{tpu_custom_call.1} parent=31 // pred_region
          %179 = dma.done %s171, 128
        $region36: #{tpu_custom_call.1} parent=31 // pred_fallthru
          _
        // Predicated region
        $region37: #{tpu_custom_call.1} parent=31 // pred_check
          %p180 = pneg %p64
        $region38: #{tpu_custom_call.1} parent=31 // pred_check_branch
          %182 = sbr.rel (%p180) target = $region40
        $region39: #{tpu_custom_call.1} parent=31 // pred_region
          %184 = dma.done [#allocation8], 16
        $region40: #{tpu_custom_call.1} parent=31 // pred_fallthru
          _
        %185 = sfence
        %s186 = sand.u32 %s30, 1
        %s187 = scalar_lea.sflag [#allocation6], %s186
        %s188 = sand.u32 %s30, 1
        %s189 = smul.addr %s188, 8
        %s190 = scalar_lea.vmem [#allocation5], %s189
        %p191 = pneg %p43
        %p192 = pneg %p40
        %p193 = pneg %p64
        %p194 = pneg %p61
        %p195 = pneg %p85
        %p196 = pneg %p82
        %p197 = pneg %p111
        %p198 = pneg %p108
        %s199 = sand.u32 %s98, 1
        %s200 = scalar_lea.sflag [#allocation7], %s199
        %s201 = sand.u32 %s98, 1
        %s202 = smul.addr %s201, 8
        %s203 = scalar_lea.vmem [#allocation10], %s202
        %s204 = smul.u32 0, 2
        %s205 = smul.addr %s204, 4
        %s206 = scalar_lea.vmem %s174, %s205 [#allocation5]
        %v207 = vld [vmem:[%s206] sm:$0xff]
        %209 = vst [vmem:[#allocation1] ss:$2 sm:$0xff] %v207
        %v210 = vld.sshfl [vmem:[#allocation1] sm:$0xff pattern:$0x75316420]
        %v211 = vld.sshfl [vmem:[#allocation1 + $0x8] sm:$0xff pattern:$0x75316420]
        %vm214 = vcmask 1043456
        %v215 = vsel %vm214, %v210, -inf
        %v216 = vrot.slane %v215, 4
        %v217 = vmax.f32 %v215, %v216
        %v218 = vrot.slane %v217, 2
        %v219 = vmax.f32 %v217, %v218
        %v220 = vrot.slane %v219, 1
        %v221 = vmax.f32 %v219, %v220
        %v222 = vsel %vm214, %v211, -inf
        %v223 = vrot.slane %v222, 4
        %v224 = vmax.f32 %v222, %v223
        %v225 = vrot.slane %v224, 2
        %v226 = vmax.f32 %v224, %v225
        %v227 = vrot.slane %v226, 1
        %v228 = vmax.f32 %v226, %v227
        %229 = vst [vmem:[#allocation1] ss:$2 sm:$0xff] %v207
        %v230 = vld.sshfl [vmem:[#allocation1] sm:$0xff pattern:$0x75316420]
        %v231 = vld.sshfl [vmem:[#allocation1 + $0x8] sm:$0xff pattern:$0x75316420]
        %v234 = vsel %vm214, %v230, 0.0
        %v235 = vrot.slane %v234, 4
        %v236 = vadd.f32 %v234, %v235
        %v237 = vrot.slane %v236, 2
        %v238 = vadd.f32 %v236, %v237
        %v239 = vrot.slane %v238, 1
        %v240 = vadd.f32 %v238, %v239
        %v241 = vsel %vm214, %v231, 0.0
        %v242 = vrot.slane %v241, 4
        %v243 = vadd.f32 %v241, %v242
        %v244 = vrot.slane %v243, 2
        %v245 = vadd.f32 %v243, %v244
        %v246 = vrot.slane %v245, 1
        %v247 = vadd.f32 %v245, %v246
        %v248 = vadd.f32 %v240, 0.0
        %v249 = vadd.f32 %v247, 0.0
        %v250 = vmul.f32 %v248, 0.25
        %v251 = vmul.f32 %v249, 0.25
        %vm252 = vcmask 1040384
        %v253 = vsel %vm252, %v221, %v250
        %v254 = vsel %vm252, %v228, %v251
        %vm255 = vcmask 174080
        %256 = vst.msk [vmem:[#allocation2] sm:$0x7] %vm255, 0.0
        %257 = vst.msk [vmem:[#allocation2 + $0x13] sm:$0x7] %vm255, 0.0
        %vm258 = vcmask 23552
        %259 = vst.msk [vmem:[#allocation2 + $0x3] sm:$0xff] %vm258, 0.0
        %260 = vst.msk [vmem:[#allocation2 + $0xb] sm:$0xff] %vm258, 0.0
        %vm261 = vcmask 179352
        %262 = vst.msk [vmem:[#allocation2 + $0x3] sm:$0xff] %vm261, 0.0
        %263 = vst.msk [vmem:[#allocation2 + $0xb] sm:$0xff] %vm261, 0.0
        %s264 = scalar_lea.vmem [#allocation2], 24
        %265 = vst.msk [vmem:[%s264] sm:$0x7] %vm255, 0.0
        %266 = vst.msk [vmem:[%s264 + $0x13] sm:$0x7] %vm255, 0.0
        %267 = vst.msk [vmem:[%s264 + $0x3] sm:$0xff] %vm258, 0.0
        %268 = vst.msk [vmem:[%s264 + $0xb] sm:$0xff] %vm258, 0.0
        %269 = vst.msk [vmem:[%s264 + $0x3] sm:$0xff] %vm261, 0.0
        %270 = vst.msk [vmem:[%s264 + $0xb] sm:$0xff] %vm261, 0.0
        %272 = vrot.lane.b32.xlu0 %v253, 3
        %v273 = vpop.permute.xlu0 %272
        %vm275 = vcmask 147480
        %276 = vst.msk [vmem:[#allocation2 + $0x3] sm:$0x1] %vm275, %v273
        %vm277 = vcmask 148505
        %278 = vst.msk [vmem:[%s264 + $0x2] sm:$0x2] %vm277, %v273
        %279 = vrot.lane.b32.xlu0 %v253, 115
        %v280 = vpop.permute.xlu0 %279
        %282 = vst.msk [vmem:[#allocation2 + $0x4] sm:$0x1] %vm275, %v280
        %283 = vst.msk [vmem:[%s264 + $0x3] sm:$0x2] %vm277, %v280
        %284 = vrot.lane.b32.xlu0 %v253, 99
        %v285 = vpop.permute.xlu0 %284
        %287 = vst.msk [vmem:[#allocation2 + $0x5] sm:$0x1] %vm275, %v285
        %288 = vst.msk [vmem:[%s264 + $0x4] sm:$0x2] %vm277, %v285
        %289 = vrot.lane.b32.xlu0 %v253, 83
        %v290 = vpop.permute.xlu0 %289
        %292 = vst.msk [vmem:[#allocation2 + $0x6] sm:$0x1] %vm275, %v290
        %293 = vst.msk [vmem:[%s264 + $0x5] sm:$0x2] %vm277, %v290
        %294 = vrot.lane.b32.xlu0 %v253, 67
        %v295 = vpop.permute.xlu0 %294
        %297 = vst.msk [vmem:[#allocation2 + $0x7] sm:$0x1] %vm275, %v295
        %298 = vst.msk [vmem:[%s264 + $0x6] sm:$0x2] %vm277, %v295
        %299 = vrot.lane.b32.xlu0 %v253, 51
        %v300 = vpop.permute.xlu0 %299
        %302 = vst.msk [vmem:[#allocation2 + $0x8] sm:$0x1] %vm275, %v300
        %303 = vst.msk [vmem:[%s264 + $0x7] sm:$0x2] %vm277, %v300
        %304 = vrot.lane.b32.xlu0 %v253, 35
        %v305 = vpop.permute.xlu0 %304
        %307 = vst.msk [vmem:[#allocation2 + $0x9] sm:$0x1] %vm275, %v305
        %308 = vst.msk [vmem:[%s264 + $0x8] sm:$0x2] %vm277, %v305
        %309 = vrot.lane.b32.xlu0 %v253, 19
        %v310 = vpop.permute.xlu0 %309
        %312 = vst.msk [vmem:[#allocation2 + $0xa] sm:$0x1] %vm275, %v310
        %313 = vst.msk [vmem:[%s264 + $0x9] sm:$0x2] %vm277, %v310
        %315 = vrot.lane.b32.xlu0 %v254, 3
        %v316 = vpop.permute.xlu0 %315
        %318 = vst.msk [vmem:[#allocation2 + $0xb] sm:$0x1] %vm275, %v316
        %319 = vst.msk [vmem:[%s264 + $0xa] sm:$0x2] %vm277, %v316
        %320 = vrot.lane.b32.xlu0 %v254, 115
        %v321 = vpop.permute.xlu0 %320
        %323 = vst.msk [vmem:[#allocation2 + $0xc] sm:$0x1] %vm275, %v321
        %324 = vst.msk [vmem:[%s264 + $0xb] sm:$0x2] %vm277, %v321
        %325 = vrot.lane.b32.xlu0 %v254, 99
        %v326 = vpop.permute.xlu0 %325
        %328 = vst.msk [vmem:[#allocation2 + $0xd] sm:$0x1] %vm275, %v326
        %329 = vst.msk [vmem:[%s264 + $0xc] sm:$0x2] %vm277, %v326
        %330 = vrot.lane.b32.xlu0 %v254, 83
        %v331 = vpop.permute.xlu0 %330
        %333 = vst.msk [vmem:[#allocation2 + $0xe] sm:$0x1] %vm275, %v331
        %334 = vst.msk [vmem:[%s264 + $0xd] sm:$0x2] %vm277, %v331
        %335 = vrot.lane.b32.xlu0 %v254, 67
        %v336 = vpop.permute.xlu0 %335
        %338 = vst.msk [vmem:[#allocation2 + $0xf] sm:$0x1] %vm275, %v336
        %339 = vst.msk [vmem:[%s264 + $0xe] sm:$0x2] %vm277, %v336
        %340 = vrot.lane.b32.xlu0 %v254, 51
        %v341 = vpop.permute.xlu0 %340
        %343 = vst.msk [vmem:[#allocation2 + $0x10] sm:$0x1] %vm275, %v341
        %344 = vst.msk [vmem:[%s264 + $0xf] sm:$0x2] %vm277, %v341
        %345 = vrot.lane.b32.xlu0 %v254, 35
        %v346 = vpop.permute.xlu0 %345
        %348 = vst.msk [vmem:[#allocation2 + $0x11] sm:$0x1] %vm275, %v346
        %349 = vst.msk [vmem:[%s264 + $0x10] sm:$0x2] %vm277, %v346
        %350 = vrot.lane.b32.xlu0 %v254, 19
        %v351 = vpop.permute.xlu0 %350
        %353 = vst.msk [vmem:[#allocation2 + $0x12] sm:$0x1] %vm275, %v351
        %354 = vst.msk [vmem:[%s264 + $0x11] sm:$0x2] %vm277, %v351
        %s355 = sld [smem:[#allocation4]]
        %v356 = vstv %s355
        %v357 = vld [vmem:[#allocation2] sm:$0xff]
        %v358 = vld [vmem:[#allocation2 + $0x8] sm:$0xff]
        %v359 = vld [vmem:[#allocation2 + $0x10] sm:$0x3f]
        %s360 = sld [smem:[#allocation9]]
        %v361 = vstv %s360
        %v362 = vmul.f32 %v361, %v357
        %v363 = vmul.f32 %v361, %v358
        %v364 = vadd.f32 %v356, %v362
        %v365 = vadd.f32 %v356, %v363
        %s366 = sld [smem:[#allocation9 + $0x7]]
        %v367 = vstv %s366
        %v368 = vmul.f32 %v367, %v357
        %v369 = vmul.f32 %v367, %v358
        %v370 = vmul.f32 %v367, %v359
        %vm374 = vcmask 1046528
        %v375 = vrot.slane %v368, 1
        %v376 = vrot.slane %v369, 1
        %v377 = vsel %vm374, %v375, %v376
        %v378 = vrot.slane %v370, 1
        %v379 = vsel %vm374, %v376, %v378
        %v382 = vadd.f32 %v364, %v377
        %v383 = vadd.f32 %v365, %v379
        %s384 = sld [smem:[#allocation9 + $0xe]]
        %v385 = vstv %s384
        %v386 = vmul.f32 %v385, %v357
        %v387 = vmul.f32 %v385, %v358
        %v388 = vmul.f32 %v385, %v359
        %vm392 = vcmask 1045504
        %v393 = vrot.slane %v386, 2
        %v394 = vrot.slane %v387, 2
        %v395 = vsel %vm392, %v393, %v394
        %v396 = vrot.slane %v388, 2
        %v397 = vsel %vm392, %v394, %v396
        %v400 = vadd.f32 %v382, %v395
        %v401 = vadd.f32 %v383, %v397
        %s402 = sld [smem:[#allocation9 + $0x15]]
        %v403 = vstv %s402
        %v404 = vmul.f32 %v403, %v357
        %v405 = vmul.f32 %v403, %v358
        %v406 = vmul.f32 %v403, %v359
        %vm410 = vcmask 1044480
        %v411 = vrot.slane %v404, 3
        %v412 = vrot.slane %v405, 3
        %v413 = vsel %vm410, %v411, %v412
        %v414 = vrot.slane %v406, 3
        %v415 = vsel %vm410, %v412, %v414
        %v418 = vadd.f32 %v400, %v413
        %v419 = vadd.f32 %v401, %v415
        %s420 = sld [smem:[#allocation9 + $0x1c]]
        %v421 = vstv %s420
        %v422 = vmul.f32 %v421, %v357
        %v423 = vmul.f32 %v421, %v358
        %v424 = vmul.f32 %v421, %v359
        %v428 = vrot.slane %v422, 4
        %v429 = vrot.slane %v423, 4
        %v430 = vsel %vm214, %v428, %v429
        %v431 = vrot.slane %v424, 4
        %v432 = vsel %vm214, %v429, %v431
        %v435 = vadd.f32 %v418, %v430
        %v436 = vadd.f32 %v419, %v432
        %s437 = sld [smem:[#allocation9 + $0x23]]
        %v438 = vstv %s437
        %v439 = vmul.f32 %v438, %v357
        %v440 = vmul.f32 %v438, %v358
        %v441 = vmul.f32 %v438, %v359
        %vm445 = vcmask 1042432
        %v446 = vrot.slane %v439, 5
        %v447 = vrot.slane %v440, 5
        %v448 = vsel %vm445, %v446, %v447
        %v449 = vrot.slane %v441, 5
        %v450 = vsel %vm445, %v447, %v449
        %v453 = vadd.f32 %v435, %v448
        %v454 = vadd.f32 %v436, %v450
        %s455 = sld [smem:[#allocation9 + $0x2a]]
        %v456 = vstv %s455
        %v457 = vmul.f32 %v456, %v357
        %v458 = vmul.f32 %v456, %v358
        %v459 = vmul.f32 %v456, %v359
        %vm463 = vcmask 1041408
        %v464 = vrot.slane %v457, 6
        %v465 = vrot.slane %v458, 6
        %v466 = vsel %vm463, %v464, %v465
        %v467 = vrot.slane %v459, 6
        %v468 = vsel %vm463, %v465, %v467
        %v471 = vadd.f32 %v453, %v466
        %v472 = vadd.f32 %v454, %v468
        %s473 = sld [smem:[#allocation9 + $0x1]]
        %v474 = vstv %s473
        %v475 = vmul.f32 %v474, %v357
        %v476 = vmul.f32 %v474, %v358
        %479 = vrot.lane.b32.xlu0 %v475, 127
        %v480 = vpop.permute.xlu0 %479
        %481 = vrot.lane.b32.xlu0 %v476, 127
        %v482 = vpop.permute.xlu0 %481
        %v485 = vadd.f32 %v471, %v480
        %v486 = vadd.f32 %v472, %v482
        %s487 = sld [smem:[#allocation9 + $0x8]]
        %v488 = vstv %s487
        %v489 = vmul.f32 %v488, %v357
        %v490 = vmul.f32 %v488, %v358
        %v491 = vmul.f32 %v488, %v359
        %v495 = vrot.slane %v489, 1
        %v496 = vrot.slane %v490, 1
        %v497 = vsel %vm374, %v495, %v496
        %v498 = vrot.slane %v491, 1
        %v499 = vsel %vm374, %v496, %v498
        %500 = vrot.lane.b32.xlu0 %v497, 127
        %v501 = vpop.permute.xlu0 %500
        %502 = vrot.lane.b32.xlu0 %v499, 127
        %v503 = vpop.permute.xlu0 %502
        %v506 = vadd.f32 %v485, %v501
        %v507 = vadd.f32 %v486, %v503
        %s508 = sld [smem:[#allocation9 + $0xf]]
        %v509 = vstv %s508
        %v510 = vmul.f32 %v509, %v357
        %v511 = vmul.f32 %v509, %v358
        %v512 = vmul.f32 %v509, %v359
        %v516 = vrot.slane %v510, 2
        %v517 = vrot.slane %v511, 2
        %v518 = vsel %vm392, %v516, %v517
        %v519 = vrot.slane %v512, 2
        %v520 = vsel %vm392, %v517, %v519
        %521 = vrot.lane.b32.xlu0 %v518, 127
        %v522 = vpop.permute.xlu0 %521
        %523 = vrot.lane.b32.xlu0 %v520, 127
        %v524 = vpop.permute.xlu0 %523
        %v527 = vadd.f32 %v506, %v522
        %v528 = vadd.f32 %v507, %v524
        %s529 = sld [smem:[#allocation9 + $0x16]]
        %v530 = vstv %s529
        %v531 = vmul.f32 %v530, %v357
        %v532 = vmul.f32 %v530, %v358
        %v533 = vmul.f32 %v530, %v359
        %v537 = vrot.slane %v531, 3
        %v538 = vrot.slane %v532, 3
        %v539 = vsel %vm410, %v537, %v538
        %v540 = vrot.slane %v533, 3
        %v541 = vsel %vm410, %v538, %v540
        %542 = vrot.lane.b32.xlu0 %v539, 127
        %v543 = vpop.permute.xlu0 %542
        %544 = vrot.lane.b32.xlu0 %v541, 127
        %v545 = vpop.permute.xlu0 %544
        %v548 = vadd.f32 %v527, %v543
        %v549 = vadd.f32 %v528, %v545
        %s550 = sld [smem:[#allocation9 + $0x1d]]
        %v551 = vstv %s550
        %v552 = vmul.f32 %v551, %v357
        %v553 = vmul.f32 %v551, %v358
        %v554 = vmul.f32 %v551, %v359
        %v558 = vrot.slane %v552, 4
        %v559 = vrot.slane %v553, 4
        %v560 = vsel %vm214, %v558, %v559
        %v561 = vrot.slane %v554, 4
        %v562 = vsel %vm214, %v559, %v561
        %563 = vrot.lane.b32.xlu0 %v560, 127
        %v564 = vpop.permute.xlu0 %563
        %565 = vrot.lane.b32.xlu0 %v562, 127
        %v566 = vpop.permute.xlu0 %565
        %v569 = vadd.f32 %v548, %v564
        %v570 = vadd.f32 %v549, %v566
        %s571 = sld [smem:[#allocation9 + $0x24]]
        %v572 = vstv %s571
        %v573 = vmul.f32 %v572, %v357
        %v574 = vmul.f32 %v572, %v358
        %v575 = vmul.f32 %v572, %v359
        %v579 = vrot.slane %v573, 5
        %v580 = vrot.slane %v574, 5
        %v581 = vsel %vm445, %v579, %v580
        %v582 = vrot.slane %v575, 5
        %v583 = vsel %vm445, %v580, %v582
        %584 = vrot.lane.b32.xlu0 %v581, 127
        %v585 = vpop.permute.xlu0 %584
        %586 = vrot.lane.b32.xlu0 %v583, 127
        %v587 = vpop.permute.xlu0 %586
        %v590 = vadd.f32 %v569, %v585
        %v591 = vadd.f32 %v570, %v587
        %s592 = sld [smem:[#allocation9 + $0x2b]]
        %v593 = vstv %s592
        %v594 = vmul.f32 %v593, %v357
        %v595 = vmul.f32 %v593, %v358
        %v596 = vmul.f32 %v593, %v359
        %v600 = vrot.slane %v594, 6
        %v601 = vrot.slane %v595, 6
        %v602 = vsel %vm463, %v600, %v601
        %v603 = vrot.slane %v596, 6
        %v604 = vsel %vm463, %v601, %v603
        %605 = vrot.lane.b32.xlu0 %v602, 127
        %v606 = vpop.permute.xlu0 %605
        %607 = vrot.lane.b32.xlu0 %v604, 127
        %v608 = vpop.permute.xlu0 %607
        %v611 = vadd.f32 %v590, %v606
        %v612 = vadd.f32 %v591, %v608
        %s613 = sld [smem:[#allocation9 + $0x2]]
        %v614 = vstv %s613
        %v615 = vmul.f32 %v614, %v357
        %v616 = vmul.f32 %v614, %v358
        %619 = vrot.lane.b32.xlu0 %v615, 126
        %v620 = vpop.permute.xlu0 %619
        %621 = vrot.lane.b32.xlu0 %v616, 126
        %v622 = vpop.permute.xlu0 %621
        %v625 = vadd.f32 %v611, %v620
        %v626 = vadd.f32 %v612, %v622
        %s627 = sld [smem:[#allocation9 + $0x9]]
        %v628 = vstv %s627
        %v629 = vmul.f32 %v628, %v357
        %v630 = vmul.f32 %v628, %v358
        %v631 = vmul.f32 %v628, %v359
        %v635 = vrot.slane %v629, 1
        %v636 = vrot.slane %v630, 1
        %v637 = vsel %vm374, %v635, %v636
        %v638 = vrot.slane %v631, 1
        %v639 = vsel %vm374, %v636, %v638
        %640 = vrot.lane.b32.xlu0 %v637, 126
        %v641 = vpop.permute.xlu0 %640
        %642 = vrot.lane.b32.xlu0 %v639, 126
        %v643 = vpop.permute.xlu0 %642
        %v646 = vadd.f32 %v625, %v641
        %v647 = vadd.f32 %v626, %v643
        %s648 = sld [smem:[#allocation9 + $0x10]]
        %v649 = vstv %s648
        %v650 = vmul.f32 %v649, %v357
        %v651 = vmul.f32 %v649, %v358
        %v652 = vmul.f32 %v649, %v359
        %v656 = vrot.slane %v650, 2
        %v657 = vrot.slane %v651, 2
        %v658 = vsel %vm392, %v656, %v657
        %v659 = vrot.slane %v652, 2
        %v660 = vsel %vm392, %v657, %v659
        %661 = vrot.lane.b32.xlu0 %v658, 126
        %v662 = vpop.permute.xlu0 %661
        %663 = vrot.lane.b32.xlu0 %v660, 126
        %v664 = vpop.permute.xlu0 %663
        %v667 = vadd.f32 %v646, %v662
        %v668 = vadd.f32 %v647, %v664
        %s669 = sld [smem:[#allocation9 + $0x17]]
        %v670 = vstv %s669
        %v671 = vmul.f32 %v670, %v357
        %v672 = vmul.f32 %v670, %v358
        %v673 = vmul.f32 %v670, %v359
        %v677 = vrot.slane %v671, 3
        %v678 = vrot.slane %v672, 3
        %v679 = vsel %vm410, %v677, %v678
        %v680 = vrot.slane %v673, 3
        %v681 = vsel %vm410, %v678, %v680
        %682 = vrot.lane.b32.xlu0 %v679, 126
        %v683 = vpop.permute.xlu0 %682
        %684 = vrot.lane.b32.xlu0 %v681, 126
        %v685 = vpop.permute.xlu0 %684
        %v688 = vadd.f32 %v667, %v683
        %v689 = vadd.f32 %v668, %v685
        %s690 = sld [smem:[#allocation9 + $0x1e]]
        %v691 = vstv %s690
        %v692 = vmul.f32 %v691, %v357
        %v693 = vmul.f32 %v691, %v358
        %v694 = vmul.f32 %v691, %v359
        %v698 = vrot.slane %v692, 4
        %v699 = vrot.slane %v693, 4
        %v700 = vsel %vm214, %v698, %v699
        %v701 = vrot.slane %v694, 4
        %v702 = vsel %vm214, %v699, %v701
        %703 = vrot.lane.b32.xlu0 %v700, 126
        %v704 = vpop.permute.xlu0 %703
        %705 = vrot.lane.b32.xlu0 %v702, 126
        %v706 = vpop.permute.xlu0 %705
        %v709 = vadd.f32 %v688, %v704
        %v710 = vadd.f32 %v689, %v706
        %s711 = sld [smem:[#allocation9 + $0x25]]
        %v712 = vstv %s711
        %v713 = vmul.f32 %v712, %v357
        %v714 = vmul.f32 %v712, %v358
        %v715 = vmul.f32 %v712, %v359
        %v719 = vrot.slane %v713, 5
        %v720 = vrot.slane %v714, 5
        %v721 = vsel %vm445, %v719, %v720
        %v722 = vrot.slane %v715, 5
        %v723 = vsel %vm445, %v720, %v722
        %724 = vrot.lane.b32.xlu0 %v721, 126
        %v725 = vpop.permute.xlu0 %724
        %726 = vrot.lane.b32.xlu0 %v723, 126
        %v727 = vpop.permute.xlu0 %726
        %v730 = vadd.f32 %v709, %v725
        %v731 = vadd.f32 %v710, %v727
        %s732 = sld [smem:[#allocation9 + $0x2c]]
        %v733 = vstv %s732
        %v734 = vmul.f32 %v733, %v357
        %v735 = vmul.f32 %v733, %v358
        %v736 = vmul.f32 %v733, %v359
        %v740 = vrot.slane %v734, 6
        %v741 = vrot.slane %v735, 6
        %v742 = vsel %vm463, %v740, %v741
        %v743 = vrot.slane %v736, 6
        %v744 = vsel %vm463, %v741, %v743
        %745 = vrot.lane.b32.xlu0 %v742, 126
        %v746 = vpop.permute.xlu0 %745
        %747 = vrot.lane.b32.xlu0 %v744, 126
        %v748 = vpop.permute.xlu0 %747
        %v751 = vadd.f32 %v730, %v746
        %v752 = vadd.f32 %v731, %v748
        %s753 = sld [smem:[#allocation9 + $0x3]]
        %v754 = vstv %s753
        %v755 = vmul.f32 %v754, %v357
        %v756 = vmul.f32 %v754, %v358
        %759 = vrot.lane.b32.xlu0 %v755, 125
        %v760 = vpop.permute.xlu0 %759
        %761 = vrot.lane.b32.xlu0 %v756, 125
        %v762 = vpop.permute.xlu0 %761
        %v765 = vadd.f32 %v751, %v760
        %v766 = vadd.f32 %v752, %v762
        %s767 = sld [smem:[#allocation9 + $0xa]]
        %v768 = vstv %s767
        %v769 = vmul.f32 %v768, %v357
        %v770 = vmul.f32 %v768, %v358
        %v771 = vmul.f32 %v768, %v359
        %v775 = vrot.slane %v769, 1
        %v776 = vrot.slane %v770, 1
        %v777 = vsel %vm374, %v775, %v776
        %v778 = vrot.slane %v771, 1
        %v779 = vsel %vm374, %v776, %v778
        %780 = vrot.lane.b32.xlu0 %v777, 125
        %v781 = vpop.permute.xlu0 %780
        %782 = vrot.lane.b32.xlu0 %v779, 125
        %v783 = vpop.permute.xlu0 %782
        %v786 = vadd.f32 %v765, %v781
        %v787 = vadd.f32 %v766, %v783
        %s788 = sld [smem:[#allocation9 + $0x11]]
        %v789 = vstv %s788
        %v790 = vmul.f32 %v789, %v357
        %v791 = vmul.f32 %v789, %v358
        %v792 = vmul.f32 %v789, %v359
        %v796 = vrot.slane %v790, 2
        %v797 = vrot.slane %v791, 2
        %v798 = vsel %vm392, %v796, %v797
        %v799 = vrot.slane %v792, 2
        %v800 = vsel %vm392, %v797, %v799
        %801 = vrot.lane.b32.xlu0 %v798, 125
        %v802 = vpop.permute.xlu0 %801
        %803 = vrot.lane.b32.xlu0 %v800, 125
        %v804 = vpop.permute.xlu0 %803
        %v807 = vadd.f32 %v786, %v802
        %v808 = vadd.f32 %v787, %v804
        %s809 = sld [smem:[#allocation9 + $0x18]]
        %v810 = vstv %s809
        %v811 = vmul.f32 %v810, %v357
        %v812 = vmul.f32 %v810, %v358
        %v813 = vmul.f32 %v810, %v359
        %v817 = vrot.slane %v811, 3
        %v818 = vrot.slane %v812, 3
        %v819 = vsel %vm410, %v817, %v818
        %v820 = vrot.slane %v813, 3
        %v821 = vsel %vm410, %v818, %v820
        %822 = vrot.lane.b32.xlu0 %v819, 125
        %v823 = vpop.permute.xlu0 %822
        %824 = vrot.lane.b32.xlu0 %v821, 125
        %v825 = vpop.permute.xlu0 %824
        %v828 = vadd.f32 %v807, %v823
        %v829 = vadd.f32 %v808, %v825
        %s830 = sld [smem:[#allocation9 + $0x1f]]
        %v831 = vstv %s830
        %v832 = vmul.f32 %v831, %v357
        %v833 = vmul.f32 %v831, %v358
        %v834 = vmul.f32 %v831, %v359
        %v838 = vrot.slane %v832, 4
        %v839 = vrot.slane %v833, 4
        %v840 = vsel %vm214, %v838, %v839
        %v841 = vrot.slane %v834, 4
        %v842 = vsel %vm214, %v839, %v841
        %843 = vrot.lane.b32.xlu0 %v840, 125
        %v844 = vpop.permute.xlu0 %843
        %845 = vrot.lane.b32.xlu0 %v842, 125
        %v846 = vpop.permute.xlu0 %845
        %v849 = vadd.f32 %v828, %v844
        %v850 = vadd.f32 %v829, %v846
        %s851 = sld [smem:[#allocation9 + $0x26]]
        %v852 = vstv %s851
        %v853 = vmul.f32 %v852, %v357
        %v854 = vmul.f32 %v852, %v358
        %v855 = vmul.f32 %v852, %v359
        %v859 = vrot.slane %v853, 5
        %v860 = vrot.slane %v854, 5
        %v861 = vsel %vm445, %v859, %v860
        %v862 = vrot.slane %v855, 5
        %v863 = vsel %vm445, %v860, %v862
        %864 = vrot.lane.b32.xlu0 %v861, 125
        %v865 = vpop.permute.xlu0 %864
        %866 = vrot.lane.b32.xlu0 %v863, 125
        %v867 = vpop.permute.xlu0 %866
        %v870 = vadd.f32 %v849, %v865
        %v871 = vadd.f32 %v850, %v867
        %s872 = sld [smem:[#allocation9 + $0x2d]]
        %v873 = vstv %s872
        %v874 = vmul.f32 %v873, %v357
        %v875 = vmul.f32 %v873, %v358
        %v876 = vmul.f32 %v873, %v359
        %v880 = vrot.slane %v874, 6
        %v881 = vrot.slane %v875, 6
        %v882 = vsel %vm463, %v880, %v881
        %v883 = vrot.slane %v876, 6
        %v884 = vsel %vm463, %v881, %v883
        %885 = vrot.lane.b32.xlu0 %v882, 125
        %v886 = vpop.permute.xlu0 %885
        %887 = vrot.lane.b32.xlu0 %v884, 125
        %v888 = vpop.permute.xlu0 %887
        %v891 = vadd.f32 %v870, %v886
        %v892 = vadd.f32 %v871, %v888
        %s893 = sld [smem:[#allocation9 + $0x4]]
        %v894 = vstv %s893
        %v895 = vmul.f32 %v894, %v357
        %v896 = vmul.f32 %v894, %v358
        %899 = vrot.lane.b32.xlu0 %v895, 124
        %v900 = vpop.permute.xlu0 %899
        %901 = vrot.lane.b32.xlu0 %v896, 124
        %v902 = vpop.permute.xlu0 %901
        %v905 = vadd.f32 %v891, %v900
        %v906 = vadd.f32 %v892, %v902
        %s907 = sld [smem:[#allocation9 + $0xb]]
        %v908 = vstv %s907
        %v909 = vmul.f32 %v908, %v357
        %v910 = vmul.f32 %v908, %v358
        %v911 = vmul.f32 %v908, %v359
        %v915 = vrot.slane %v909, 1
        %v916 = vrot.slane %v910, 1
        %v917 = vsel %vm374, %v915, %v916
        %v918 = vrot.slane %v911, 1
        %v919 = vsel %vm374, %v916, %v918
        %920 = vrot.lane.b32.xlu0 %v917, 124
        %v921 = vpop.permute.xlu0 %920
        %922 = vrot.lane.b32.xlu0 %v919, 124
        %v923 = vpop.permute.xlu0 %922
        %v926 = vadd.f32 %v905, %v921
        %v927 = vadd.f32 %v906, %v923
        %s928 = sld [smem:[#allocation9 + $0x12]]
        %v929 = vstv %s928
        %v930 = vmul.f32 %v929, %v357
        %v931 = vmul.f32 %v929, %v358
        %v932 = vmul.f32 %v929, %v359
        %v936 = vrot.slane %v930, 2
        %v937 = vrot.slane %v931, 2
        %v938 = vsel %vm392, %v936, %v937
        %v939 = vrot.slane %v932, 2
        %v940 = vsel %vm392, %v937, %v939
        %941 = vrot.lane.b32.xlu0 %v938, 124
        %v942 = vpop.permute.xlu0 %941
        %943 = vrot.lane.b32.xlu0 %v940, 124
        %v944 = vpop.permute.xlu0 %943
        %v947 = vadd.f32 %v926, %v942
        %v948 = vadd.f32 %v927, %v944
        %s949 = sld [smem:[#allocation9 + $0x19]]
        %v950 = vstv %s949
        %v951 = vmul.f32 %v950, %v357
        %v952 = vmul.f32 %v950, %v358
        %v953 = vmul.f32 %v950, %v359
        %v957 = vrot.slane %v951, 3
        %v958 = vrot.slane %v952, 3
        %v959 = vsel %vm410, %v957, %v958
        %v960 = vrot.slane %v953, 3
        %v961 = vsel %vm410, %v958, %v960
        %962 = vrot.lane.b32.xlu0 %v959, 124
        %v963 = vpop.permute.xlu0 %962
        %964 = vrot.lane.b32.xlu0 %v961, 124
        %v965 = vpop.permute.xlu0 %964
        %v968 = vadd.f32 %v947, %v963
        %v969 = vadd.f32 %v948, %v965
        %s970 = sld [smem:[#allocation9 + $0x20]]
        %v971 = vstv %s970
        %v972 = vmul.f32 %v971, %v357
        %v973 = vmul.f32 %v971, %v358
        %v974 = vmul.f32 %v971, %v359
        %v978 = vrot.slane %v972, 4
        %v979 = vrot.slane %v973, 4
        %v980 = vsel %vm214, %v978, %v979
        %v981 = vrot.slane %v974, 4
        %v982 = vsel %vm214, %v979, %v981
        %983 = vrot.lane.b32.xlu0 %v980, 124
        %v984 = vpop.permute.xlu0 %983
        %985 = vrot.lane.b32.xlu0 %v982, 124
        %v986 = vpop.permute.xlu0 %985
        %v989 = vadd.f32 %v968, %v984
        %v990 = vadd.f32 %v969, %v986
        %s991 = sld [smem:[#allocation9 + $0x27]]
        %v992 = vstv %s991
        %v993 = vmul.f32 %v992, %v357
        %v994 = vmul.f32 %v992, %v358
        %v995 = vmul.f32 %v992, %v359
        %v999 = vrot.slane %v993, 5
        %v1000 = vrot.slane %v994, 5
        %v1001 = vsel %vm445, %v999, %v1000
        %v1002 = vrot.slane %v995, 5
        %v1003 = vsel %vm445, %v1000, %v1002
        %1004 = vrot.lane.b32.xlu0 %v1001, 124
        %v1005 = vpop.permute.xlu0 %1004
        %1006 = vrot.lane.b32.xlu0 %v1003, 124
        %v1007 = vpop.permute.xlu0 %1006
        %v1010 = vadd.f32 %v989, %v1005
        %v1011 = vadd.f32 %v990, %v1007
        %s1012 = sld [smem:[#allocation9 + $0x2e]]
        %v1013 = vstv %s1012
        %v1014 = vmul.f32 %v1013, %v357
        %v1015 = vmul.f32 %v1013, %v358
        %v1016 = vmul.f32 %v1013, %v359
        %v1020 = vrot.slane %v1014, 6
        %v1021 = vrot.slane %v1015, 6
        %v1022 = vsel %vm463, %v1020, %v1021
        %v1023 = vrot.slane %v1016, 6
        %v1024 = vsel %vm463, %v1021, %v1023
        %1025 = vrot.lane.b32.xlu0 %v1022, 124
        %v1026 = vpop.permute.xlu0 %1025
        %1027 = vrot.lane.b32.xlu0 %v1024, 124
        %v1028 = vpop.permute.xlu0 %1027
        %v1031 = vadd.f32 %v1010, %v1026
        %v1032 = vadd.f32 %v1011, %v1028
        %s1033 = sld [smem:[#allocation9 + $0x5]]
        %v1034 = vstv %s1033
        %v1035 = vmul.f32 %v1034, %v357
        %v1036 = vmul.f32 %v1034, %v358
        %1039 = vrot.lane.b32.xlu0 %v1035, 123
        %v1040 = vpop.permute.xlu0 %1039
        %1041 = vrot.lane.b32.xlu0 %v1036, 123
        %v1042 = vpop.permute.xlu0 %1041
        %v1045 = vadd.f32 %v1031, %v1040
        %v1046 = vadd.f32 %v1032, %v1042
        %s1047 = sld [smem:[#allocation9 + $0xc]]
        %v1048 = vstv %s1047
        %v1049 = vmul.f32 %v1048, %v357
        %v1050 = vmul.f32 %v1048, %v358
        %v1051 = vmul.f32 %v1048, %v359
        %v1055 = vrot.slane %v1049, 1
        %v1056 = vrot.slane %v1050, 1
        %v1057 = vsel %vm374, %v1055, %v1056
        %v1058 = vrot.slane %v1051, 1
        %v1059 = vsel %vm374, %v1056, %v1058
        %1060 = vrot.lane.b32.xlu0 %v1057, 123
        %v1061 = vpop.permute.xlu0 %1060
        %1062 = vrot.lane.b32.xlu0 %v1059, 123
        %v1063 = vpop.permute.xlu0 %1062
        %v1066 = vadd.f32 %v1045, %v1061
        %v1067 = vadd.f32 %v1046, %v1063
        %s1068 = sld [smem:[#allocation9 + $0x13]]
        %v1069 = vstv %s1068
        %v1070 = vmul.f32 %v1069, %v357
        %v1071 = vmul.f32 %v1069, %v358
        %v1072 = vmul.f32 %v1069, %v359
        %v1076 = vrot.slane %v1070, 2
        %v1077 = vrot.slane %v1071, 2
        %v1078 = vsel %vm392, %v1076, %v1077
        %v1079 = vrot.slane %v1072, 2
        %v1080 = vsel %vm392, %v1077, %v1079
        %1081 = vrot.lane.b32.xlu0 %v1078, 123
        %v1082 = vpop.permute.xlu0 %1081
        %1083 = vrot.lane.b32.xlu0 %v1080, 123
        %v1084 = vpop.permute.xlu0 %1083
        %v1087 = vadd.f32 %v1066, %v1082
        %v1088 = vadd.f32 %v1067, %v1084
        %s1089 = sld [smem:[#allocation9 + $0x1a]]
        %v1090 = vstv %s1089
        %v1091 = vmul.f32 %v1090, %v357
        %v1092 = vmul.f32 %v1090, %v358
        %v1093 = vmul.f32 %v1090, %v359
        %v1097 = vrot.slane %v1091, 3
        %v1098 = vrot.slane %v1092, 3
        %v1099 = vsel %vm410, %v1097, %v1098
        %v1100 = vrot.slane %v1093, 3
        %v1101 = vsel %vm410, %v1098, %v1100
        %1102 = vrot.lane.b32.xlu0 %v1099, 123
        %v1103 = vpop.permute.xlu0 %1102
        %1104 = vrot.lane.b32.xlu0 %v1101, 123
        %v1105 = vpop.permute.xlu0 %1104
        %v1108 = vadd.f32 %v1087, %v1103
        %v1109 = vadd.f32 %v1088, %v1105
        %s1110 = sld [smem:[#allocation9 + $0x21]]
        %v1111 = vstv %s1110
        %v1112 = vmul.f32 %v1111, %v357
        %v1113 = vmul.f32 %v1111, %v358
        %v1114 = vmul.f32 %v1111, %v359
        %v1118 = vrot.slane %v1112, 4
        %v1119 = vrot.slane %v1113, 4
        %v1120 = vsel %vm214, %v1118, %v1119
        %v1121 = vrot.slane %v1114, 4
        %v1122 = vsel %vm214, %v1119, %v1121
        %1123 = vrot.lane.b32.xlu0 %v1120, 123
        %v1124 = vpop.permute.xlu0 %1123
        %1125 = vrot.lane.b32.xlu0 %v1122, 123
        %v1126 = vpop.permute.xlu0 %1125
        %v1129 = vadd.f32 %v1108, %v1124
        %v1130 = vadd.f32 %v1109, %v1126
        %s1131 = sld [smem:[#allocation9 + $0x28]]
        %v1132 = vstv %s1131
        %v1133 = vmul.f32 %v1132, %v357
        %v1134 = vmul.f32 %v1132, %v358
        %v1135 = vmul.f32 %v1132, %v359
        %v1139 = vrot.slane %v1133, 5
        %v1140 = vrot.slane %v1134, 5
        %v1141 = vsel %vm445, %v1139, %v1140
        %v1142 = vrot.slane %v1135, 5
        %v1143 = vsel %vm445, %v1140, %v1142
        %1144 = vrot.lane.b32.xlu0 %v1141, 123
        %v1145 = vpop.permute.xlu0 %1144
        %1146 = vrot.lane.b32.xlu0 %v1143, 123
        %v1147 = vpop.permute.xlu0 %1146
        %v1150 = vadd.f32 %v1129, %v1145
        %v1151 = vadd.f32 %v1130, %v1147
        %s1152 = sld [smem:[#allocation9 + $0x2f]]
        %v1153 = vstv %s1152
        %v1154 = vmul.f32 %v1153, %v357
        %v1155 = vmul.f32 %v1153, %v358
        %v1156 = vmul.f32 %v1153, %v359
        %v1160 = vrot.slane %v1154, 6
        %v1161 = vrot.slane %v1155, 6
        %v1162 = vsel %vm463, %v1160, %v1161
        %v1163 = vrot.slane %v1156, 6
        %v1164 = vsel %vm463, %v1161, %v1163
        %1165 = vrot.lane.b32.xlu0 %v1162, 123
        %v1166 = vpop.permute.xlu0 %1165
        %1167 = vrot.lane.b32.xlu0 %v1164, 123
        %v1168 = vpop.permute.xlu0 %1167
        %v1171 = vadd.f32 %v1150, %v1166
        %v1172 = vadd.f32 %v1151, %v1168
        %s1173 = sld [smem:[#allocation9 + $0x6]]
        %v1174 = vstv %s1173
        %v1175 = vmul.f32 %v1174, %v357
        %v1176 = vmul.f32 %v1174, %v358
        %1179 = vrot.lane.b32.xlu0 %v1175, 122
        %v1180 = vpop.permute.xlu0 %1179
        %1181 = vrot.lane.b32.xlu0 %v1176, 122
        %v1182 = vpop.permute.xlu0 %1181
        %v1185 = vadd.f32 %v1171, %v1180
        %v1186 = vadd.f32 %v1172, %v1182
        %s1187 = sld [smem:[#allocation9 + $0xd]]
        %v1188 = vstv %s1187
        %v1189 = vmul.f32 %v1188, %v357
        %v1190 = vmul.f32 %v1188, %v358
        %v1191 = vmul.f32 %v1188, %v359
        %v1195 = vrot.slane %v1189, 1
        %v1196 = vrot.slane %v1190, 1
        %v1197 = vsel %vm374, %v1195, %v1196
        %v1198 = vrot.slane %v1191, 1
        %v1199 = vsel %vm374, %v1196, %v1198
        %1200 = vrot.lane.b32.xlu0 %v1197, 122
        %v1201 = vpop.permute.xlu0 %1200
        %1202 = vrot.lane.b32.xlu0 %v1199, 122
        %v1203 = vpop.permute.xlu0 %1202
        %v1206 = vadd.f32 %v1185, %v1201
        %v1207 = vadd.f32 %v1186, %v1203
        %s1208 = sld [smem:[#allocation9 + $0x14]]
        %v1209 = vstv %s1208
        %v1210 = vmul.f32 %v1209, %v357
        %v1211 = vmul.f32 %v1209, %v358
        %v1212 = vmul.f32 %v1209, %v359
        %v1216 = vrot.slane %v1210, 2
        %v1217 = vrot.slane %v1211, 2
        %v1218 = vsel %vm392, %v1216, %v1217
        %v1219 = vrot.slane %v1212, 2
        %v1220 = vsel %vm392, %v1217, %v1219
        %1221 = vrot.lane.b32.xlu0 %v1218, 122
        %v1222 = vpop.permute.xlu0 %1221
        %1223 = vrot.lane.b32.xlu0 %v1220, 122
        %v1224 = vpop.permute.xlu0 %1223
        %v1227 = vadd.f32 %v1206, %v1222
        %v1228 = vadd.f32 %v1207, %v1224
        %s1229 = sld [smem:[#allocation9 + $0x1b]]
        %v1230 = vstv %s1229
        %v1231 = vmul.f32 %v1230, %v357
        %v1232 = vmul.f32 %v1230, %v358
        %v1233 = vmul.f32 %v1230, %v359
        %v1237 = vrot.slane %v1231, 3
        %v1238 = vrot.slane %v1232, 3
        %v1239 = vsel %vm410, %v1237, %v1238
        %v1240 = vrot.slane %v1233, 3
        %v1241 = vsel %vm410, %v1238, %v1240
        %1242 = vrot.lane.b32.xlu0 %v1239, 122
        %v1243 = vpop.permute.xlu0 %1242
        %1244 = vrot.lane.b32.xlu0 %v1241, 122
        %v1245 = vpop.permute.xlu0 %1244
        %v1248 = vadd.f32 %v1227, %v1243
        %v1249 = vadd.f32 %v1228, %v1245
        %s1250 = sld [smem:[#allocation9 + $0x22]]
        %v1251 = vstv %s1250
        %v1252 = vmul.f32 %v1251, %v357
        %v1253 = vmul.f32 %v1251, %v358
        %v1254 = vmul.f32 %v1251, %v359
        %v1258 = vrot.slane %v1252, 4
        %v1259 = vrot.slane %v1253, 4
        %v1260 = vsel %vm214, %v1258, %v1259
        %v1261 = vrot.slane %v1254, 4
        %v1262 = vsel %vm214, %v1259, %v1261
        %1263 = vrot.lane.b32.xlu0 %v1260, 122
        %v1264 = vpop.permute.xlu0 %1263
        %1265 = vrot.lane.b32.xlu0 %v1262, 122
        %v1266 = vpop.permute.xlu0 %1265
        %v1269 = vadd.f32 %v1248, %v1264
        %v1270 = vadd.f32 %v1249, %v1266
        %s1271 = sld [smem:[#allocation9 + $0x29]]
        %v1272 = vstv %s1271
        %v1273 = vmul.f32 %v1272, %v357
        %v1274 = vmul.f32 %v1272, %v358
        %v1275 = vmul.f32 %v1272, %v359
        %v1279 = vrot.slane %v1273, 5
        %v1280 = vrot.slane %v1274, 5
        %v1281 = vsel %vm445, %v1279, %v1280
        %v1282 = vrot.slane %v1275, 5
        %v1283 = vsel %vm445, %v1280, %v1282
        %1284 = vrot.lane.b32.xlu0 %v1281, 122
        %v1285 = vpop.permute.xlu0 %1284
        %1286 = vrot.lane.b32.xlu0 %v1283, 122
        %v1287 = vpop.permute.xlu0 %1286
        %v1290 = vadd.f32 %v1269, %v1285
        %v1291 = vadd.f32 %v1270, %v1287
        %s1292 = sld [smem:[#allocation9 + $0x30]]
        %v1293 = vstv %s1292
        %v1294 = vmul.f32 %v1293, %v357
        %v1295 = vmul.f32 %v1293, %v358
        %v1296 = vmul.f32 %v1293, %v359
        %v1300 = vrot.slane %v1294, 6
        %v1301 = vrot.slane %v1295, 6
        %v1302 = vsel %vm463, %v1300, %v1301
        %v1303 = vrot.slane %v1296, 6
        %v1304 = vsel %vm463, %v1301, %v1303
        %1305 = vrot.lane.b32.xlu0 %v1302, 122
        %v1306 = vpop.permute.xlu0 %1305
        %1307 = vrot.lane.b32.xlu0 %v1304, 122
        %v1308 = vpop.permute.xlu0 %1307
        %v1311 = vadd.f32 %v1290, %v1306
        %v1312 = vadd.f32 %v1291, %v1308
        %v1313 = vld [vmem:[%s264] sm:$0xff]
        %v1314 = vld [vmem:[%s264 + $0x8] sm:$0xff]
        %v1315 = vld [vmem:[%s264 + $0x10] sm:$0x3f]
        %s1316 = sld [smem:[#allocation9 + $0x31]]
        %v1317 = vstv %s1316
        %v1318 = vmul.f32 %v1317, %v1313
        %v1319 = vmul.f32 %v1317, %v1314
        %v1320 = vadd.f32 %v1311, %v1318
        %v1321 = vadd.f32 %v1312, %v1319
        %s1322 = sld [smem:[#allocation9 + $0x38]]
        %v1323 = vstv %s1322
        %v1324 = vmul.f32 %v1323, %v1313
        %v1325 = vmul.f32 %v1323, %v1314
        %v1326 = vmul.f32 %v1323, %v1315
        %v1330 = vrot.slane %v1324, 1
        %v1331 = vrot.slane %v1325, 1
        %v1332 = vsel %vm374, %v1330, %v1331
        %v1333 = vrot.slane %v1326, 1
        %v1334 = vsel %vm374, %v1331, %v1333
        %v1337 = vadd.f32 %v1320, %v1332
        %v1338 = vadd.f32 %v1321, %v1334
        %s1339 = sld [smem:[#allocation9 + $0x3f]]
        %v1340 = vstv %s1339
        %v1341 = vmul.f32 %v1340, %v1313
        %v1342 = vmul.f32 %v1340, %v1314
        %v1343 = vmul.f32 %v1340, %v1315
        %v1347 = vrot.slane %v1341, 2
        %v1348 = vrot.slane %v1342, 2
        %v1349 = vsel %vm392, %v1347, %v1348
        %v1350 = vrot.slane %v1343, 2
        %v1351 = vsel %vm392, %v1348, %v1350
        %v1354 = vadd.f32 %v1337, %v1349
        %v1355 = vadd.f32 %v1338, %v1351
        %s1356 = sld [smem:[#allocation9 + $0x46]]
        %v1357 = vstv %s1356
        %v1358 = vmul.f32 %v1357, %v1313
        %v1359 = vmul.f32 %v1357, %v1314
        %v1360 = vmul.f32 %v1357, %v1315
        %v1364 = vrot.slane %v1358, 3
        %v1365 = vrot.slane %v1359, 3
        %v1366 = vsel %vm410, %v1364, %v1365
        %v1367 = vrot.slane %v1360, 3
        %v1368 = vsel %vm410, %v1365, %v1367
        %v1371 = vadd.f32 %v1354, %v1366
        %v1372 = vadd.f32 %v1355, %v1368
        %s1373 = sld [smem:[#allocation9 + $0x4d]]
        %v1374 = vstv %s1373
        %v1375 = vmul.f32 %v1374, %v1313
        %v1376 = vmul.f32 %v1374, %v1314
        %v1377 = vmul.f32 %v1374, %v1315
        %v1381 = vrot.slane %v1375, 4
        %v1382 = vrot.slane %v1376, 4
        %v1383 = vsel %vm214, %v1381, %v1382
        %v1384 = vrot.slane %v1377, 4
        %v1385 = vsel %vm214, %v1382, %v1384
        %v1388 = vadd.f32 %v1371, %v1383
        %v1389 = vadd.f32 %v1372, %v1385
        %s1390 = sld [smem:[#allocation9 + $0x54]]
        %v1391 = vstv %s1390
        %v1392 = vmul.f32 %v1391, %v1313
        %v1393 = vmul.f32 %v1391, %v1314
        %v1394 = vmul.f32 %v1391, %v1315
        %v1398 = vrot.slane %v1392, 5
        %v1399 = vrot.slane %v1393, 5
        %v1400 = vsel %vm445, %v1398, %v1399
        %v1401 = vrot.slane %v1394, 5
        %v1402 = vsel %vm445, %v1399, %v1401
        %v1405 = vadd.f32 %v1388, %v1400
        %v1406 = vadd.f32 %v1389, %v1402
        %s1407 = sld [smem:[#allocation9 + $0x5b]]
        %v1408 = vstv %s1407
        %v1409 = vmul.f32 %v1408, %v1313
        %v1410 = vmul.f32 %v1408, %v1314
        %v1411 = vmul.f32 %v1408, %v1315
        %v1415 = vrot.slane %v1409, 6
        %v1416 = vrot.slane %v1410, 6
        %v1417 = vsel %vm463, %v1415, %v1416
        %v1418 = vrot.slane %v1411, 6
        %v1419 = vsel %vm463, %v1416, %v1418
        %v1422 = vadd.f32 %v1405, %v1417
        %v1423 = vadd.f32 %v1406, %v1419
        %s1424 = sld [smem:[#allocation9 + $0x32]]
        %v1425 = vstv %s1424
        %v1426 = vmul.f32 %v1425, %v1313
        %v1427 = vmul.f32 %v1425, %v1314
        %1430 = vrot.lane.b32.xlu0 %v1426, 127
        %v1431 = vpop.permute.xlu0 %1430
        %1432 = vrot.lane.b32.xlu0 %v1427, 127
        %v1433 = vpop.permute.xlu0 %1432
        %v1436 = vadd.f32 %v1422, %v1431
        %v1437 = vadd.f32 %v1423, %v1433
        %s1438 = sld [smem:[#allocation9 + $0x39]]
        %v1439 = vstv %s1438
        %v1440 = vmul.f32 %v1439, %v1313
        %v1441 = vmul.f32 %v1439, %v1314
        %v1442 = vmul.f32 %v1439, %v1315
        %v1446 = vrot.slane %v1440, 1
        %v1447 = vrot.slane %v1441, 1
        %v1448 = vsel %vm374, %v1446, %v1447
        %v1449 = vrot.slane %v1442, 1
        %v1450 = vsel %vm374, %v1447, %v1449
        %1451 = vrot.lane.b32.xlu0 %v1448, 127
        %v1452 = vpop.permute.xlu0 %1451
        %1453 = vrot.lane.b32.xlu0 %v1450, 127
        %v1454 = vpop.permute.xlu0 %1453
        %v1457 = vadd.f32 %v1436, %v1452
        %v1458 = vadd.f32 %v1437, %v1454
        %s1459 = sld [smem:[#allocation9 + $0x40]]
        %v1460 = vstv %s1459
        %v1461 = vmul.f32 %v1460, %v1313
        %v1462 = vmul.f32 %v1460, %v1314
        %v1463 = vmul.f32 %v1460, %v1315
        %v1467 = vrot.slane %v1461, 2
        %v1468 = vrot.slane %v1462, 2
        %v1469 = vsel %vm392, %v1467, %v1468
        %v1470 = vrot.slane %v1463, 2
        %v1471 = vsel %vm392, %v1468, %v1470
        %1472 = vrot.lane.b32.xlu0 %v1469, 127
        %v1473 = vpop.permute.xlu0 %1472
        %1474 = vrot.lane.b32.xlu0 %v1471, 127
        %v1475 = vpop.permute.xlu0 %1474
        %v1478 = vadd.f32 %v1457, %v1473
        %v1479 = vadd.f32 %v1458, %v1475
        %s1480 = sld [smem:[#allocation9 + $0x47]]
        %v1481 = vstv %s1480
        %v1482 = vmul.f32 %v1481, %v1313
        %v1483 = vmul.f32 %v1481, %v1314
        %v1484 = vmul.f32 %v1481, %v1315
        %v1488 = vrot.slane %v1482, 3
        %v1489 = vrot.slane %v1483, 3
        %v1490 = vsel %vm410, %v1488, %v1489
        %v1491 = vrot.slane %v1484, 3
        %v1492 = vsel %vm410, %v1489, %v1491
        %1493 = vrot.lane.b32.xlu0 %v1490, 127
        %v1494 = vpop.permute.xlu0 %1493
        %1495 = vrot.lane.b32.xlu0 %v1492, 127
        %v1496 = vpop.permute.xlu0 %1495
        %v1499 = vadd.f32 %v1478, %v1494
        %v1500 = vadd.f32 %v1479, %v1496
        %s1501 = sld [smem:[#allocation9 + $0x4e]]
        %v1502 = vstv %s1501
        %v1503 = vmul.f32 %v1502, %v1313
        %v1504 = vmul.f32 %v1502, %v1314
        %v1505 = vmul.f32 %v1502, %v1315
        %v1509 = vrot.slane %v1503, 4
        %v1510 = vrot.slane %v1504, 4
        %v1511 = vsel %vm214, %v1509, %v1510
        %v1512 = vrot.slane %v1505, 4
        %v1513 = vsel %vm214, %v1510, %v1512
        %1514 = vrot.lane.b32.xlu0 %v1511, 127
        %v1515 = vpop.permute.xlu0 %1514
        %1516 = vrot.lane.b32.xlu0 %v1513, 127
        %v1517 = vpop.permute.xlu0 %1516
        %v1520 = vadd.f32 %v1499, %v1515
        %v1521 = vadd.f32 %v1500, %v1517
        %s1522 = sld [smem:[#allocation9 + $0x55]]
        %v1523 = vstv %s1522
        %v1524 = vmul.f32 %v1523, %v1313
        %v1525 = vmul.f32 %v1523, %v1314
        %v1526 = vmul.f32 %v1523, %v1315
        %v1530 = vrot.slane %v1524, 5
        %v1531 = vrot.slane %v1525, 5
        %v1532 = vsel %vm445, %v1530, %v1531
        %v1533 = vrot.slane %v1526, 5
        %v1534 = vsel %vm445, %v1531, %v1533
        %1535 = vrot.lane.b32.xlu0 %v1532, 127
        %v1536 = vpop.permute.xlu0 %1535
        %1537 = vrot.lane.b32.xlu0 %v1534, 127
        %v1538 = vpop.permute.xlu0 %1537
        %v1541 = vadd.f32 %v1520, %v1536
        %v1542 = vadd.f32 %v1521, %v1538
        %s1543 = sld [smem:[#allocation9 + $0x5c]]
        %v1544 = vstv %s1543
        %v1545 = vmul.f32 %v1544, %v1313
        %v1546 = vmul.f32 %v1544, %v1314
        %v1547 = vmul.f32 %v1544, %v1315
        %v1551 = vrot.slane %v1545, 6
        %v1552 = vrot.slane %v1546, 6
        %v1553 = vsel %vm463, %v1551, %v1552
        %v1554 = vrot.slane %v1547, 6
        %v1555 = vsel %vm463, %v1552, %v1554
        %1556 = vrot.lane.b32.xlu0 %v1553, 127
        %v1557 = vpop.permute.xlu0 %1556
        %1558 = vrot.lane.b32.xlu0 %v1555, 127
        %v1559 = vpop.permute.xlu0 %1558
        %v1562 = vadd.f32 %v1541, %v1557
        %v1563 = vadd.f32 %v1542, %v1559
        %s1564 = sld [smem:[#allocation9 + $0x33]]
        %v1565 = vstv %s1564
        %v1566 = vmul.f32 %v1565, %v1313
        %v1567 = vmul.f32 %v1565, %v1314
        %1570 = vrot.lane.b32.xlu0 %v1566, 126
        %v1571 = vpop.permute.xlu0 %1570
        %1572 = vrot.lane.b32.xlu0 %v1567, 126
        %v1573 = vpop.permute.xlu0 %1572
        %v1576 = vadd.f32 %v1562, %v1571
        %v1577 = vadd.f32 %v1563, %v1573
        %s1578 = sld [smem:[#allocation9 + $0x3a]]
        %v1579 = vstv %s1578
        %v1580 = vmul.f32 %v1579, %v1313
        %v1581 = vmul.f32 %v1579, %v1314
        %v1582 = vmul.f32 %v1579, %v1315
        %v1586 = vrot.slane %v1580, 1
        %v1587 = vrot.slane %v1581, 1
        %v1588 = vsel %vm374, %v1586, %v1587
        %v1589 = vrot.slane %v1582, 1
        %v1590 = vsel %vm374, %v1587, %v1589
        %1591 = vrot.lane.b32.xlu0 %v1588, 126
        %v1592 = vpop.permute.xlu0 %1591
        %1593 = vrot.lane.b32.xlu0 %v1590, 126
        %v1594 = vpop.permute.xlu0 %1593
        %v1597 = vadd.f32 %v1576, %v1592
        %v1598 = vadd.f32 %v1577, %v1594
        %s1599 = sld [smem:[#allocation9 + $0x41]]
        %v1600 = vstv %s1599
        %v1601 = vmul.f32 %v1600, %v1313
        %v1602 = vmul.f32 %v1600, %v1314
        %v1603 = vmul.f32 %v1600, %v1315
        %v1607 = vrot.slane %v1601, 2
        %v1608 = vrot.slane %v1602, 2
        %v1609 = vsel %vm392, %v1607, %v1608
        %v1610 = vrot.slane %v1603, 2
        %v1611 = vsel %vm392, %v1608, %v1610
        %1612 = vrot.lane.b32.xlu0 %v1609, 126
        %v1613 = vpop.permute.xlu0 %1612
        %1614 = vrot.lane.b32.xlu0 %v1611, 126
        %v1615 = vpop.permute.xlu0 %1614
        %v1618 = vadd.f32 %v1597, %v1613
        %v1619 = vadd.f32 %v1598, %v1615
        %s1620 = sld [smem:[#allocation9 + $0x48]]
        %v1621 = vstv %s1620
        %v1622 = vmul.f32 %v1621, %v1313
        %v1623 = vmul.f32 %v1621, %v1314
        %v1624 = vmul.f32 %v1621, %v1315
        %v1628 = vrot.slane %v1622, 3
        %v1629 = vrot.slane %v1623, 3
        %v1630 = vsel %vm410, %v1628, %v1629
        %v1631 = vrot.slane %v1624, 3
        %v1632 = vsel %vm410, %v1629, %v1631
        %1633 = vrot.lane.b32.xlu0 %v1630, 126
        %v1634 = vpop.permute.xlu0 %1633
        %1635 = vrot.lane.b32.xlu0 %v1632, 126
        %v1636 = vpop.permute.xlu0 %1635
        %v1639 = vadd.f32 %v1618, %v1634
        %v1640 = vadd.f32 %v1619, %v1636
        %s1641 = sld [smem:[#allocation9 + $0x4f]]
        %v1642 = vstv %s1641
        %v1643 = vmul.f32 %v1642, %v1313
        %v1644 = vmul.f32 %v1642, %v1314
        %v1645 = vmul.f32 %v1642, %v1315
        %v1649 = vrot.slane %v1643, 4
        %v1650 = vrot.slane %v1644, 4
        %v1651 = vsel %vm214, %v1649, %v1650
        %v1652 = vrot.slane %v1645, 4
        %v1653 = vsel %vm214, %v1650, %v1652
        %1654 = vrot.lane.b32.xlu0 %v1651, 126
        %v1655 = vpop.permute.xlu0 %1654
        %1656 = vrot.lane.b32.xlu0 %v1653, 126
        %v1657 = vpop.permute.xlu0 %1656
        %v1660 = vadd.f32 %v1639, %v1655
        %v1661 = vadd.f32 %v1640, %v1657
        %s1662 = sld [smem:[#allocation9 + $0x56]]
        %v1663 = vstv %s1662
        %v1664 = vmul.f32 %v1663, %v1313
        %v1665 = vmul.f32 %v1663, %v1314
        %v1666 = vmul.f32 %v1663, %v1315
        %v1670 = vrot.slane %v1664, 5
        %v1671 = vrot.slane %v1665, 5
        %v1672 = vsel %vm445, %v1670, %v1671
        %v1673 = vrot.slane %v1666, 5
        %v1674 = vsel %vm445, %v1671, %v1673
        %1675 = vrot.lane.b32.xlu0 %v1672, 126
        %v1676 = vpop.permute.xlu0 %1675
        %1677 = vrot.lane.b32.xlu0 %v1674, 126
        %v1678 = vpop.permute.xlu0 %1677
        %v1681 = vadd.f32 %v1660, %v1676
        %v1682 = vadd.f32 %v1661, %v1678
        %s1683 = sld [smem:[#allocation9 + $0x5d]]
        %v1684 = vstv %s1683
        %v1685 = vmul.f32 %v1684, %v1313
        %v1686 = vmul.f32 %v1684, %v1314
        %v1687 = vmul.f32 %v1684, %v1315
        %v1691 = vrot.slane %v1685, 6
        %v1692 = vrot.slane %v1686, 6
        %v1693 = vsel %vm463, %v1691, %v1692
        %v1694 = vrot.slane %v1687, 6
        %v1695 = vsel %vm463, %v1692, %v1694
        %1696 = vrot.lane.b32.xlu0 %v1693, 126
        %v1697 = vpop.permute.xlu0 %1696
        %1698 = vrot.lane.b32.xlu0 %v1695, 126
        %v1699 = vpop.permute.xlu0 %1698
        %v1702 = vadd.f32 %v1681, %v1697
        %v1703 = vadd.f32 %v1682, %v1699
        %s1704 = sld [smem:[#allocation9 + $0x34]]
        %v1705 = vstv %s1704
        %v1706 = vmul.f32 %v1705, %v1313
        %v1707 = vmul.f32 %v1705, %v1314
        %1710 = vrot.lane.b32.xlu0 %v1706, 125
        %v1711 = vpop.permute.xlu0 %1710
        %1712 = vrot.lane.b32.xlu0 %v1707, 125
        %v1713 = vpop.permute.xlu0 %1712
        %v1716 = vadd.f32 %v1702, %v1711
        %v1717 = vadd.f32 %v1703, %v1713
        %s1718 = sld [smem:[#allocation9 + $0x3b]]
        %v1719 = vstv %s1718
        %v1720 = vmul.f32 %v1719, %v1313
        %v1721 = vmul.f32 %v1719, %v1314
        %v1722 = vmul.f32 %v1719, %v1315
        %v1726 = vrot.slane %v1720, 1
        %v1727 = vrot.slane %v1721, 1
        %v1728 = vsel %vm374, %v1726, %v1727
        %v1729 = vrot.slane %v1722, 1
        %v1730 = vsel %vm374, %v1727, %v1729
        %1731 = vrot.lane.b32.xlu0 %v1728, 125
        %v1732 = vpop.permute.xlu0 %1731
        %1733 = vrot.lane.b32.xlu0 %v1730, 125
        %v1734 = vpop.permute.xlu0 %1733
        %v1737 = vadd.f32 %v1716, %v1732
        %v1738 = vadd.f32 %v1717, %v1734
        %s1739 = sld [smem:[#allocation9 + $0x42]]
        %v1740 = vstv %s1739
        %v1741 = vmul.f32 %v1740, %v1313
        %v1742 = vmul.f32 %v1740, %v1314
        %v1743 = vmul.f32 %v1740, %v1315
        %v1747 = vrot.slane %v1741, 2
        %v1748 = vrot.slane %v1742, 2
        %v1749 = vsel %vm392, %v1747, %v1748
        %v1750 = vrot.slane %v1743, 2
        %v1751 = vsel %vm392, %v1748, %v1750
        %1752 = vrot.lane.b32.xlu0 %v1749, 125
        %v1753 = vpop.permute.xlu0 %1752
        %1754 = vrot.lane.b32.xlu0 %v1751, 125
        %v1755 = vpop.permute.xlu0 %1754
        %v1758 = vadd.f32 %v1737, %v1753
        %v1759 = vadd.f32 %v1738, %v1755
        %s1760 = sld [smem:[#allocation9 + $0x49]]
        %v1761 = vstv %s1760
        %v1762 = vmul.f32 %v1761, %v1313
        %v1763 = vmul.f32 %v1761, %v1314
        %v1764 = vmul.f32 %v1761, %v1315
        %v1768 = vrot.slane %v1762, 3
        %v1769 = vrot.slane %v1763, 3
        %v1770 = vsel %vm410, %v1768, %v1769
        %v1771 = vrot.slane %v1764, 3
        %v1772 = vsel %vm410, %v1769, %v1771
        %1773 = vrot.lane.b32.xlu0 %v1770, 125
        %v1774 = vpop.permute.xlu0 %1773
        %1775 = vrot.lane.b32.xlu0 %v1772, 125
        %v1776 = vpop.permute.xlu0 %1775
        %v1779 = vadd.f32 %v1758, %v1774
        %v1780 = vadd.f32 %v1759, %v1776
        %s1781 = sld [smem:[#allocation9 + $0x50]]
        %v1782 = vstv %s1781
        %v1783 = vmul.f32 %v1782, %v1313
        %v1784 = vmul.f32 %v1782, %v1314
        %v1785 = vmul.f32 %v1782, %v1315
        %v1789 = vrot.slane %v1783, 4
        %v1790 = vrot.slane %v1784, 4
        %v1791 = vsel %vm214, %v1789, %v1790
        %v1792 = vrot.slane %v1785, 4
        %v1793 = vsel %vm214, %v1790, %v1792
        %1794 = vrot.lane.b32.xlu0 %v1791, 125
        %v1795 = vpop.permute.xlu0 %1794
        %1796 = vrot.lane.b32.xlu0 %v1793, 125
        %v1797 = vpop.permute.xlu0 %1796
        %v1800 = vadd.f32 %v1779, %v1795
        %v1801 = vadd.f32 %v1780, %v1797
        %s1802 = sld [smem:[#allocation9 + $0x57]]
        %v1803 = vstv %s1802
        %v1804 = vmul.f32 %v1803, %v1313
        %v1805 = vmul.f32 %v1803, %v1314
        %v1806 = vmul.f32 %v1803, %v1315
        %v1810 = vrot.slane %v1804, 5
        %v1811 = vrot.slane %v1805, 5
        %v1812 = vsel %vm445, %v1810, %v1811
        %v1813 = vrot.slane %v1806, 5
        %v1814 = vsel %vm445, %v1811, %v1813
        %1815 = vrot.lane.b32.xlu0 %v1812, 125
        %v1816 = vpop.permute.xlu0 %1815
        %1817 = vrot.lane.b32.xlu0 %v1814, 125
        %v1818 = vpop.permute.xlu0 %1817
        %v1821 = vadd.f32 %v1800, %v1816
        %v1822 = vadd.f32 %v1801, %v1818
        %s1823 = sld [smem:[#allocation9 + $0x5e]]
        %v1824 = vstv %s1823
        %v1825 = vmul.f32 %v1824, %v1313
        %v1826 = vmul.f32 %v1824, %v1314
        %v1827 = vmul.f32 %v1824, %v1315
        %v1831 = vrot.slane %v1825, 6
        %v1832 = vrot.slane %v1826, 6
        %v1833 = vsel %vm463, %v1831, %v1832
        %v1834 = vrot.slane %v1827, 6
        %v1835 = vsel %vm463, %v1832, %v1834
        %1836 = vrot.lane.b32.xlu0 %v1833, 125
        %v1837 = vpop.permute.xlu0 %1836
        %1838 = vrot.lane.b32.xlu0 %v1835, 125
        %v1839 = vpop.permute.xlu0 %1838
        %v1842 = vadd.f32 %v1821, %v1837
        %v1843 = vadd.f32 %v1822, %v1839
        %s1844 = sld [smem:[#allocation9 + $0x35]]
        %v1845 = vstv %s1844
        %v1846 = vmul.f32 %v1845, %v1313
        %v1847 = vmul.f32 %v1845, %v1314
        %1850 = vrot.lane.b32.xlu0 %v1846, 124
        %v1851 = vpop.permute.xlu0 %1850
        %1852 = vrot.lane.b32.xlu0 %v1847, 124
        %v1853 = vpop.permute.xlu0 %1852
        %v1856 = vadd.f32 %v1842, %v1851
        %v1857 = vadd.f32 %v1843, %v1853
        %s1858 = sld [smem:[#allocation9 + $0x3c]]
        %v1859 = vstv %s1858
        %v1860 = vmul.f32 %v1859, %v1313
        %v1861 = vmul.f32 %v1859, %v1314
        %v1862 = vmul.f32 %v1859, %v1315
        %v1866 = vrot.slane %v1860, 1
        %v1867 = vrot.slane %v1861, 1
        %v1868 = vsel %vm374, %v1866, %v1867
        %v1869 = vrot.slane %v1862, 1
        %v1870 = vsel %vm374, %v1867, %v1869
        %1871 = vrot.lane.b32.xlu0 %v1868, 124
        %v1872 = vpop.permute.xlu0 %1871
        %1873 = vrot.lane.b32.xlu0 %v1870, 124
        %v1874 = vpop.permute.xlu0 %1873
        %v1877 = vadd.f32 %v1856, %v1872
        %v1878 = vadd.f32 %v1857, %v1874
        %s1879 = sld [smem:[#allocation9 + $0x43]]
        %v1880 = vstv %s1879
        %v1881 = vmul.f32 %v1880, %v1313
        %v1882 = vmul.f32 %v1880, %v1314
        %v1883 = vmul.f32 %v1880, %v1315
        %v1887 = vrot.slane %v1881, 2
        %v1888 = vrot.slane %v1882, 2
        %v1889 = vsel %vm392, %v1887, %v1888
        %v1890 = vrot.slane %v1883, 2
        %v1891 = vsel %vm392, %v1888, %v1890
        %1892 = vrot.lane.b32.xlu0 %v1889, 124
        %v1893 = vpop.permute.xlu0 %1892
        %1894 = vrot.lane.b32.xlu0 %v1891, 124
        %v1895 = vpop.permute.xlu0 %1894
        %v1898 = vadd.f32 %v1877, %v1893
        %v1899 = vadd.f32 %v1878, %v1895
        %s1900 = sld [smem:[#allocation9 + $0x4a]]
        %v1901 = vstv %s1900
        %v1902 = vmul.f32 %v1901, %v1313
        %v1903 = vmul.f32 %v1901, %v1314
        %v1904 = vmul.f32 %v1901, %v1315
        %v1908 = vrot.slane %v1902, 3
        %v1909 = vrot.slane %v1903, 3
        %v1910 = vsel %vm410, %v1908, %v1909
        %v1911 = vrot.slane %v1904, 3
        %v1912 = vsel %vm410, %v1909, %v1911
        %1913 = vrot.lane.b32.xlu0 %v1910, 124
        %v1914 = vpop.permute.xlu0 %1913
        %1915 = vrot.lane.b32.xlu0 %v1912, 124
        %v1916 = vpop.permute.xlu0 %1915
        %v1919 = vadd.f32 %v1898, %v1914
        %v1920 = vadd.f32 %v1899, %v1916
        %s1921 = sld [smem:[#allocation9 + $0x51]]
        %v1922 = vstv %s1921
        %v1923 = vmul.f32 %v1922, %v1313
        %v1924 = vmul.f32 %v1922, %v1314
        %v1925 = vmul.f32 %v1922, %v1315
        %v1929 = vrot.slane %v1923, 4
        %v1930 = vrot.slane %v1924, 4
        %v1931 = vsel %vm214, %v1929, %v1930
        %v1932 = vrot.slane %v1925, 4
        %v1933 = vsel %vm214, %v1930, %v1932
        %1934 = vrot.lane.b32.xlu0 %v1931, 124
        %v1935 = vpop.permute.xlu0 %1934
        %1936 = vrot.lane.b32.xlu0 %v1933, 124
        %v1937 = vpop.permute.xlu0 %1936
        %v1940 = vadd.f32 %v1919, %v1935
        %v1941 = vadd.f32 %v1920, %v1937
        %s1942 = sld [smem:[#allocation9 + $0x58]]
        %v1943 = vstv %s1942
        %v1944 = vmul.f32 %v1943, %v1313
        %v1945 = vmul.f32 %v1943, %v1314
        %v1946 = vmul.f32 %v1943, %v1315
        %v1950 = vrot.slane %v1944, 5
        %v1951 = vrot.slane %v1945, 5
        %v1952 = vsel %vm445, %v1950, %v1951
        %v1953 = vrot.slane %v1946, 5
        %v1954 = vsel %vm445, %v1951, %v1953
        %1955 = vrot.lane.b32.xlu0 %v1952, 124
        %v1956 = vpop.permute.xlu0 %1955
        %1957 = vrot.lane.b32.xlu0 %v1954, 124
        %v1958 = vpop.permute.xlu0 %1957
        %v1961 = vadd.f32 %v1940, %v1956
        %v1962 = vadd.f32 %v1941, %v1958
        %s1963 = sld [smem:[#allocation9 + $0x5f]]
        %v1964 = vstv %s1963
        %v1965 = vmul.f32 %v1964, %v1313
        %v1966 = vmul.f32 %v1964, %v1314
        %v1967 = vmul.f32 %v1964, %v1315
        %v1971 = vrot.slane %v1965, 6
        %v1972 = vrot.slane %v1966, 6
        %v1973 = vsel %vm463, %v1971, %v1972
        %v1974 = vrot.slane %v1967, 6
        %v1975 = vsel %vm463, %v1972, %v1974
        %1976 = vrot.lane.b32.xlu0 %v1973, 124
        %v1977 = vpop.permute.xlu0 %1976
        %1978 = vrot.lane.b32.xlu0 %v1975, 124
        %v1979 = vpop.permute.xlu0 %1978
        %v1982 = vadd.f32 %v1961, %v1977
        %v1983 = vadd.f32 %v1962, %v1979
        %s1984 = sld [smem:[#allocation9 + $0x36]]
        %v1985 = vstv %s1984
        %v1986 = vmul.f32 %v1985, %v1313
        %v1987 = vmul.f32 %v1985, %v1314
        %1990 = vrot.lane.b32.xlu0 %v1986, 123
        %v1991 = vpop.permute.xlu0 %1990
        %1992 = vrot.lane.b32.xlu0 %v1987, 123
        %v1993 = vpop.permute.xlu0 %1992
        %v1996 = vadd.f32 %v1982, %v1991
        %v1997 = vadd.f32 %v1983, %v1993
        %s1998 = sld [smem:[#allocation9 + $0x3d]]
        %v1999 = vstv %s1998
        %v2000 = vmul.f32 %v1999, %v1313
        %v2001 = vmul.f32 %v1999, %v1314
        %v2002 = vmul.f32 %v1999, %v1315
        %v2006 = vrot.slane %v2000, 1
        %v2007 = vrot.slane %v2001, 1
        %v2008 = vsel %vm374, %v2006, %v2007
        %v2009 = vrot.slane %v2002, 1
        %v2010 = vsel %vm374, %v2007, %v2009
        %2011 = vrot.lane.b32.xlu0 %v2008, 123
        %v2012 = vpop.permute.xlu0 %2011
        %2013 = vrot.lane.b32.xlu0 %v2010, 123
        %v2014 = vpop.permute.xlu0 %2013
        %v2017 = vadd.f32 %v1996, %v2012
        %v2018 = vadd.f32 %v1997, %v2014
        %s2019 = sld [smem:[#allocation9 + $0x44]]
        %v2020 = vstv %s2019
        %v2021 = vmul.f32 %v2020, %v1313
        %v2022 = vmul.f32 %v2020, %v1314
        %v2023 = vmul.f32 %v2020, %v1315
        %v2027 = vrot.slane %v2021, 2
        %v2028 = vrot.slane %v2022, 2
        %v2029 = vsel %vm392, %v2027, %v2028
        %v2030 = vrot.slane %v2023, 2
        %v2031 = vsel %vm392, %v2028, %v2030
        %2032 = vrot.lane.b32.xlu0 %v2029, 123
        %v2033 = vpop.permute.xlu0 %2032
        %2034 = vrot.lane.b32.xlu0 %v2031, 123
        %v2035 = vpop.permute.xlu0 %2034
        %v2038 = vadd.f32 %v2017, %v2033
        %v2039 = vadd.f32 %v2018, %v2035
        %s2040 = sld [smem:[#allocation9 + $0x4b]]
        %v2041 = vstv %s2040
        %v2042 = vmul.f32 %v2041, %v1313
        %v2043 = vmul.f32 %v2041, %v1314
        %v2044 = vmul.f32 %v2041, %v1315
        %v2048 = vrot.slane %v2042, 3
        %v2049 = vrot.slane %v2043, 3
        %v2050 = vsel %vm410, %v2048, %v2049
        %v2051 = vrot.slane %v2044, 3
        %v2052 = vsel %vm410, %v2049, %v2051
        %2053 = vrot.lane.b32.xlu0 %v2050, 123
        %v2054 = vpop.permute.xlu0 %2053
        %2055 = vrot.lane.b32.xlu0 %v2052, 123
        %v2056 = vpop.permute.xlu0 %2055
        %v2059 = vadd.f32 %v2038, %v2054
        %v2060 = vadd.f32 %v2039, %v2056
        %s2061 = sld [smem:[#allocation9 + $0x52]]
        %v2062 = vstv %s2061
        %v2063 = vmul.f32 %v2062, %v1313
        %v2064 = vmul.f32 %v2062, %v1314
        %v2065 = vmul.f32 %v2062, %v1315
        %v2069 = vrot.slane %v2063, 4
        %v2070 = vrot.slane %v2064, 4
        %v2071 = vsel %vm214, %v2069, %v2070
        %v2072 = vrot.slane %v2065, 4
        %v2073 = vsel %vm214, %v2070, %v2072
        %2074 = vrot.lane.b32.xlu0 %v2071, 123
        %v2075 = vpop.permute.xlu0 %2074
        %2076 = vrot.lane.b32.xlu0 %v2073, 123
        %v2077 = vpop.permute.xlu0 %2076
        %v2080 = vadd.f32 %v2059, %v2075
        %v2081 = vadd.f32 %v2060, %v2077
        %s2082 = sld [smem:[#allocation9 + $0x59]]
        %v2083 = vstv %s2082
        %v2084 = vmul.f32 %v2083, %v1313
        %v2085 = vmul.f32 %v2083, %v1314
        %v2086 = vmul.f32 %v2083, %v1315
        %v2090 = vrot.slane %v2084, 5
        %v2091 = vrot.slane %v2085, 5
        %v2092 = vsel %vm445, %v2090, %v2091
        %v2093 = vrot.slane %v2086, 5
        %v2094 = vsel %vm445, %v2091, %v2093
        %2095 = vrot.lane.b32.xlu0 %v2092, 123
        %v2096 = vpop.permute.xlu0 %2095
        %2097 = vrot.lane.b32.xlu0 %v2094, 123
        %v2098 = vpop.permute.xlu0 %2097
        %v2101 = vadd.f32 %v2080, %v2096
        %v2102 = vadd.f32 %v2081, %v2098
        %s2103 = sld [smem:[#allocation9 + $0x60]]
        %v2104 = vstv %s2103
        %v2105 = vmul.f32 %v2104, %v1313
        %v2106 = vmul.f32 %v2104, %v1314
        %v2107 = vmul.f32 %v2104, %v1315
        %v2111 = vrot.slane %v2105, 6
        %v2112 = vrot.slane %v2106, 6
        %v2113 = vsel %vm463, %v2111, %v2112
        %v2114 = vrot.slane %v2107, 6
        %v2115 = vsel %vm463, %v2112, %v2114
        %2116 = vrot.lane.b32.xlu0 %v2113, 123
        %v2117 = vpop.permute.xlu0 %2116
        %2118 = vrot.lane.b32.xlu0 %v2115, 123
        %v2119 = vpop.permute.xlu0 %2118
        %v2122 = vadd.f32 %v2101, %v2117
        %v2123 = vadd.f32 %v2102, %v2119
        %s2124 = sld [smem:[#allocation9 + $0x37]]
        %v2125 = vstv %s2124
        %v2126 = vmul.f32 %v2125, %v1313
        %v2127 = vmul.f32 %v2125, %v1314
        %2130 = vrot.lane.b32.xlu0 %v2126, 122
        %v2131 = vpop.permute.xlu0 %2130
        %2132 = vrot.lane.b32.xlu0 %v2127, 122
        %v2133 = vpop.permute.xlu0 %2132
        %v2136 = vadd.f32 %v2122, %v2131
        %v2137 = vadd.f32 %v2123, %v2133
        %s2138 = sld [smem:[#allocation9 + $0x3e]]
        %v2139 = vstv %s2138
        %v2140 = vmul.f32 %v2139, %v1313
        %v2141 = vmul.f32 %v2139, %v1314
        %v2142 = vmul.f32 %v2139, %v1315
        %v2146 = vrot.slane %v2140, 1
        %v2147 = vrot.slane %v2141, 1
        %v2148 = vsel %vm374, %v2146, %v2147
        %v2149 = vrot.slane %v2142, 1
        %v2150 = vsel %vm374, %v2147, %v2149
        %2151 = vrot.lane.b32.xlu0 %v2148, 122
        %v2152 = vpop.permute.xlu0 %2151
        %2153 = vrot.lane.b32.xlu0 %v2150, 122
        %v2154 = vpop.permute.xlu0 %2153
        %v2157 = vadd.f32 %v2136, %v2152
        %v2158 = vadd.f32 %v2137, %v2154
        %s2159 = sld [smem:[#allocation9 + $0x45]]
        %v2160 = vstv %s2159
        %v2161 = vmul.f32 %v2160, %v1313
        %v2162 = vmul.f32 %v2160, %v1314
        %v2163 = vmul.f32 %v2160, %v1315
        %v2167 = vrot.slane %v2161, 2
        %v2168 = vrot.slane %v2162, 2
        %v2169 = vsel %vm392, %v2167, %v2168
        %v2170 = vrot.slane %v2163, 2
        %v2171 = vsel %vm392, %v2168, %v2170
        %2172 = vrot.lane.b32.xlu0 %v2169, 122
        %v2173 = vpop.permute.xlu0 %2172
        %2174 = vrot.lane.b32.xlu0 %v2171, 122
        %v2175 = vpop.permute.xlu0 %2174
        %v2178 = vadd.f32 %v2157, %v2173
        %v2179 = vadd.f32 %v2158, %v2175
        %s2180 = sld [smem:[#allocation9 + $0x4c]]
        %v2181 = vstv %s2180
        %v2182 = vmul.f32 %v2181, %v1313
        %v2183 = vmul.f32 %v2181, %v1314
        %v2184 = vmul.f32 %v2181, %v1315
        %v2188 = vrot.slane %v2182, 3
        %v2189 = vrot.slane %v2183, 3
        %v2190 = vsel %vm410, %v2188, %v2189
        %v2191 = vrot.slane %v2184, 3
        %v2192 = vsel %vm410, %v2189, %v2191
        %2193 = vrot.lane.b32.xlu0 %v2190, 122
        %v2194 = vpop.permute.xlu0 %2193
        %2195 = vrot.lane.b32.xlu0 %v2192, 122
        %v2196 = vpop.permute.xlu0 %2195
        %v2199 = vadd.f32 %v2178, %v2194
        %v2200 = vadd.f32 %v2179, %v2196
        %s2201 = sld [smem:[#allocation9 + $0x53]]
        %v2202 = vstv %s2201
        %v2203 = vmul.f32 %v2202, %v1313
        %v2204 = vmul.f32 %v2202, %v1314
        %v2205 = vmul.f32 %v2202, %v1315
        %v2209 = vrot.slane %v2203, 4
        %v2210 = vrot.slane %v2204, 4
        %v2211 = vsel %vm214, %v2209, %v2210
        %v2212 = vrot.slane %v2205, 4
        %v2213 = vsel %vm214, %v2210, %v2212
        %2214 = vrot.lane.b32.xlu0 %v2211, 122
        %v2215 = vpop.permute.xlu0 %2214
        %2216 = vrot.lane.b32.xlu0 %v2213, 122
        %v2217 = vpop.permute.xlu0 %2216
        %v2220 = vadd.f32 %v2199, %v2215
        %v2221 = vadd.f32 %v2200, %v2217
        %s2222 = sld [smem:[#allocation9 + $0x5a]]
        %v2223 = vstv %s2222
        %v2224 = vmul.f32 %v2223, %v1313
        %v2225 = vmul.f32 %v2223, %v1314
        %v2226 = vmul.f32 %v2223, %v1315
        %v2230 = vrot.slane %v2224, 5
        %v2231 = vrot.slane %v2225, 5
        %v2232 = vsel %vm445, %v2230, %v2231
        %v2233 = vrot.slane %v2226, 5
        %v2234 = vsel %vm445, %v2231, %v2233
        %2235 = vrot.lane.b32.xlu0 %v2232, 122
        %v2236 = vpop.permute.xlu0 %2235
        %2237 = vrot.lane.b32.xlu0 %v2234, 122
        %v2238 = vpop.permute.xlu0 %2237
        %v2241 = vadd.f32 %v2220, %v2236
        %v2242 = vadd.f32 %v2221, %v2238
        %s2243 = sld [smem:[#allocation9 + $0x61]]
        %v2244 = vstv %s2243
        %v2245 = vmul.f32 %v2244, %v1313
        %v2246 = vmul.f32 %v2244, %v1314
        %v2247 = vmul.f32 %v2244, %v1315
        %v2251 = vrot.slane %v2245, 6
        %v2252 = vrot.slane %v2246, 6
        %v2253 = vsel %vm463, %v2251, %v2252
        %v2254 = vrot.slane %v2247, 6
        %v2255 = vsel %vm463, %v2252, %v2254
        %2256 = vrot.lane.b32.xlu0 %v2253, 122
        %v2257 = vpop.permute.xlu0 %2256
        %2258 = vrot.lane.b32.xlu0 %v2255, 122
        %v2259 = vpop.permute.xlu0 %2258
        %v2262 = vadd.f32 %v2241, %v2257
        %v2263 = vadd.f32 %v2242, %v2259
        %v2264 = vxor.u32 %v2262, 2147483648
        %v2265 = vxor.u32 %v2263, 2147483648
        %v2266 = vmul.f32 %v2264, 1.442695
        %v2267 = vpow.pop %v2266
        %v2268 = vmul.f32 %v2265, 1.442695
        %v2269 = vpow.pop %v2268
        %v2270 = vadd.f32 %v2267, 1.0
        %v2271 = vadd.f32 %v2269, 1.0
        %v2272 = vrcp.pop %v2270
        %v2273 = vmul.f32 %v2270, %v2272
        %v2274 = vsub.f32 1.0, %v2273
        %v2275 = vmul.f32 %v2272, %v2274
        %v2276 = vadd.f32 %v2272, %v2275
        %vm2277 = vweird.f32 %v2270
        %vm2278 = vweird.f32 %v2272
        %vm2279 = vmor %vm2277, %vm2278
        %v2280 = vsel %vm2279, %v2272, %v2276
        %v2281 = vand.u32 2147483647, %v2270
        %vm2282 = vcmp.eq.f32.partialorder %v2281, 8.507059e+37
        %v2283 = vand.u32 %v2270, 2147483648
        %v2284 = vor.u32 1.1754944e-38, %v2283
        %v2285 = vsel %vm2282, %v2284, %v2280
        %v2286 = vmul.f32 1.0, %v2285
        %v2287 = vrcp.pop %v2271
        %v2288 = vmul.f32 %v2271, %v2287
        %v2289 = vsub.f32 1.0, %v2288
        %v2290 = vmul.f32 %v2287, %v2289
        %v2291 = vadd.f32 %v2287, %v2290
        %vm2292 = vweird.f32 %v2271
        %vm2293 = vweird.f32 %v2287
        %vm2294 = vmor %vm2292, %vm2293
        %v2295 = vsel %vm2294, %v2287, %v2291
        %v2296 = vand.u32 2147483647, %v2271
        %vm2297 = vcmp.eq.f32.partialorder %v2296, 8.507059e+37
        %v2298 = vand.u32 %v2271, 2147483648
        %v2299 = vor.u32 1.1754944e-38, %v2298
        %v2300 = vsel %vm2297, %v2299, %v2295
        %v2301 = vmul.f32 1.0, %v2300
        %v2302 = vlaneseq
        %vm2303 = vcmp.ge.s32.totalorder %v2302, 0
        %vm2304 = vcmp.lt.s32.totalorder %v2302, 16
        %vm2305 = vmand %vm2303, %vm2304
        %2306 = vst.msk [vmem:[#allocation3] sm:$0x1] %vm2305, %v2286
        %2308 = vst [vmem:[#allocation1] sm:$0xff] %v2286
        %s2309 = scalar_lea.vmem [#allocation1], 1
        %v2310 = vld [vmem:[%s2309] ss:$9 sm:$0xff]
        %2311 = vrot.lane.b32.xlu0 %v2310, 16
        %v2312 = vpop.permute.xlu0 %2311
        %vm2314 = vcmp.ge.s32.totalorder %v2302, 16
        %vm2315 = vcmp.lt.s32.totalorder %v2302, 32
        %vm2316 = vmand %vm2314, %vm2315
        %2317 = vst.msk [vmem:[#allocation3] sm:$0x1] %vm2316, %v2312
        %2318 = vst [vmem:[#allocation1] sm:$0xff] %v2286
        %s2319 = scalar_lea.vmem [#allocation1], 2
        %v2320 = vld [vmem:[%s2319] ss:$9 sm:$0xff]
        %2321 = vrot.lane.b32.xlu0 %v2320, 32
        %v2322 = vpop.permute.xlu0 %2321
        %vm2324 = vcmp.ge.s32.totalorder %v2302, 32
        %vm2325 = vcmp.lt.s32.totalorder %v2302, 48
        %vm2326 = vmand %vm2324, %vm2325
        %2327 = vst.msk [vmem:[#allocation3] sm:$0x1] %vm2326, %v2322
        %2328 = vst [vmem:[#allocation1] sm:$0xff] %v2286
        %s2329 = scalar_lea.vmem [#allocation1], 3
        %v2330 = vld [vmem:[%s2329] ss:$9 sm:$0xff]
        %2331 = vrot.lane.b32.xlu0 %v2330, 48
        %v2332 = vpop.permute.xlu0 %2331
        %vm2334 = vcmp.ge.s32.totalorder %v2302, 48
        %vm2335 = vcmp.lt.s32.totalorder %v2302, 64
        %vm2336 = vmand %vm2334, %vm2335
        %2337 = vst.msk [vmem:[#allocation3] sm:$0x1] %vm2336, %v2332
        %2338 = vst [vmem:[#allocation1] sm:$0xff] %v2286
        %s2339 = scalar_lea.vmem [#allocation1], 4
        %v2340 = vld [vmem:[%s2339] ss:$9 sm:$0xff]
        %2341 = vrot.lane.b32.xlu0 %v2340, 64
        %v2342 = vpop.permute.xlu0 %2341
        %vm2344 = vcmp.ge.s32.totalorder %v2302, 64
        %vm2345 = vcmp.lt.s32.totalorder %v2302, 80
        %vm2346 = vmand %vm2344, %vm2345
        %2347 = vst.msk [vmem:[#allocation3] sm:$0x1] %vm2346, %v2342
        %2348 = vst [vmem:[#allocation1] sm:$0xff] %v2286
        %s2349 = scalar_lea.vmem [#allocation1], 5
        %v2350 = vld [vmem:[%s2349] ss:$9 sm:$0xff]
        %2351 = vrot.lane.b32.xlu0 %v2350, 80
        %v2352 = vpop.permute.xlu0 %2351
        %vm2354 = vcmp.ge.s32.totalorder %v2302, 80
        %vm2355 = vcmp.lt.s32.totalorder %v2302, 96
        %vm2356 = vmand %vm2354, %vm2355
        %2357 = vst.msk [vmem:[#allocation3] sm:$0x1] %vm2356, %v2352
        %2358 = vst [vmem:[#allocation1] sm:$0xff] %v2286
        %s2359 = scalar_lea.vmem [#allocation1], 6
        %v2360 = vld [vmem:[%s2359] ss:$9 sm:$0xff]
        %2361 = vrot.lane.b32.xlu0 %v2360, 96
        %v2362 = vpop.permute.xlu0 %2361
        %vm2364 = vcmp.ge.s32.totalorder %v2302, 96
        %vm2365 = vcmp.lt.s32.totalorder %v2302, 112
        %vm2366 = vmand %vm2364, %vm2365
        %2367 = vst.msk [vmem:[#allocation3] sm:$0x1] %vm2366, %v2362
        %2368 = vst [vmem:[#allocation1] sm:$0xff] %v2286
        %s2369 = scalar_lea.vmem [#allocation1], 7
        %v2370 = vld [vmem:[%s2369] ss:$9 sm:$0xff]
        %2371 = vrot.lane.b32.xlu0 %v2370, 112
        %v2372 = vpop.permute.xlu0 %2371
        %vm2374 = vcmp.ge.s32.totalorder %v2302, 112
        %vm2375 = vcmp.lt.s32.totalorder %v2302, 128
        %vm2376 = vmand %vm2374, %vm2375
        %2377 = vst.msk [vmem:[#allocation3] sm:$0x1] %vm2376, %v2372
        %2378 = vst.msk [vmem:[#allocation3 + $0x1] sm:$0x1] %vm2305, %v2301
        %2380 = vst [vmem:[#allocation1] sm:$0xff] %v2301
        %s2381 = scalar_lea.vmem [#allocation1], 1
        %v2382 = vld [vmem:[%s2381] ss:$9 sm:$0xff]
        %2383 = vrot.lane.b32.xlu0 %v2382, 16
        %v2384 = vpop.permute.xlu0 %2383
        %2386 = vst.msk [vmem:[#allocation3 + $0x1] sm:$0x1] %vm2316, %v2384
        %2387 = vst [vmem:[#allocation1] sm:$0xff] %v2301
        %s2388 = scalar_lea.vmem [#allocation1], 2
        %v2389 = vld [vmem:[%s2388] ss:$9 sm:$0xff]
        %2390 = vrot.lane.b32.xlu0 %v2389, 32
        %v2391 = vpop.permute.xlu0 %2390
        %2393 = vst.msk [vmem:[#allocation3 + $0x1] sm:$0x1] %vm2326, %v2391
        %2394 = vst [vmem:[#allocation1] sm:$0xff] %v2301
        %s2395 = scalar_lea.vmem [#allocation1], 3
        %v2396 = vld [vmem:[%s2395] ss:$9 sm:$0xff]
        %2397 = vrot.lane.b32.xlu0 %v2396, 48
        %v2398 = vpop.permute.xlu0 %2397
        %2400 = vst.msk [vmem:[#allocation3 + $0x1] sm:$0x1] %vm2336, %v2398
        %2401 = vst [vmem:[#allocation1] sm:$0xff] %v2301
        %s2402 = scalar_lea.vmem [#allocation1], 4
        %v2403 = vld [vmem:[%s2402] ss:$9 sm:$0xff]
        %2404 = vrot.lane.b32.xlu0 %v2403, 64
        %v2405 = vpop.permute.xlu0 %2404
        %2407 = vst.msk [vmem:[#allocation3 + $0x1] sm:$0x1] %vm2346, %v2405
        %2408 = vst [vmem:[#allocation1] sm:$0xff] %v2301
        %s2409 = scalar_lea.vmem [#allocation1], 5
        %v2410 = vld [vmem:[%s2409] ss:$9 sm:$0xff]
        %2411 = vrot.lane.b32.xlu0 %v2410, 80
        %v2412 = vpop.permute.xlu0 %2411
        %2414 = vst.msk [vmem:[#allocation3 + $0x1] sm:$0x1] %vm2356, %v2412
        %2415 = vst [vmem:[#allocation1] sm:$0xff] %v2301
        %s2416 = scalar_lea.vmem [#allocation1], 6
        %v2417 = vld [vmem:[%s2416] ss:$9 sm:$0xff]
        %2418 = vrot.lane.b32.xlu0 %v2417, 96
        %v2419 = vpop.permute.xlu0 %2418
        %2421 = vst.msk [vmem:[#allocation3 + $0x1] sm:$0x1] %vm2366, %v2419
        %2422 = vst [vmem:[#allocation1] sm:$0xff] %v2301
        %s2423 = scalar_lea.vmem [#allocation1], 7
        %v2424 = vld [vmem:[%s2423] ss:$9 sm:$0xff]
        %2425 = vrot.lane.b32.xlu0 %v2424, 112
        %v2426 = vpop.permute.xlu0 %2425
        %2428 = vst.msk [vmem:[#allocation3 + $0x1] sm:$0x1] %vm2376, %v2426
        %v2429 = vld [vmem:[%s174] sm:$0xff]
        %v2430 = vld [vmem:[#allocation3] sm:$0x3]
        %v2432 = vperm.slane %v2430, 0
        %v2433 = vperm.slane %v2430, 1
        %v2434 = vrot.slane %v2433, 4
        %v2435 = vsel %vm214, %v2432, %v2434
        %v2437 = vmul.f32 %v2429, %v2435
        %2438 = vst [vmem:[%s203] sm:$0xff] %v2437
        %s2439 = sand.u32 %s98, 1
        %s2440 = scalar_lea.sflag [#allocation7], %s2439
        %s2441 = sand.u32 %s98, 1
        %s2442 = smul.addr %s2441, 8
        %s2443 = scalar_lea.vmem [#allocation10], %s2442
        // Predicated region
        $region41: #{tpu_custom_call.1} parent=31 // pred_check
          %p2444 = pneg %p108
        $region42: #{tpu_custom_call.1} parent=31 // pred_check_branch
          %2446 = sbr.rel (%p2444) target = $region44
        $region43: #{tpu_custom_call.1} parent=31 // pred_region
          %2448 = vsyncadd %s2440, 0
          %s2449 = smul.addr %s22, 2
          %s2450 = smul.addr %s2449, 4
          %s2451 = scalar_lea.hbm %s3, %s2450
          %s2453 = sshll.u32 %s2443, 4
          %s2454 = int_to_ptr.vmem [resolvable:$true] %s2453
          %s2455 = sshll.u32 %s2451, 4
          %s2456 = int_to_ptr.hbm [resolvable:$true] %s2455
          %2458 = dma.vmem_to_hbm [thread:$0]  %s2454, 128, %s2456, %s2440
        $region44: #{tpu_custom_call.1} parent=31 // pred_fallthru
          _
      $region32: #{tpu_custom_call.1} parent=5 // pred_fallthru
        _
      %p2459 = scmp.le.s32.totalorder 2, %s17
      // Predicated region
      $region45: #{tpu_custom_call.1} parent=5 // pred_check
        %p2460 = pneg %p2459
      $region46: #{tpu_custom_call.1} parent=5 // pred_check_branch
        %2462 = sbr.rel (%p2460) target = $region48
      $region47: #{tpu_custom_call.1} parent=5 // pred_region
        %s2463 = ssub.s32 %s17, 2
        // Predicated region
        $region49: #{tpu_custom_call.1} parent=47 // pred_check
          %p2464 = pneg %p114
        $region50: #{tpu_custom_call.1} parent=47 // pred_check_branch
          %2466 = sbr.rel (%p2464) target = $region52
        $region51: #{tpu_custom_call.1} parent=47 // pred_region
          %s2467 = sand.u32 %s99, 1
          %s2468 = scalar_lea.sflag [#allocation7], %s2467
          %s2469 = sand.u32 %s99, 1
          %s2470 = smul.addr %s2469, 8
          %s2471 = scalar_lea.vmem [#allocation10], %s2470
          %2473 = dma.done %s2468, 128
        $region52: #{tpu_custom_call.1} parent=47 // pred_fallthru
          _
      $region48: #{tpu_custom_call.1} parent=5 // pred_fallthru
        _
    $region6: #{tpu_custom_call.1} parent=1 // loop_footer
      %s21 = sadd.s32 1, %s17
    $region7: #{tpu_custom_call.1} parent=1 // loop_footer_branch
      %16 = sbr.rel target = $region3
    $region8: #{tpu_custom_call.1} parent=1 // loop_exit
      _
    %2474 = vsyncpa [#allocation6], 1
    %s2475 = scalar_lea.sflag [#allocation6], 1
    %2476 = vsyncpa %s2475, 1
    %2477 = vsyncpa [#allocation7], 1
    %s2478 = scalar_lea.sflag [#allocation7], 1
    %2479 = vsyncpa %s2478, 1
    %2480 = vsyncpa [#allocation8], 1
    %s2481 = scalar_lea.sflag [#allocation8], 1
    %2482 = vsyncpa %s2481, 1

</llo_original>
